<compile_context>
chip_gen: v7x
topology: tpu7x:2x2x1
jax: 0.10.0
libtpu: 0.0.40
codegen_flags: <defaults>
</compile_context>

<pallas_src>
import functools
import math

import jax
import jax.numpy as jnp
from jax import lax
from jax.experimental import pallas as pl
from jax.experimental.pallas import tpu as pltpu

NEG_INF = -1e9          # finite masked bias (PyTorch uses -inf; finite keeps fully-masked rows NaN-free)
LN_EPS = 1e-5
VMEM_LIMIT = 48 * 1024 * 1024


# ----------------------------------------------------------------------------
# Tiling helper
# ----------------------------------------------------------------------------
def _pick_tile(dim, candidates, align):
    """Largest candidate dividing dim; else largest `align`-aligned divisor <= max(candidates);
    else the full dimension (always a legal block shape)."""
    for c in candidates:
        if dim % c == 0:
            return c
    c = (max(candidates) // align) * align
    while c >= align:
        if dim % c == 0:
            return c
        c -= align
    return dim


# ----------------------------------------------------------------------------
# Pallas kernels
# ----------------------------------------------------------------------------
def _mm_kernel(x_ref, w_ref, b_ref, o_ref, acc_ref, *, relu):
    # grid = (M//tm, N//tn, K//tk); K innermost ("arbitrary").
    @pl.when(pl.program_id(2) == 0)
    def _():
        acc_ref[...] = jnp.zeros_like(acc_ref)

    # .astype is a no-op when the input is already bf16.
    acc_ref[...] += jnp.dot(x_ref[...].astype(jnp.bfloat16), w_ref[...],
                            preferred_element_type=jnp.float32)

    @pl.when(pl.program_id(2) == pl.num_programs(2) - 1)
    def _():
        y = acc_ref[...] + b_ref[...]
        if relu:
            y = jnp.maximum(y, 0.0)
        o_ref[...] = y.astype(o_ref.dtype)


def _mm_ln_kernel(x_ref, w_ref, b_ref, r_ref, g_ref, bt_ref, o_ref, acc_ref, *, eps):
    # Matmul + bias + residual-add + LayerNorm fused (tn == full N so LN can reduce in-tile).
    @pl.when(pl.program_id(2) == 0)
    def _():
        acc_ref[...] = jnp.zeros_like(acc_ref)

    acc_ref[...] += jnp.dot(x_ref[...].astype(jnp.bfloat16), w_ref[...],
                            preferred_element_type=jnp.float32)

    @pl.when(pl.program_id(2) == pl.num_programs(2) - 1)
    def _():
        h = acc_ref[...] + b_ref[...] + r_ref[...]
        mu = jnp.mean(h, axis=-1, keepdims=True)
        var = jnp.mean((h - mu) * (h - mu), axis=-1, keepdims=True)
        y = (h - mu) * lax.rsqrt(var + eps) * g_ref[...] + bt_ref[...]
        o_ref[...] = y.astype(o_ref.dtype)


def _mm_split_kernel(x_ref, w_ref, b_ref, o_ref, acc_ref):
    # grid = (S, M//tm, K//tk); output slice s = x @ w[s] + b[s]; N untiled (== D).
    @pl.when(pl.program_id(2) == 0)
    def _():
        acc_ref[...] = jnp.zeros_like(acc_ref)

    acc_ref[...] += jnp.dot(x_ref[...].astype(jnp.bfloat16), w_ref[0],
                            preferred_element_type=jnp.float32)

    @pl.when(pl.program_id(2) == pl.num_programs(2) - 1)
    def _():
        o_ref[0] = (acc_ref[...] + b_ref[0]).astype(o_ref.dtype)


def _attn_kernel(q_ref, k_ref, v_ref, kp_ref, o_ref, *, nhead, dh, scale, causal):
    # q_ref: (1,1,tq,D) bf16; k_ref/v_ref: (1,1,Tk,D) bf16; kp_ref: (1,1,Tk) f32 additive;
    # o_ref: (1,tq,D) bf16.  grid = (B, Tq//tq).
    tq = q_ref.shape[2]
    tk = k_ref.shape[2]
    q = q_ref[0, 0]                                     # (tq, D)
    k = k_ref[0, 0]                                     # (Tk, D)
    v = v_ref[0, 0]
    kp = kp_ref[0]                                      # (1, Tk) key-padding bias

    # Head split -> batched (nhead, ., dh) operands; heads batched through the MXU, one score
    # tensor live at a time (no per-head Python-unrolled dots).
    q3 = jnp.stack([q[:, h * dh:(h + 1) * dh] for h in range(nhead)], axis=0)
    k3 = jnp.stack([k[:, h * dh:(h + 1) * dh] for h in range(nhead)], axis=0)
    v3 = jnp.stack([v[:, h * dh:(h + 1) * dh] for h in range(nhead)], axis=0)

    s = jnp.einsum('hqd,hkd->hqk', q3, k3,
                   preferred_element_type=jnp.float32)  # (nhead, tq, tk) f32

    bias = kp                                           # (1, tk)
    if causal:
        row = pl.program_id(1) * tq + lax.broadcasted_iota(jnp.int32, (tq, tk), 0)
        col = lax.broadcasted_iota(jnp.int32, (tq, tk), 1)
        bias = bias + jnp.where(col > row, jnp.float32(NEG_INF), jnp.float32(0.0))
    s = s * jnp.float32(scale) + bias[None]             # scale applied to f32 scores

    m = jnp.max(s, axis=-1, keepdims=True)
    p = jnp.exp(s - m)
    l = jnp.sum(p, axis=-1, keepdims=True)
    o = jnp.einsum('hqk,hkd->hqd', p.astype(jnp.bfloat16), v3,
                   preferred_element_type=jnp.float32)  # (nhead, tq, dh)
    o = o * pl.reciprocal(l, approx=True)

    # Assemble head-concatenated result and do ONE lane-dense (tq, D) store.
    out = jnp.concatenate([o[h] for h in range(nhead)], axis=-1)
    o_ref[0] = out.astype(o_ref.dtype)


# ----------------------------------------------------------------------------
# Kernel wrappers
# ----------------------------------------------------------------------------
def matmul(x, w_t, b, *, relu=False, residual=None, gamma=None, beta=None,
           eps=LN_EPS, out_dtype=jnp.float32):
    """x: (M,K); w_t: (K,N) bf16 (pre-transposed); b: (N,) f32.
    If gamma is not None: returns LayerNorm(x @ w_t + b + residual)."""
    m, k = x.shape
    n = w_t.shape[1]
    fuse_ln = gamma is not None

    tm_cands = (256, 128, 64, 32, 16, 8) if fuse_ln else (512, 256, 128, 64, 32, 16, 8)
    tm = _pick_tile(m, tm_cands, 8)
    tk = _pick_tile(k, (1024, 512, 256, 128), 128)
    tn = n if fuse_ln else _pick_tile(n, (512, 256, 128), 128)
    grid = (m // tm, n // tn, k // tk)

    x_spec = pl.BlockSpec((tm, tk), lambda i, j, kk: (i, kk))
    w_spec = pl.BlockSpec((tk, tn), lambda i, j, kk: (kk, j))
    b_spec = pl.BlockSpec((1, tn), lambda i, j, kk: (0, j))
    o_spec = pl.BlockSpec((tm, tn), lambda i, j, kk: (i, j))
    cparams = pltpu.CompilerParams(
        dimension_semantics=("parallel", "parallel", "arbitrary"),
        vmem_limit_bytes=VMEM_LIMIT)
    scratch = [pltpu.VMEM((tm, tn), jnp.float32)]
    b2 = b.reshape(1, n)

    if fuse_ln:
        r_spec = pl.BlockSpec((tm, tn), lambda i, j, kk: (i, j))
        g_spec = pl.BlockSpec((1, tn), lambda i, j, kk: (0, j))
        bt_spec = pl.BlockSpec((1, tn), lambda i, j, kk: (0, j))
        return pl.pallas_call(
            functools.partial(_mm_ln_kernel, eps=eps),
            grid=grid,
            in_specs=[x_spec, w_spec, b_spec, r_spec, g_spec, bt_spec],
            out_specs=o_spec,
            out_shape=jax.ShapeDtypeStruct((m, n), out_dtype),
            scratch_shapes=scratch,
            compiler_params=cparams,
        )(x, w_t, b2, residual, gamma.reshape(1, n), beta.reshape(1, n))

    return pl.pallas_call(
        functools.partial(_mm_kernel, relu=relu),
        grid=grid,
        in_specs=[x_spec, w_spec, b_spec],
        out_specs=o_spec,
        out_shape=jax.ShapeDtypeStruct((m, n), out_dtype),
        scratch_shapes=scratch,
        compiler_params=cparams,
    )(x, w_t, b2)


def matmul_split(x, w_s, b_s, *, out_dtype=jnp.bfloat16):
    """x: (M,K); w_s: (S,K,N) bf16; b_s: (S,N) f32 -> (S,M,N): out[s] = x @ w_s[s] + b_s[s].
    Used for fused QKV / KV projections with slice-addressable outputs."""
    m, k = x.shape
    s, _, n = w_s.shape
    tm = _pick_tile(m, (512, 256, 128, 64, 32, 16, 8), 8)
    tk = _pick_tile(k, (1024, 512, 256, 128), 128)
    grid = (s, m // tm, k // tk)
    return pl.pallas_call(
        _mm_split_kernel,
        grid=grid,
        in_specs=[
            pl.BlockSpec((tm, tk), lambda si, i, kk: (i, kk)),
            pl.BlockSpec((1, tk, n), lambda si, i, kk: (si, kk, 0)),
            pl.BlockSpec((1, 1, n), lambda si, i, kk: (si, 0, 0)),
        ],
        out_specs=pl.BlockSpec((1, tm, n), lambda si, i, kk: (si, i, 0)),
        out_shape=jax.ShapeDtypeStruct((s, m, n), out_dtype),
        scratch_shapes=[pltpu.VMEM((tm, n), jnp.float32)],
        compiler_params=pltpu.CompilerParams(
            dimension_semantics=("parallel", "parallel", "arbitrary"),
            vmem_limit_bytes=VMEM_LIMIT),
    )(x, w_s, b_s.reshape(s, 1, n))


def attention(q4, kv4, k_slot, v_slot, key_bias, nhead, *, causal):
    """q4: (*, B, Tq, D) bf16 with the query projection in slice 0;
    kv4: (*, B, Tk, D) bf16 with K in slice k_slot and V in slice v_slot;
    key_bias: (B, 1, Tk) f32 additive.  Returns (B, Tq, D) bf16."""
    _, b, t, d = q4.shape
    tk = kv4.shape[2]
    dh = d // nhead
    scale = 1.0 / math.sqrt(dh)
    tq = _pick_tile(t, (256, 128, 64, 32, 16, 8), 8)
    grid = (b, t // tq)
    return pl.pallas_call(
        functools.partial(_attn_kernel, nhead=nhead, dh=dh, scale=scale, causal=causal),
        grid=grid,
        out_shape=jax.ShapeDtypeStruct((b, t, d), jnp.bfloat16),
        in_specs=[
            pl.BlockSpec((1, 1, tq, d), lambda bi, qi: (0, bi, qi, 0)),
            pl.BlockSpec((1, 1, tk, d), lambda bi, qi: (k_slot, bi, 0, 0)),
            pl.BlockSpec((1, 1, tk, d), lambda bi, qi: (v_slot, bi, 0, 0)),
            pl.BlockSpec((1, 1, tk), lambda bi, qi: (bi, 0, 0)),
        ],
        out_specs=pl.BlockSpec((1, tq, d), lambda bi, qi: (bi, qi, 0)),
        compiler_params=pltpu.CompilerParams(
            dimension_semantics=("parallel", "parallel"),
            vmem_limit_bytes=VMEM_LIMIT),
    )(q4, kv4, kv4, key_bias)


# ----------------------------------------------------------------------------
# Model pieces (glue in JAX, compute in Pallas)
# ----------------------------------------------------------------------------
def decoder_layer(x, memory, p, self_key_bias, mem_key_bias, nhead):
    b, t, d = x.shape
    mlen = memory.shape[1]
    x2d = x.reshape(b * t, d)                       # residual stream stays f32

    # --- self-attention (post-norm): x = LN1(x + SelfAttn(x)) ---
    qkv = matmul_split(x2d, p["self_qkv_w"], p["self_qkv_b"]).reshape(3, b, t, d)
    sa = attention(qkv, qkv, 1, 2, self_key_bias, nhead, causal=True)
    x2d = matmul(sa.reshape(b * t, d), p["self_out_w"], p["self_out_b"],
                 residual=x2d, gamma=p["norm1_w"], beta=p["norm1_b"])

    # --- cross-attention: x = LN2(x + CrossAttn(x, memory)) ---
    q4 = matmul(x2d, p["cross_q_w"], p["cross_q_b"],
                out_dtype=jnp.bfloat16).reshape(1, b, t, d)
    kv = matmul_split(memory.reshape(b * mlen, d), p["cross_kv_w"],
                      p["cross_kv_b"]).reshape(2, b, mlen, d)
    ca = attention(q4, kv, 0, 1, mem_key_bias, nhead, causal=False)
    x2d = matmul(ca.reshape(b * t, d), p["cross_out_w"], p["cross_out_b"],
                 residual=x2d, gamma=p["norm2_w"], beta=p["norm2_b"])

    # --- feed-forward: x = LN3(x + lin2(relu(lin1(x)))) ---
    h = matmul(x2d, p["lin1_w"], p["lin1_b"], relu=True, out_dtype=jnp.bfloat16)
    x2d = matmul(h, p["lin2_w"], p["lin2_b"],
                 residual=x2d, gamma=p["norm3_w"], beta=p["norm3_b"])
    return x2d.reshape(b, t, d)


def forward_train(memory, input_ids, params, nhead, pad_token_id=0,
                  memory_key_padding_mask=None):
    """Teacher-forcing forward.  memory: (B, M, D) f32, input_ids: (B, S) int32.
    Returns logits (B, min(S-1, max_seq_len), vocab) f32."""
    b, m, d = memory.shape
    tgt_ids = input_ids[:, :-1]
    max_len = params["pos_embed"].shape[0]
    if tgt_ids.shape[1] > max_len:
        tgt_ids = tgt_ids[:, :max_len]
    t = tgt_ids.shape[1]

    # embedding + positional embedding (gather is glue)
    x = params["embedding"][tgt_ids] + params["pos_embed"][:t][None]

    # Small additive key-padding biases; the causal mask is generated in-kernel.
    self_key_bias = jnp.where(tgt_ids == pad_token_id,
                              jnp.float32(NEG_INF), jnp.float32(0.0))[:, None, :]
    if memory_key_padding_mask is not None:
        mem_key_bias = jnp.where(memory_key_padding_mask,
                                 jnp.float32(NEG_INF), jnp.float32(0.0))[:, None, :]
    else:
        mem_key_bias = jnp.zeros((b, 1, m), jnp.float32)

    for lp in params["layers"]:
        x = decoder_layer(x, memory, lp, self_key_bias, mem_key_bias, nhead)

    logits = matmul(x.reshape(b * t, d), params["vocab_w"], params["vocab_b"])
    return logits.reshape(b, t, -1)


# ----------------------------------------------------------------------------
# Deterministic parameter init (kernel-ready layout: weights (Din, Dout) bf16;
# QKV / KV weights stacked along a leading slice axis)
# ----------------------------------------------------------------------------
def init_params(key, d, vocab, max_seq_len, nhead, num_layers, ff=2048, pad_token_id=0):
    keys = jax.random.split(key, 3 + num_layers)
    emb = jax.random.normal(keys[0], (vocab, d), jnp.float32) * 0.02
    emb = emb.at[pad_token_id].set(0.0)                       # padding_idx row = 0
    pos = jax.random.normal(keys[1], (max_seq_len, d), jnp.float32) * 0.02

    def mk(k, shape, fan_in):
        w = jax.random.normal(k, shape, jnp.float32) / jnp.sqrt(jnp.float32(fan_in))
        return w.astype(jnp.bfloat16)

    layers = []
    for l in range(num_layers):
        lk = jax.random.split(keys[2 + l], 7)
        layers.append(dict(
            self_qkv_w=mk(lk[0], (3, d, d), d), self_qkv_b=jnp.zeros((3, d), jnp.float32),
            self_out_w=mk(lk[1], (d, d), d), self_out_b=jnp.zeros((d,), jnp.float32),
            cross_q_w=mk(lk[2], (d, d), d), cross_q_b=jnp.zeros((d,), jnp.float32),
            cross_kv_w=mk(lk[3], (2, d, d), d), cross_kv_b=jnp.zeros((2, d), jnp.float32),
            cross_out_w=mk(lk[4], (d, d), d), cross_out_b=jnp.zeros((d,), jnp.float32),
            lin1_w=mk(lk[5], (d, ff), d), lin1_b=jnp.zeros((ff,), jnp.float32),
            lin2_w=mk(lk[6], (ff, d), ff), lin2_b=jnp.zeros((d,), jnp.float32),
            norm1_w=jnp.ones((d,), jnp.float32), norm1_b=jnp.zeros((d,), jnp.float32),
            norm2_w=jnp.ones((d,), jnp.float32), norm2_b=jnp.zeros((d,), jnp.float32),
            norm3_w=jnp.ones((d,), jnp.float32), norm3_b=jnp.zeros((d,), jnp.float32),
        ))
    vocab_w = mk(keys[2 + num_layers], (d, vocab), d)
    vocab_b = jnp.zeros((vocab,), jnp.float32)
    return dict(embedding=emb, pos_embed=pos, layers=layers,
                vocab_w=vocab_w, vocab_b=vocab_b)


# ----------------------------------------------------------------------------
if __name__ == "__main__":
    B, D, NHEAD, NLAYERS = 2, 32, 4, 2
    VOCAB, MAX_SEQ_LEN, MEM_LEN, SEQ = 64, 16, 8, 9   # tgt length = SEQ - 1 = 8

    key = jax.random.PRNGKey(0)
    pkey, mkey, ikey = jax.random.split(key, 3)

    params = init_params(pkey, D, VOCAB, MAX_SEQ_LEN, NHEAD, NLAYERS)
    memory = jax.random.normal(mkey, (B, MEM_LEN, D), jnp.float32)
    input_ids = jax.random.randint(ikey, (B, SEQ), 1, VOCAB, dtype=jnp.int32)

    fwd = jax.jit(functools.partial(forward_train, nhead=NHEAD))
    logits = fwd(memory, input_ids, params)
    logits = jax.block_until_ready(logits)

    assert logits.shape == (B, SEQ - 1, VOCAB), logits.shape
    assert bool(jnp.all(jnp.isfinite(logits)))
    print("KERNEL_OK")
</pallas_src>

<mosaic_0001>
module attributes {stable_mosaic.version = 11 : i64} {
  func.func @_mm_split_kernel(%arg0: i32, %arg1: i32, %arg2: i32, %arg3: memref<16x32xf32, #tpu.memory_space<vmem>>, %arg4: memref<1x32x32xbf16, #tpu.memory_space<vmem>>, %arg5: memref<1x1x32xf32, #tpu.memory_space<vmem>>, %arg6: memref<1x16x32xbf16, #tpu.memory_space<vmem>>, %arg7: memref<16x32xf32, #tpu.memory_space<vmem>>) attributes {dimension_semantics = [#tpu.dimension_semantics<parallel>, #tpu.dimension_semantics<parallel>, #tpu.dimension_semantics<arbitrary>], iteration_bounds = array<i64: 3, 1, 1>, scalar_prefetch = 0 : i64, scratch_operands = 1 : i64, tpu.core_type = #tpu.core_type<tc>, window_params = [{transform_indices = @transform_0, window_bounds = array<i64: 16, 32>}, {transform_indices = @transform_1, window_bounds = array<i64: 1, 32, 32>}, {transform_indices = @transform_2, window_bounds = array<i64: 1, 1, 32>}, {transform_indices = @transform_3, window_bounds = array<i64: 1, 16, 32>}]} {
    %c0_i32 = arith.constant 0 : i32
    %0 = arith.cmpi eq, %arg2, %c0_i32 : i32
    %1 = arith.extui %0 : i1 to i32
    %c0_i32_0 = arith.constant 0 : i32
    %2 = arith.cmpi ne, %1, %c0_i32_0 : i32
    scf.if %2 {
      %cst_11 = arith.constant 0.000000e+00 : f32
      %14 = vector.broadcast %cst_11 : f32 to vector<16x32xf32>
      %c0_12 = arith.constant 0 : index
      %c0_13 = arith.constant 0 : index
      %15 = vector.load %arg7[%c0_12, %c0_13] : memref<16x32xf32, #tpu.memory_space<vmem>>, vector<16x32xf32>
      tpu.vector_store %arg7[%c0_12, %c0_13], %14 {strides = array<i32>} : memref<16x32xf32, #tpu.memory_space<vmem>>, vector<16x32xf32>,
    } else {
    }
    %c0 = arith.constant 0 : index
    %c0_1 = arith.constant 0 : index
    %3 = vector.load %arg7[%c0, %c0_1] : memref<16x32xf32, #tpu.memory_space<vmem>>, vector<16x32xf32>
    %c0_2 = arith.constant 0 : index
    %c0_3 = arith.constant 0 : index
    %4 = vector.load %arg3[%c0_2, %c0_3] : memref<16x32xf32, #tpu.memory_space<vmem>>, vector<16x32xf32>
    %5 = arith.truncf %4 : vector<16x32xf32> to vector<16x32xbf16>
    %c0_4 = arith.constant 0 : index
    %c0_5 = arith.constant 0 : index
    %c0_6 = arith.constant 0 : index
    %6 = vector.load %arg4[%c0_4, %c0_5, %c0_6] : memref<1x32x32xbf16, #tpu.memory_space<vmem>>, vector<1x32x32xbf16>
    %7 = vector.shape_cast %6 : vector<1x32x32xbf16> to vector<32x32xbf16>
    %cst = arith.constant dense<0.000000e+00> : vector<16x32xf32>
    %8 = tpu.matmul %5, %7, %cst {dimension_numbers = #tpu.dot_dimension_numbers<[1], [0], [0], [1], [0, 0, 1, 1], [], []>} : vector<16x32xbf16>, vector<32x32xbf16>, vector<16x32xf32> -> vector<16x32xf32>
    %9 = arith.addf %3, %8 : vector<16x32xf32>
    %c0_7 = arith.constant 0 : index
    %c0_8 = arith.constant 0 : index
    %10 = vector.load %arg7[%c0_7, %c0_8] : memref<16x32xf32, #tpu.memory_space<vmem>>, vector<16x32xf32>
    tpu.vector_store %arg7[%c0_7, %c0_8], %9 {strides = array<i32>} : memref<16x32xf32, #tpu.memory_space<vmem>>, vector<16x32xf32>,
    %c0_i32_9 = arith.constant 0 : i32
    %11 = arith.cmpi eq, %arg2, %c0_i32_9 : i32
    %12 = arith.extui %11 : i1 to i32
    %c0_i32_10 = arith.constant 0 : i32
    %13 = arith.cmpi ne, %12, %c0_i32_10 : i32
    scf.if %13 {
      %c0_11 = arith.constant 0 : index
      %c0_12 = arith.constant 0 : index
      %14 = vector.load %arg7[%c0_11, %c0_12] : memref<16x32xf32, #tpu.memory_space<vmem>>, vector<16x32xf32>
      %c0_13 = arith.constant 0 : index
      %c0_14 = arith.constant 0 : index
      %c0_15 = arith.constant 0 : index
      %15 = vector.load %arg5[%c0_13, %c0_14, %c0_15] : memref<1x1x32xf32, #tpu.memory_space<vmem>>, vector<1x1x32xf32>
      %16 = vector.shape_cast %15 : vector<1x1x32xf32> to vector<1x32xf32>
      %17 = vector.broadcast %16 : vector<1x32xf32> to vector<16x32xf32>
      %18 = arith.addf %14, %17 : vector<16x32xf32>
      %19 = arith.truncf %18 : vector<16x32xf32> to vector<16x32xbf16>
      %c0_16 = arith.constant 0 : index
      %c0_17 = arith.constant 0 : index
      %c0_18 = arith.constant 0 : index
      %20 = vector.load %arg6[%c0_16, %c0_17, %c0_18] : memref<1x16x32xbf16, #tpu.memory_space<vmem>>, vector<1x16x32xbf16>
      %21 = vector.shape_cast %20 : vector<1x16x32xbf16> to vector<16x32xbf16>
      %22 = vector.shape_cast %19 : vector<16x32xbf16> to vector<1x16x32xbf16>
      tpu.vector_store %arg6[%c0_16, %c0_17, %c0_18], %22 {strides = array<i32>} : memref<1x16x32xbf16, #tpu.memory_space<vmem>>, vector<1x16x32xbf16>,
    } else {
    }
    return
  }
  func.func @transform_0(%arg0: i32, %arg1: i32, %arg2: i32) -> (i32, i32) {
    %c0_i32 = arith.constant 0 : i32
    return %arg1, %arg2 : i32, i32
  }
  func.func @transform_1(%arg0: i32, %arg1: i32, %arg2: i32) -> (i32, i32, i32) {
    %c0_i32 = arith.constant 0 : i32
    %c0_i32_0 = arith.constant 0 : i32
    return %arg0, %arg2, %c0_i32 : i32, i32, i32
  }
  func.func @transform_2(%arg0: i32, %arg1: i32, %arg2: i32) -> (i32, i32, i32) {
    %c0_i32 = arith.constant 0 : i32
    %c0_i32_0 = arith.constant 0 : i32
    %c0_i32_1 = arith.constant 0 : i32
    return %arg0, %c0_i32, %c0_i32_0 : i32, i32, i32
  }
  func.func @transform_3(%arg0: i32, %arg1: i32, %arg2: i32) -> (i32, i32, i32) {
    %c0_i32 = arith.constant 0 : i32
    %c0_i32_0 = arith.constant 0 : i32
    return %arg0, %arg1, %c0_i32 : i32, i32, i32
  }
}

module attributes {stable_mosaic.version = 11 : i64} {
  func.func @_mm_ln_kernel(%arg0: i32, %arg1: i32, %arg2: i32, %arg3: memref<16x32xbf16, #tpu.memory_space<vmem>>, %arg4: memref<32x32xbf16, #tpu.memory_space<vmem>>, %arg5: memref<1x32xf32, #tpu.memory_space<vmem>>, %arg6: memref<16x32xf32, #tpu.memory_space<vmem>>, %arg7: memref<1x32xf32, #tpu.memory_space<vmem>>, %arg8: memref<1x32xf32, #tpu.memory_space<vmem>>, %arg9: memref<16x32xf32, #tpu.memory_space<vmem>>, %arg10: memref<16x32xf32, #tpu.memory_space<vmem>>) attributes {dimension_semantics = [#tpu.dimension_semantics<parallel>, #tpu.dimension_semantics<parallel>, #tpu.dimension_semantics<arbitrary>], iteration_bounds = array<i64: 1, 1, 1>, scalar_prefetch = 0 : i64, scratch_operands = 1 : i64, tpu.core_type = #tpu.core_type<tc>, window_params = [{transform_indices = @transform_0, window_bounds = array<i64: 16, 32>}, {transform_indices = @transform_1, window_bounds = array<i64: 32, 32>}, {transform_indices = @transform_2, window_bounds = array<i64: 1, 32>}, {transform_indices = @transform_3, window_bounds = array<i64: 16, 32>}, {transform_indices = @transform_4, window_bounds = array<i64: 1, 32>}, {transform_indices = @transform_5, window_bounds = array<i64: 1, 32>}, {transform_indices = @transform_6, window_bounds = array<i64: 16, 32>}]} {
    %c0_i32 = arith.constant 0 : i32
    %0 = arith.cmpi eq, %arg2, %c0_i32 : i32
    %1 = arith.extui %0 : i1 to i32
    %c0_i32_0 = arith.constant 0 : i32
    %2 = arith.cmpi ne, %1, %c0_i32_0 : i32
    scf.if %2 {
      %cst_10 = arith.constant 0.000000e+00 : f32
      %12 = vector.broadcast %cst_10 : f32 to vector<16x32xf32>
      %c0_11 = arith.constant 0 : index
      %c0_12 = arith.constant 0 : index
      %13 = vector.load %arg10[%c0_11, %c0_12] : memref<16x32xf32, #tpu.memory_space<vmem>>, vector<16x32xf32>
      tpu.vector_store %arg10[%c0_11, %c0_12], %12 {strides = array<i32>} : memref<16x32xf32, #tpu.memory_space<vmem>>, vector<16x32xf32>,
    } else {
    }
    %c0 = arith.constant 0 : index
    %c0_1 = arith.constant 0 : index
    %3 = vector.load %arg10[%c0, %c0_1] : memref<16x32xf32, #tpu.memory_space<vmem>>, vector<16x32xf32>
    %c0_2 = arith.constant 0 : index
    %c0_3 = arith.constant 0 : index
    %4 = vector.load %arg3[%c0_2, %c0_3] : memref<16x32xbf16, #tpu.memory_space<vmem>>, vector<16x32xbf16>
    %c0_4 = arith.constant 0 : index
    %c0_5 = arith.constant 0 : index
    %5 = vector.load %arg4[%c0_4, %c0_5] : memref<32x32xbf16, #tpu.memory_space<vmem>>, vector<32x32xbf16>
    %cst = arith.constant dense<0.000000e+00> : vector<16x32xf32>
    %6 = tpu.matmul %4, %5, %cst {dimension_numbers = #tpu.dot_dimension_numbers<[1], [0], [0], [1], [0, 0, 1, 1], [], []>} : vector<16x32xbf16>, vector<32x32xbf16>, vector<16x32xf32> -> vector<16x32xf32>
    %7 = arith.addf %3, %6 : vector<16x32xf32>
    %c0_6 = arith.constant 0 : index
    %c0_7 = arith.constant 0 : index
    %8 = vector.load %arg10[%c0_6, %c0_7] : memref<16x32xf32, #tpu.memory_space<vmem>>, vector<16x32xf32>
    tpu.vector_store %arg10[%c0_6, %c0_7], %7 {strides = array<i32>} : memref<16x32xf32, #tpu.memory_space<vmem>>, vector<16x32xf32>,
    %c0_i32_8 = arith.constant 0 : i32
    %9 = arith.cmpi eq, %arg2, %c0_i32_8 : i32
    %10 = arith.extui %9 : i1 to i32
    %c0_i32_9 = arith.constant 0 : i32
    %11 = arith.cmpi ne, %10, %c0_i32_9 : i32
    scf.if %11 {
      %c0_10 = arith.constant 0 : index
      %c0_11 = arith.constant 0 : index
      %12 = vector.load %arg10[%c0_10, %c0_11] : memref<16x32xf32, #tpu.memory_space<vmem>>, vector<16x32xf32>
      %c0_12 = arith.constant 0 : index
      %c0_13 = arith.constant 0 : index
      %13 = vector.load %arg5[%c0_12, %c0_13] : memref<1x32xf32, #tpu.memory_space<vmem>>, vector<1x32xf32>
      %14 = vector.broadcast %13 : vector<1x32xf32> to vector<16x32xf32>
      %15 = arith.addf %12, %14 : vector<16x32xf32>
      %c0_14 = arith.constant 0 : index
      %c0_15 = arith.constant 0 : index
      %16 = vector.load %arg6[%c0_14, %c0_15] : memref<16x32xf32, #tpu.memory_space<vmem>>, vector<16x32xf32>
      %17 = arith.addf %15, %16 : vector<16x32xf32>
      %cst_16 = arith.constant dense<0.000000e+00> : vector<16xf32>
      %18 = vector.multi_reduction <add>, %17, %cst_16 [1] : vector<16x32xf32> to vector<16xf32>
      %19 = vector.shape_cast %18 : vector<16xf32> to vector<16x1xf32>
      %cst_17 = arith.constant 3.200000e+01 : f32
      %20 = vector.broadcast %cst_17 : f32 to vector<16x1xf32>
      %21 = arith.divf %19, %20 : vector<16x1xf32>
      %22 = vector.broadcast %21 : vector<16x1xf32> to vector<16x32xf32>
      %23 = arith.subf %17, %22 : vector<16x32xf32>
      %24 = vector.broadcast %21 : vector<16x1xf32> to vector<16x32xf32>
      %25 = arith.subf %17, %24 : vector<16x32xf32>
      %26 = arith.mulf %23, %25 : vector<16x32xf32>
      %cst_18 = arith.constant dense<0.000000e+00> : vector<16xf32>
      %27 = vector.multi_reduction <add>, %26, %cst_18 [1] : vector<16x32xf32> to vector<16xf32>
      %28 = vector.shape_cast %27 : vector<16xf32> to vector<16x1xf32>
      %cst_19 = arith.constant 3.200000e+01 : f32
      %29 = vector.broadcast %cst_19 : f32 to vector<16x1xf32>
      %30 = arith.divf %28, %29 : vector<16x1xf32>
      %31 = vector.broadcast %21 : vector<16x1xf32> to vector<16x32xf32>
      %32 = arith.subf %17, %31 : vector<16x32xf32>
      %cst_20 = arith.constant 9.99999974E-6 : f32
      %33 = vector.broadcast %cst_20 : f32 to vector<16x1xf32>
      %34 = arith.addf %30, %33 : vector<16x1xf32>
      %35 = math.rsqrt %34 : vector<16x1xf32>
      %36 = vector.broadcast %35 : vector<16x1xf32> to vector<16x32xf32>
      %37 = arith.mulf %32, %36 : vector<16x32xf32>
      %c0_21 = arith.constant 0 : index
      %c0_22 = arith.constant 0 : index
      %38 = vector.load %arg7[%c0_21, %c0_22] : memref<1x32xf32, #tpu.memory_space<vmem>>, vector<1x32xf32>
      %39 = vector.broadcast %38 : vector<1x32xf32> to vector<16x32xf32>
      %40 = arith.mulf %37, %39 : vector<16x32xf32>
      %c0_23 = arith.constant 0 : index
      %c0_24 = arith.constant 0 : index
      %41 = vector.load %arg8[%c0_23, %c0_24] : memref<1x32xf32, #tpu.memory_space<vmem>>, vector<1x32xf32>
      %42 = vector.broadcast %41 : vector<1x32xf32> to vector<16x32xf32>
      %43 = arith.addf %40, %42 : vector<16x32xf32>
      %c0_25 = arith.constant 0 : index
      %c0_26 = arith.constant 0 : index
      %44 = vector.load %arg9[%c0_25, %c0_26] : memref<16x32xf32, #tpu.memory_space<vmem>>, vector<16x32xf32>
      tpu.vector_store %arg9[%c0_25, %c0_26], %43 {strides = array<i32>} : memref<16x32xf32, #tpu.memory_space<vmem>>, vector<16x32xf32>,
    } else {
    }
    return
  }
  func.func @transform_0(%arg0: i32, %arg1: i32, %arg2: i32) -> (i32, i32) {
    %c0_i32 = arith.constant 0 : i32
    return %arg0, %arg2 : i32, i32
  }
  func.func @transform_1(%arg0: i32, %arg1: i32, %arg2: i32) -> (i32, i32) {
    %c0_i32 = arith.constant 0 : i32
    return %arg2, %arg1 : i32, i32
  }
  func.func @transform_2(%arg0: i32, %arg1: i32, %arg2: i32) -> (i32, i32) {
    %c0_i32 = arith.constant 0 : i32
    %c0_i32_0 = arith.constant 0 : i32
    return %c0_i32, %arg1 : i32, i32
  }
  func.func @transform_3(%arg0: i32, %arg1: i32, %arg2: i32) -> (i32, i32) {
    %c0_i32 = arith.constant 0 : i32
    return %arg0, %arg1 : i32, i32
  }
  func.func @transform_4(%arg0: i32, %arg1: i32, %arg2: i32) -> (i32, i32) {
    %c0_i32 = arith.constant 0 : i32
    %c0_i32_0 = arith.constant 0 : i32
    return %c0_i32, %arg1 : i32, i32
  }
  func.func @transform_5(%arg0: i32, %arg1: i32, %arg2: i32) -> (i32, i32) {
    %c0_i32 = arith.constant 0 : i32
    %c0_i32_0 = arith.constant 0 : i32
    return %c0_i32, %arg1 : i32, i32
  }
  func.func @transform_6(%arg0: i32, %arg1: i32, %arg2: i32) -> (i32, i32) {
    %c0_i32 = arith.constant 0 : i32
    return %arg0, %arg1 : i32, i32
  }
}

module attributes {stable_mosaic.version = 11 : i64} {
  func.func @_attn_kernel(%arg0: i32, %arg1: i32, %arg2: memref<1x1x8x32xbf16, #tpu.memory_space<vmem>>, %arg3: memref<1x1x8x32xbf16, #tpu.memory_space<vmem>>, %arg4: memref<1x1x8x32xbf16, #tpu.memory_space<vmem>>, %arg5: memref<1x1x8xf32, #tpu.memory_space<vmem>>, %arg6: memref<1x8x32xbf16, #tpu.memory_space<vmem>>) attributes {dimension_semantics = [#tpu.dimension_semantics<parallel>, #tpu.dimension_semantics<parallel>], iteration_bounds = array<i64: 2, 1>, scalar_prefetch = 0 : i64, scratch_operands = 0 : i64, tpu.core_type = #tpu.core_type<tc>, window_params = [{transform_indices = @transform_0, window_bounds = array<i64: 1, 1, 8, 32>}, {transform_indices = @transform_1, window_bounds = array<i64: 1, 1, 8, 32>}, {transform_indices = @transform_2, window_bounds = array<i64: 1, 1, 8, 32>}, {transform_indices = @transform_3, window_bounds = array<i64: 1, 1, 8>}, {transform_indices = @transform_4, window_bounds = array<i64: 1, 8, 32>}]} {
    %c0 = arith.constant 0 : index
    %c0_0 = arith.constant 0 : index
    %c0_1 = arith.constant 0 : index
    %c0_2 = arith.constant 0 : index
    %0 = vector.load %arg2[%c0, %c0_0, %c0_1, %c0_2] : memref<1x1x8x32xbf16, #tpu.memory_space<vmem>>, vector<1x1x8x32xbf16>
    %1 = vector.shape_cast %0 : vector<1x1x8x32xbf16> to vector<8x32xbf16>
    %c0_3 = arith.constant 0 : index
    %c0_4 = arith.constant 0 : index
    %c0_5 = arith.constant 0 : index
    %c0_6 = arith.constant 0 : index
    %2 = vector.load %arg3[%c0_3, %c0_4, %c0_5, %c0_6] : memref<1x1x8x32xbf16, #tpu.memory_space<vmem>>, vector<1x1x8x32xbf16>
    %3 = vector.shape_cast %2 : vector<1x1x8x32xbf16> to vector<8x32xbf16>
    %c0_7 = arith.constant 0 : index
    %c0_8 = arith.constant 0 : index
    %c0_9 = arith.constant 0 : index
    %c0_10 = arith.constant 0 : index
    %4 = vector.load %arg4[%c0_7, %c0_8, %c0_9, %c0_10] : memref<1x1x8x32xbf16, #tpu.memory_space<vmem>>, vector<1x1x8x32xbf16>
    %5 = vector.shape_cast %4 : vector<1x1x8x32xbf16> to vector<8x32xbf16>
    %c0_11 = arith.constant 0 : index
    %c0_12 = arith.constant 0 : index
    %c0_13 = arith.constant 0 : index
    %6 = vector.load %arg5[%c0_11, %c0_12, %c0_13] : memref<1x1x8xf32, #tpu.memory_space<vmem>>, vector<1x1x8xf32>
    %7 = vector.shape_cast %6 : vector<1x1x8xf32> to vector<1x8xf32>
    %8 = vector.extract_strided_slice %1 {offsets = [0, 0], sizes = [8, 8], strides = [1, 1]} : vector<8x32xbf16> to vector<8x8xbf16>
    %9 = vector.extract_strided_slice %1 {offsets = [0, 8], sizes = [8, 8], strides = [1, 1]} : vector<8x32xbf16> to vector<8x8xbf16>
    %10 = vector.extract_strided_slice %1 {offsets = [0, 16], sizes = [8, 8], strides = [1, 1]} : vector<8x32xbf16> to vector<8x8xbf16>
    %11 = vector.extract_strided_slice %1 {offsets = [0, 24], sizes = [8, 8], strides = [1, 1]} : vector<8x32xbf16> to vector<8x8xbf16>
    %12 = vector.shape_cast %8 : vector<8x8xbf16> to vector<1x8x8xbf16>
    %13 = vector.shape_cast %9 : vector<8x8xbf16> to vector<1x8x8xbf16>
    %14 = vector.shape_cast %10 : vector<8x8xbf16> to vector<1x8x8xbf16>
    %15 = vector.shape_cast %11 : vector<8x8xbf16> to vector<1x8x8xbf16>
    %16 = tpu.concatenate %12, %13, %14, %15 in 0 : vector<1x8x8xbf16>, vector<1x8x8xbf16>, vector<1x8x8xbf16>, vector<1x8x8xbf16> -> vector<4x8x8xbf16>
    %17 = vector.extract_strided_slice %3 {offsets = [0, 0], sizes = [8, 8], strides = [1, 1]} : vector<8x32xbf16> to vector<8x8xbf16>
    %18 = vector.extract_strided_slice %3 {offsets = [0, 8], sizes = [8, 8], strides = [1, 1]} : vector<8x32xbf16> to vector<8x8xbf16>
    %19 = vector.extract_strided_slice %3 {offsets = [0, 16], sizes = [8, 8], strides = [1, 1]} : vector<8x32xbf16> to vector<8x8xbf16>
    %20 = vector.extract_strided_slice %3 {offsets = [0, 24], sizes = [8, 8], strides = [1, 1]} : vector<8x32xbf16> to vector<8x8xbf16>
    %21 = vector.shape_cast %17 : vector<8x8xbf16> to vector<1x8x8xbf16>
    %22 = vector.shape_cast %18 : vector<8x8xbf16> to vector<1x8x8xbf16>
    %23 = vector.shape_cast %19 : vector<8x8xbf16> to vector<1x8x8xbf16>
    %24 = vector.shape_cast %20 : vector<8x8xbf16> to vector<1x8x8xbf16>
    %25 = tpu.concatenate %21, %22, %23, %24 in 0 : vector<1x8x8xbf16>, vector<1x8x8xbf16>, vector<1x8x8xbf16>, vector<1x8x8xbf16> -> vector<4x8x8xbf16>
    %26 = vector.extract_strided_slice %5 {offsets = [0, 0], sizes = [8, 8], strides = [1, 1]} : vector<8x32xbf16> to vector<8x8xbf16>
    %27 = vector.extract_strided_slice %5 {offsets = [0, 8], sizes = [8, 8], strides = [1, 1]} : vector<8x32xbf16> to vector<8x8xbf16>
    %28 = vector.extract_strided_slice %5 {offsets = [0, 16], sizes = [8, 8], strides = [1, 1]} : vector<8x32xbf16> to vector<8x8xbf16>
    %29 = vector.extract_strided_slice %5 {offsets = [0, 24], sizes = [8, 8], strides = [1, 1]} : vector<8x32xbf16> to vector<8x8xbf16>
    %30 = vector.shape_cast %26 : vector<8x8xbf16> to vector<1x8x8xbf16>
    %31 = vector.shape_cast %27 : vector<8x8xbf16> to vector<1x8x8xbf16>
    %32 = vector.shape_cast %28 : vector<8x8xbf16> to vector<1x8x8xbf16>
    %33 = vector.shape_cast %29 : vector<8x8xbf16> to vector<1x8x8xbf16>
    %34 = tpu.concatenate %30, %31, %32, %33 in 0 : vector<1x8x8xbf16>, vector<1x8x8xbf16>, vector<1x8x8xbf16>, vector<1x8x8xbf16> -> vector<4x8x8xbf16>
    "tpu.trace_start"() <{level = 10 : i32, message = "hqd,hkd->hqk"}> : () -> ()
    %cst = arith.constant dense<0.000000e+00> : vector<4x8x8xf32>
    %35 = tpu.matmul %16, %25, %cst {dimension_numbers = #tpu.dot_dimension_numbers<[2], [2], [1], [1], [0, 0, 0, 1, 1, 1], [0], [0]>} : vector<4x8x8xbf16>, vector<4x8x8xbf16>, vector<4x8x8xf32> -> vector<4x8x8xf32>
    "tpu.trace_stop"() : () -> ()
    %c8_i32 = arith.constant 8 : i32
    %36 = arith.muli %arg1, %c8_i32 : i32
    %37 = tpu.iota {dimensions = array<i32: 0>} : vector<8x8xi32>
    %38 = vector.broadcast %36 : i32 to vector<8x8xi32>
    %39 = arith.addi %38, %37 : vector<8x8xi32>
    %40 = tpu.iota {dimensions = array<i32: 1>} : vector<8x8xi32>
    %41 = arith.cmpi sgt, %40, %39 : vector<8x8xi32>
    %cst_14 = arith.constant -1.000000e+09 : f32
    %cst_15 = arith.constant 0.000000e+00 : f32
    %42 = vector.broadcast %cst_14 : f32 to vector<8x8xf32>
    %43 = vector.broadcast %cst_15 : f32 to vector<8x8xf32>
    %44 = arith.select %41, %42, %43 : vector<8x8xi1>, vector<8x8xf32>
    %45 = vector.broadcast %7 : vector<1x8xf32> to vector<8x8xf32>
    %46 = arith.addf %45, %44 : vector<8x8xf32>
    %cst_16 = arith.constant 0.353553385 : f32
    %47 = vector.broadcast %cst_16 : f32 to vector<4x8x8xf32>
    %48 = arith.mulf %35, %47 : vector<4x8x8xf32>
    %49 = vector.shape_cast %46 : vector<8x8xf32> to vector<1x8x8xf32>
    %50 = vector.broadcast %49 : vector<1x8x8xf32> to vector<4x8x8xf32>
    %51 = arith.addf %48, %50 : vector<4x8x8xf32>
    %cst_17 = arith.constant dense<0xFF800000> : vector<4x8xf32>
    %52 = vector.multi_reduction <maximumf>, %51, %cst_17 [2] : vector<4x8x8xf32> to vector<4x8xf32>
    %53 = vector.shape_cast %52 : vector<4x8xf32> to vector<4x8x1xf32>
    %54 = vector.broadcast %53 : vector<4x8x1xf32> to vector<4x8x8xf32>
    %55 = arith.subf %51, %54 : vector<4x8x8xf32>
    %56 = math.exp %55 : vector<4x8x8xf32>
    %cst_18 = arith.constant dense<0.000000e+00> : vector<4x8xf32>
    %57 = vector.multi_reduction <add>, %56, %cst_18 [2] : vector<4x8x8xf32> to vector<4x8xf32>
    %58 = vector.shape_cast %57 : vector<4x8xf32> to vector<4x8x1xf32>
    %59 = arith.truncf %56 : vector<4x8x8xf32> to vector<4x8x8xbf16>
    "tpu.trace_start"() <{level = 10 : i32, message = "hqk,hkd->hqd"}> : () -> ()
    %cst_19 = arith.constant dense<0.000000e+00> : vector<4x8x8xf32>
    %60 = tpu.matmul %59, %34, %cst_19 {dimension_numbers = #tpu.dot_dimension_numbers<[2], [1], [1], [2], [0, 0, 0, 1, 1, 2], [0], [0]>} : vector<4x8x8xbf16>, vector<4x8x8xbf16>, vector<4x8x8xf32> -> vector<4x8x8xf32>
    "tpu.trace_stop"() : () -> ()
    %61 = tpu.reciprocal %58 {approx = true} : vector<4x8x1xf32> -> vector<4x8x1xf32>
    %62 = vector.broadcast %61 : vector<4x8x1xf32> to vector<4x8x8xf32>
    %63 = arith.mulf %60, %62 : vector<4x8x8xf32>
    %64 = vector.extract_strided_slice %63 {offsets = [0, 0, 0], sizes = [1, 8, 8], strides = [1, 1, 1]} : vector<4x8x8xf32> to vector<1x8x8xf32>
    %65 = vector.shape_cast %64 : vector<1x8x8xf32> to vector<8x8xf32>
    %66 = vector.extract_strided_slice %63 {offsets = [1, 0, 0], sizes = [1, 8, 8], strides = [1, 1, 1]} : vector<4x8x8xf32> to vector<1x8x8xf32>
    %67 = vector.shape_cast %66 : vector<1x8x8xf32> to vector<8x8xf32>
    %68 = vector.extract_strided_slice %63 {offsets = [2, 0, 0], sizes = [1, 8, 8], strides = [1, 1, 1]} : vector<4x8x8xf32> to vector<1x8x8xf32>
    %69 = vector.shape_cast %68 : vector<1x8x8xf32> to vector<8x8xf32>
    %70 = vector.extract_strided_slice %63 {offsets = [3, 0, 0], sizes = [1, 8, 8], strides = [1, 1, 1]} : vector<4x8x8xf32> to vector<1x8x8xf32>
    %71 = vector.shape_cast %70 : vector<1x8x8xf32> to vector<8x8xf32>
    %72 = tpu.concatenate %65, %67, %69, %71 in 1 : vector<8x8xf32>, vector<8x8xf32>, vector<8x8xf32>, vector<8x8xf32> -> vector<8x32xf32>
    %73 = arith.truncf %72 : vector<8x32xf32> to vector<8x32xbf16>
    %c0_20 = arith.constant 0 : index
    %c0_21 = arith.constant 0 : index
    %c0_22 = arith.constant 0 : index
    %74 = vector.load %arg6[%c0_20, %c0_21, %c0_22] : memref<1x8x32xbf16, #tpu.memory_space<vmem>>, vector<1x8x32xbf16>
    %75 = vector.shape_cast %74 : vector<1x8x32xbf16> to vector<8x32xbf16>
    %76 = vector.shape_cast %73 : vector<8x32xbf16> to vector<1x8x32xbf16>
    tpu.vector_store %arg6[%c0_20, %c0_21, %c0_22], %76 {strides = array<i32>} : memref<1x8x32xbf16, #tpu.memory_space<vmem>>, vector<1x8x32xbf16>,
    return
  }
  func.func @transform_0(%arg0: i32, %arg1: i32) -> (i32, i32, i32, i32) {
    %c0_i32 = arith.constant 0 : i32
    %c0_i32_0 = arith.constant 0 : i32
    %c0_i32_1 = arith.constant 0 : i32
    return %c0_i32, %arg0, %arg1, %c0_i32_0 : i32, i32, i32, i32
  }
  func.func @transform_1(%arg0: i32, %arg1: i32) -> (i32, i32, i32, i32) {
    %c1_i32 = arith.constant 1 : i32
    %c0_i32 = arith.constant 0 : i32
    %c0_i32_0 = arith.constant 0 : i32
    %c0_i32_1 = arith.constant 0 : i32
    return %c1_i32, %arg0, %c0_i32, %c0_i32_0 : i32, i32, i32, i32
  }
  func.func @transform_2(%arg0: i32, %arg1: i32) -> (i32, i32, i32, i32) {
    %c2_i32 = arith.constant 2 : i32
    %c0_i32 = arith.constant 0 : i32
    %c0_i32_0 = arith.constant 0 : i32
    %c0_i32_1 = arith.constant 0 : i32
    return %c2_i32, %arg0, %c0_i32, %c0_i32_0 : i32, i32, i32, i32
  }
  func.func @transform_3(%arg0: i32, %arg1: i32) -> (i32, i32, i32) {
    %c0_i32 = arith.constant 0 : i32
    %c0_i32_0 = arith.constant 0 : i32
    %c0_i32_1 = arith.constant 0 : i32
    return %arg0, %c0_i32, %c0_i32_0 : i32, i32, i32
  }
  func.func @transform_4(%arg0: i32, %arg1: i32) -> (i32, i32, i32) {
    %c0_i32 = arith.constant 0 : i32
    %c0_i32_0 = arith.constant 0 : i32
    return %arg0, %arg1, %c0_i32 : i32, i32, i32
  }
}

module attributes {stable_mosaic.version = 11 : i64} {
  func.func @_mm_kernel(%arg0: i32, %arg1: i32, %arg2: i32, %arg3: memref<16x32xf32, #tpu.memory_space<vmem>>, %arg4: memref<32x32xbf16, #tpu.memory_space<vmem>>, %arg5: memref<1x32xf32, #tpu.memory_space<vmem>>, %arg6: memref<16x32xbf16, #tpu.memory_space<vmem>>, %arg7: memref<16x32xf32, #tpu.memory_space<vmem>>) attributes {dimension_semantics = [#tpu.dimension_semantics<parallel>, #tpu.dimension_semantics<parallel>, #tpu.dimension_semantics<arbitrary>], iteration_bounds = array<i64: 1, 1, 1>, scalar_prefetch = 0 : i64, scratch_operands = 1 : i64, tpu.core_type = #tpu.core_type<tc>, window_params = [{transform_indices = @transform_0, window_bounds = array<i64: 16, 32>}, {transform_indices = @transform_1, window_bounds = array<i64: 32, 32>}, {transform_indices = @transform_2, window_bounds = array<i64: 1, 32>}, {transform_indices = @transform_3, window_bounds = array<i64: 16, 32>}]} {
    %c0_i32 = arith.constant 0 : i32
    %0 = arith.cmpi eq, %arg2, %c0_i32 : i32
    %1 = arith.extui %0 : i1 to i32
    %c0_i32_0 = arith.constant 0 : i32
    %2 = arith.cmpi ne, %1, %c0_i32_0 : i32
    scf.if %2 {
      %cst_10 = arith.constant 0.000000e+00 : f32
      %13 = vector.broadcast %cst_10 : f32 to vector<16x32xf32>
      %c0_11 = arith.constant 0 : index
      %c0_12 = arith.constant 0 : index
      %14 = vector.load %arg7[%c0_11, %c0_12] : memref<16x32xf32, #tpu.memory_space<vmem>>, vector<16x32xf32>
      tpu.vector_store %arg7[%c0_11, %c0_12], %13 {strides = array<i32>} : memref<16x32xf32, #tpu.memory_space<vmem>>, vector<16x32xf32>,
    } else {
    }
    %c0 = arith.constant 0 : index
    %c0_1 = arith.constant 0 : index
    %3 = vector.load %arg7[%c0, %c0_1] : memref<16x32xf32, #tpu.memory_space<vmem>>, vector<16x32xf32>
    %c0_2 = arith.constant 0 : index
    %c0_3 = arith.constant 0 : index
    %4 = vector.load %arg3[%c0_2, %c0_3] : memref<16x32xf32, #tpu.memory_space<vmem>>, vector<16x32xf32>
    %5 = arith.truncf %4 : vector<16x32xf32> to vector<16x32xbf16>
    %c0_4 = arith.constant 0 : index
    %c0_5 = arith.constant 0 : index
    %6 = vector.load %arg4[%c0_4, %c0_5] : memref<32x32xbf16, #tpu.memory_space<vmem>>, vector<32x32xbf16>
    %cst = arith.constant dense<0.000000e+00> : vector<16x32xf32>
    %7 = tpu.matmul %5, %6, %cst {dimension_numbers = #tpu.dot_dimension_numbers<[1], [0], [0], [1], [0, 0, 1, 1], [], []>} : vector<16x32xbf16>, vector<32x32xbf16>, vector<16x32xf32> -> vector<16x32xf32>
    %8 = arith.addf %3, %7 : vector<16x32xf32>
    %c0_6 = arith.constant 0 : index
    %c0_7 = arith.constant 0 : index
    %9 = vector.load %arg7[%c0_6, %c0_7] : memref<16x32xf32, #tpu.memory_space<vmem>>, vector<16x32xf32>
    tpu.vector_store %arg7[%c0_6, %c0_7], %8 {strides = array<i32>} : memref<16x32xf32, #tpu.memory_space<vmem>>, vector<16x32xf32>,
    %c0_i32_8 = arith.constant 0 : i32
    %10 = arith.cmpi eq, %arg2, %c0_i32_8 : i32
    %11 = arith.extui %10 : i1 to i32
    %c0_i32_9 = arith.constant 0 : i32
    %12 = arith.cmpi ne, %11, %c0_i32_9 : i32
    scf.if %12 {
      %c0_10 = arith.constant 0 : index
      %c0_11 = arith.constant 0 : index
      %13 = vector.load %arg7[%c0_10, %c0_11] : memref<16x32xf32, #tpu.memory_space<vmem>>, vector<16x32xf32>
      %c0_12 = arith.constant 0 : index
      %c0_13 = arith.constant 0 : index
      %14 = vector.load %arg5[%c0_12, %c0_13] : memref<1x32xf32, #tpu.memory_space<vmem>>, vector<1x32xf32>
      %15 = vector.broadcast %14 : vector<1x32xf32> to vector<16x32xf32>
      %16 = arith.addf %13, %15 : vector<16x32xf32>
      %17 = arith.truncf %16 : vector<16x32xf32> to vector<16x32xbf16>
      %c0_14 = arith.constant 0 : index
      %c0_15 = arith.constant 0 : index
      %18 = vector.load %arg6[%c0_14, %c0_15] : memref<16x32xbf16, #tpu.memory_space<vmem>>, vector<16x32xbf16>
      tpu.vector_store %arg6[%c0_14, %c0_15], %17 {strides = array<i32>} : memref<16x32xbf16, #tpu.memory_space<vmem>>, vector<16x32xbf16>,
    } else {
    }
    return
  }
  func.func @transform_0(%arg0: i32, %arg1: i32, %arg2: i32) -> (i32, i32) {
    %c0_i32 = arith.constant 0 : i32
    return %arg0, %arg2 : i32, i32
  }
  func.func @transform_1(%arg0: i32, %arg1: i32, %arg2: i32) -> (i32, i32) {
    %c0_i32 = arith.constant 0 : i32
    return %arg2, %arg1 : i32, i32
  }
  func.func @transform_2(%arg0: i32, %arg1: i32, %arg2: i32) -> (i32, i32) {
    %c0_i32 = arith.constant 0 : i32
    %c0_i32_0 = arith.constant 0 : i32
    return %c0_i32, %arg1 : i32, i32
  }
  func.func @transform_3(%arg0: i32, %arg1: i32, %arg2: i32) -> (i32, i32) {
    %c0_i32 = arith.constant 0 : i32
    return %arg0, %arg1 : i32, i32
  }
}

module attributes {stable_mosaic.version = 11 : i64} {
  func.func @_attn_kernel(%arg0: i32, %arg1: i32, %arg2: memref<1x1x8x32xbf16, #tpu.memory_space<vmem>>, %arg3: memref<1x1x8x32xbf16, #tpu.memory_space<vmem>>, %arg4: memref<1x1x8x32xbf16, #tpu.memory_space<vmem>>, %arg5: memref<1x1x8xf32, #tpu.memory_space<vmem>>, %arg6: memref<1x8x32xbf16, #tpu.memory_space<vmem>>) attributes {dimension_semantics = [#tpu.dimension_semantics<parallel>, #tpu.dimension_semantics<parallel>], iteration_bounds = array<i64: 2, 1>, scalar_prefetch = 0 : i64, scratch_operands = 0 : i64, tpu.core_type = #tpu.core_type<tc>, window_params = [{transform_indices = @transform_0, window_bounds = array<i64: 1, 1, 8, 32>}, {transform_indices = @transform_1, window_bounds = array<i64: 1, 1, 8, 32>}, {transform_indices = @transform_2, window_bounds = array<i64: 1, 1, 8, 32>}, {transform_indices = @transform_3, window_bounds = array<i64: 1, 1, 8>}, {transform_indices = @transform_4, window_bounds = array<i64: 1, 8, 32>}]} {
    %c0 = arith.constant 0 : index
    %c0_0 = arith.constant 0 : index
    %c0_1 = arith.constant 0 : index
    %c0_2 = arith.constant 0 : index
    %0 = vector.load %arg2[%c0, %c0_0, %c0_1, %c0_2] : memref<1x1x8x32xbf16, #tpu.memory_space<vmem>>, vector<1x1x8x32xbf16>
    %1 = vector.shape_cast %0 : vector<1x1x8x32xbf16> to vector<8x32xbf16>
    %c0_3 = arith.constant 0 : index
    %c0_4 = arith.constant 0 : index
    %c0_5 = arith.constant 0 : index
    %c0_6 = arith.constant 0 : index
    %2 = vector.load %arg3[%c0_3, %c0_4, %c0_5, %c0_6] : memref<1x1x8x32xbf16, #tpu.memory_space<vmem>>, vector<1x1x8x32xbf16>
    %3 = vector.shape_cast %2 : vector<1x1x8x32xbf16> to vector<8x32xbf16>
    %c0_7 = arith.constant 0 : index
    %c0_8 = arith.constant 0 : index
    %c0_9 = arith.constant 0 : index
    %c0_10 = arith.constant 0 : index
    %4 = vector.load %arg4[%c0_7, %c0_8, %c0_9, %c0_10] : memref<1x1x8x32xbf16, #tpu.memory_space<vmem>>, vector<1x1x8x32xbf16>
    %5 = vector.shape_cast %4 : vector<1x1x8x32xbf16> to vector<8x32xbf16>
    %c0_11 = arith.constant 0 : index
    %c0_12 = arith.constant 0 : index
    %c0_13 = arith.constant 0 : index
    %6 = vector.load %arg5[%c0_11, %c0_12, %c0_13] : memref<1x1x8xf32, #tpu.memory_space<vmem>>, vector<1x1x8xf32>
    %7 = vector.shape_cast %6 : vector<1x1x8xf32> to vector<1x8xf32>
    %8 = vector.extract_strided_slice %1 {offsets = [0, 0], sizes = [8, 8], strides = [1, 1]} : vector<8x32xbf16> to vector<8x8xbf16>
    %9 = vector.extract_strided_slice %1 {offsets = [0, 8], sizes = [8, 8], strides = [1, 1]} : vector<8x32xbf16> to vector<8x8xbf16>
    %10 = vector.extract_strided_slice %1 {offsets = [0, 16], sizes = [8, 8], strides = [1, 1]} : vector<8x32xbf16> to vector<8x8xbf16>
    %11 = vector.extract_strided_slice %1 {offsets = [0, 24], sizes = [8, 8], strides = [1, 1]} : vector<8x32xbf16> to vector<8x8xbf16>
    %12 = vector.shape_cast %8 : vector<8x8xbf16> to vector<1x8x8xbf16>
    %13 = vector.shape_cast %9 : vector<8x8xbf16> to vector<1x8x8xbf16>
    %14 = vector.shape_cast %10 : vector<8x8xbf16> to vector<1x8x8xbf16>
    %15 = vector.shape_cast %11 : vector<8x8xbf16> to vector<1x8x8xbf16>
    %16 = tpu.concatenate %12, %13, %14, %15 in 0 : vector<1x8x8xbf16>, vector<1x8x8xbf16>, vector<1x8x8xbf16>, vector<1x8x8xbf16> -> vector<4x8x8xbf16>
    %17 = vector.extract_strided_slice %3 {offsets = [0, 0], sizes = [8, 8], strides = [1, 1]} : vector<8x32xbf16> to vector<8x8xbf16>
    %18 = vector.extract_strided_slice %3 {offsets = [0, 8], sizes = [8, 8], strides = [1, 1]} : vector<8x32xbf16> to vector<8x8xbf16>
    %19 = vector.extract_strided_slice %3 {offsets = [0, 16], sizes = [8, 8], strides = [1, 1]} : vector<8x32xbf16> to vector<8x8xbf16>
    %20 = vector.extract_strided_slice %3 {offsets = [0, 24], sizes = [8, 8], strides = [1, 1]} : vector<8x32xbf16> to vector<8x8xbf16>
    %21 = vector.shape_cast %17 : vector<8x8xbf16> to vector<1x8x8xbf16>
    %22 = vector.shape_cast %18 : vector<8x8xbf16> to vector<1x8x8xbf16>
    %23 = vector.shape_cast %19 : vector<8x8xbf16> to vector<1x8x8xbf16>
    %24 = vector.shape_cast %20 : vector<8x8xbf16> to vector<1x8x8xbf16>
    %25 = tpu.concatenate %21, %22, %23, %24 in 0 : vector<1x8x8xbf16>, vector<1x8x8xbf16>, vector<1x8x8xbf16>, vector<1x8x8xbf16> -> vector<4x8x8xbf16>
    %26 = vector.extract_strided_slice %5 {offsets = [0, 0], sizes = [8, 8], strides = [1, 1]} : vector<8x32xbf16> to vector<8x8xbf16>
    %27 = vector.extract_strided_slice %5 {offsets = [0, 8], sizes = [8, 8], strides = [1, 1]} : vector<8x32xbf16> to vector<8x8xbf16>
    %28 = vector.extract_strided_slice %5 {offsets = [0, 16], sizes = [8, 8], strides = [1, 1]} : vector<8x32xbf16> to vector<8x8xbf16>
    %29 = vector.extract_strided_slice %5 {offsets = [0, 24], sizes = [8, 8], strides = [1, 1]} : vector<8x32xbf16> to vector<8x8xbf16>
    %30 = vector.shape_cast %26 : vector<8x8xbf16> to vector<1x8x8xbf16>
    %31 = vector.shape_cast %27 : vector<8x8xbf16> to vector<1x8x8xbf16>
    %32 = vector.shape_cast %28 : vector<8x8xbf16> to vector<1x8x8xbf16>
    %33 = vector.shape_cast %29 : vector<8x8xbf16> to vector<1x8x8xbf16>
    %34 = tpu.concatenate %30, %31, %32, %33 in 0 : vector<1x8x8xbf16>, vector<1x8x8xbf16>, vector<1x8x8xbf16>, vector<1x8x8xbf16> -> vector<4x8x8xbf16>
    "tpu.trace_start"() <{level = 10 : i32, message = "hqd,hkd->hqk"}> : () -> ()
    %cst = arith.constant dense<0.000000e+00> : vector<4x8x8xf32>
    %35 = tpu.matmul %16, %25, %cst {dimension_numbers = #tpu.dot_dimension_numbers<[2], [2], [1], [1], [0, 0, 0, 1, 1, 1], [0], [0]>} : vector<4x8x8xbf16>, vector<4x8x8xbf16>, vector<4x8x8xf32> -> vector<4x8x8xf32>
    "tpu.trace_stop"() : () -> ()
    %cst_14 = arith.constant 0.353553385 : f32
    %36 = vector.broadcast %cst_14 : f32 to vector<4x8x8xf32>
    %37 = arith.mulf %35, %36 : vector<4x8x8xf32>
    %38 = vector.shape_cast %7 : vector<1x8xf32> to vector<1x1x8xf32>
    %39 = vector.broadcast %38 : vector<1x1x8xf32> to vector<4x8x8xf32>
    %40 = arith.addf %37, %39 : vector<4x8x8xf32>
    %cst_15 = arith.constant dense<0xFF800000> : vector<4x8xf32>
    %41 = vector.multi_reduction <maximumf>, %40, %cst_15 [2] : vector<4x8x8xf32> to vector<4x8xf32>
    %42 = vector.shape_cast %41 : vector<4x8xf32> to vector<4x8x1xf32>
    %43 = vector.broadcast %42 : vector<4x8x1xf32> to vector<4x8x8xf32>
    %44 = arith.subf %40, %43 : vector<4x8x8xf32>
    %45 = math.exp %44 : vector<4x8x8xf32>
    %cst_16 = arith.constant dense<0.000000e+00> : vector<4x8xf32>
    %46 = vector.multi_reduction <add>, %45, %cst_16 [2] : vector<4x8x8xf32> to vector<4x8xf32>
    %47 = vector.shape_cast %46 : vector<4x8xf32> to vector<4x8x1xf32>
    %48 = arith.truncf %45 : vector<4x8x8xf32> to vector<4x8x8xbf16>
    "tpu.trace_start"() <{level = 10 : i32, message = "hqk,hkd->hqd"}> : () -> ()
    %cst_17 = arith.constant dense<0.000000e+00> : vector<4x8x8xf32>
    %49 = tpu.matmul %48, %34, %cst_17 {dimension_numbers = #tpu.dot_dimension_numbers<[2], [1], [1], [2], [0, 0, 0, 1, 1, 2], [0], [0]>} : vector<4x8x8xbf16>, vector<4x8x8xbf16>, vector<4x8x8xf32> -> vector<4x8x8xf32>
    "tpu.trace_stop"() : () -> ()
    %50 = tpu.reciprocal %47 {approx = true} : vector<4x8x1xf32> -> vector<4x8x1xf32>
    %51 = vector.broadcast %50 : vector<4x8x1xf32> to vector<4x8x8xf32>
    %52 = arith.mulf %49, %51 : vector<4x8x8xf32>
    %53 = vector.extract_strided_slice %52 {offsets = [0, 0, 0], sizes = [1, 8, 8], strides = [1, 1, 1]} : vector<4x8x8xf32> to vector<1x8x8xf32>
    %54 = vector.shape_cast %53 : vector<1x8x8xf32> to vector<8x8xf32>
    %55 = vector.extract_strided_slice %52 {offsets = [1, 0, 0], sizes = [1, 8, 8], strides = [1, 1, 1]} : vector<4x8x8xf32> to vector<1x8x8xf32>
    %56 = vector.shape_cast %55 : vector<1x8x8xf32> to vector<8x8xf32>
    %57 = vector.extract_strided_slice %52 {offsets = [2, 0, 0], sizes = [1, 8, 8], strides = [1, 1, 1]} : vector<4x8x8xf32> to vector<1x8x8xf32>
    %58 = vector.shape_cast %57 : vector<1x8x8xf32> to vector<8x8xf32>
    %59 = vector.extract_strided_slice %52 {offsets = [3, 0, 0], sizes = [1, 8, 8], strides = [1, 1, 1]} : vector<4x8x8xf32> to vector<1x8x8xf32>
    %60 = vector.shape_cast %59 : vector<1x8x8xf32> to vector<8x8xf32>
    %61 = tpu.concatenate %54, %56, %58, %60 in 1 : vector<8x8xf32>, vector<8x8xf32>, vector<8x8xf32>, vector<8x8xf32> -> vector<8x32xf32>
    %62 = arith.truncf %61 : vector<8x32xf32> to vector<8x32xbf16>
    %c0_18 = arith.constant 0 : index
    %c0_19 = arith.constant 0 : index
    %c0_20 = arith.constant 0 : index
    %63 = vector.load %arg6[%c0_18, %c0_19, %c0_20] : memref<1x8x32xbf16, #tpu.memory_space<vmem>>, vector<1x8x32xbf16>
    %64 = vector.shape_cast %63 : vector<1x8x32xbf16> to vector<8x32xbf16>
    %65 = vector.shape_cast %62 : vector<8x32xbf16> to vector<1x8x32xbf16>
    tpu.vector_store %arg6[%c0_18, %c0_19, %c0_20], %65 {strides = array<i32>} : memref<1x8x32xbf16, #tpu.memory_space<vmem>>, vector<1x8x32xbf16>,
    return
  }
  func.func @transform_0(%arg0: i32, %arg1: i32) -> (i32, i32, i32, i32) {
    %c0_i32 = arith.constant 0 : i32
    %c0_i32_0 = arith.constant 0 : i32
    %c0_i32_1 = arith.constant 0 : i32
    return %c0_i32, %arg0, %arg1, %c0_i32_0 : i32, i32, i32, i32
  }
  func.func @transform_1(%arg0: i32, %arg1: i32) -> (i32, i32, i32, i32) {
    %c0_i32 = arith.constant 0 : i32
    %c0_i32_0 = arith.constant 0 : i32
    %c0_i32_1 = arith.constant 0 : i32
    %c0_i32_2 = arith.constant 0 : i32
    return %c0_i32, %arg0, %c0_i32_0, %c0_i32_1 : i32, i32, i32, i32
  }
  func.func @transform_2(%arg0: i32, %arg1: i32) -> (i32, i32, i32, i32) {
    %c1_i32 = arith.constant 1 : i32
    %c0_i32 = arith.constant 0 : i32
    %c0_i32_0 = arith.constant 0 : i32
    %c0_i32_1 = arith.constant 0 : i32
    return %c1_i32, %arg0, %c0_i32, %c0_i32_0 : i32, i32, i32, i32
  }
  func.func @transform_3(%arg0: i32, %arg1: i32) -> (i32, i32, i32) {
    %c0_i32 = arith.constant 0 : i32
    %c0_i32_0 = arith.constant 0 : i32
    %c0_i32_1 = arith.constant 0 : i32
    return %arg0, %c0_i32, %c0_i32_0 : i32, i32, i32
  }
  func.func @transform_4(%arg0: i32, %arg1: i32) -> (i32, i32, i32) {
    %c0_i32 = arith.constant 0 : i32
    %c0_i32_0 = arith.constant 0 : i32
    return %arg0, %arg1, %c0_i32 : i32, i32, i32
  }
}

module attributes {stable_mosaic.version = 11 : i64} {
  func.func @_mm_kernel(%arg0: i32, %arg1: i32, %arg2: i32, %arg3: memref<16x32xf32, #tpu.memory_space<vmem>>, %arg4: memref<32x512xbf16, #tpu.memory_space<vmem>>, %arg5: memref<1x512xf32, #tpu.memory_space<vmem>>, %arg6: memref<16x512xbf16, #tpu.memory_space<vmem>>, %arg7: memref<16x512xf32, #tpu.memory_space<vmem>>) attributes {dimension_semantics = [#tpu.dimension_semantics<parallel>, #tpu.dimension_semantics<parallel>, #tpu.dimension_semantics<arbitrary>], iteration_bounds = array<i64: 1, 4, 1>, scalar_prefetch = 0 : i64, scratch_operands = 1 : i64, tpu.core_type = #tpu.core_type<tc>, window_params = [{transform_indices = @transform_0, window_bounds = array<i64: 16, 32>}, {transform_indices = @transform_1, window_bounds = array<i64: 32, 512>}, {transform_indices = @transform_2, window_bounds = array<i64: 1, 512>}, {transform_indices = @transform_3, window_bounds = array<i64: 16, 512>}]} {
    %c0_i32 = arith.constant 0 : i32
    %0 = arith.cmpi eq, %arg2, %c0_i32 : i32
    %1 = arith.extui %0 : i1 to i32
    %c0_i32_0 = arith.constant 0 : i32
    %2 = arith.cmpi ne, %1, %c0_i32_0 : i32
    scf.if %2 {
      %cst_10 = arith.constant 0.000000e+00 : f32
      %13 = vector.broadcast %cst_10 : f32 to vector<16x512xf32>
      %c0_11 = arith.constant 0 : index
      %c0_12 = arith.constant 0 : index
      %14 = vector.load %arg7[%c0_11, %c0_12] : memref<16x512xf32, #tpu.memory_space<vmem>>, vector<16x512xf32>
      tpu.vector_store %arg7[%c0_11, %c0_12], %13 {strides = array<i32>} : memref<16x512xf32, #tpu.memory_space<vmem>>, vector<16x512xf32>,
    } else {
    }
    %c0 = arith.constant 0 : index
    %c0_1 = arith.constant 0 : index
    %3 = vector.load %arg7[%c0, %c0_1] : memref<16x512xf32, #tpu.memory_space<vmem>>, vector<16x512xf32>
    %c0_2 = arith.constant 0 : index
    %c0_3 = arith.constant 0 : index
    %4 = vector.load %arg3[%c0_2, %c0_3] : memref<16x32xf32, #tpu.memory_space<vmem>>, vector<16x32xf32>
    %5 = arith.truncf %4 : vector<16x32xf32> to vector<16x32xbf16>
    %c0_4 = arith.constant 0 : index
    %c0_5 = arith.constant 0 : index
    %6 = vector.load %arg4[%c0_4, %c0_5] : memref<32x512xbf16, #tpu.memory_space<vmem>>, vector<32x512xbf16>
    %cst = arith.constant dense<0.000000e+00> : vector<16x512xf32>
    %7 = tpu.matmul %5, %6, %cst {dimension_numbers = #tpu.dot_dimension_numbers<[1], [0], [0], [1], [0, 0, 1, 1], [], []>} : vector<16x32xbf16>, vector<32x512xbf16>, vector<16x512xf32> -> vector<16x512xf32>
    %8 = arith.addf %3, %7 : vector<16x512xf32>
    %c0_6 = arith.constant 0 : index
    %c0_7 = arith.constant 0 : index
    %9 = vector.load %arg7[%c0_6, %c0_7] : memref<16x512xf32, #tpu.memory_space<vmem>>, vector<16x512xf32>
    tpu.vector_store %arg7[%c0_6, %c0_7], %8 {strides = array<i32>} : memref<16x512xf32, #tpu.memory_space<vmem>>, vector<16x512xf32>,
    %c0_i32_8 = arith.constant 0 : i32
    %10 = arith.cmpi eq, %arg2, %c0_i32_8 : i32
    %11 = arith.extui %10 : i1 to i32
    %c0_i32_9 = arith.constant 0 : i32
    %12 = arith.cmpi ne, %11, %c0_i32_9 : i32
    scf.if %12 {
      %c0_10 = arith.constant 0 : index
      %c0_11 = arith.constant 0 : index
      %13 = vector.load %arg7[%c0_10, %c0_11] : memref<16x512xf32, #tpu.memory_space<vmem>>, vector<16x512xf32>
      %c0_12 = arith.constant 0 : index
      %c0_13 = arith.constant 0 : index
      %14 = vector.load %arg5[%c0_12, %c0_13] : memref<1x512xf32, #tpu.memory_space<vmem>>, vector<1x512xf32>
      %15 = vector.broadcast %14 : vector<1x512xf32> to vector<16x512xf32>
      %16 = arith.addf %13, %15 : vector<16x512xf32>
      %cst_14 = arith.constant 0.000000e+00 : f32
      %17 = vector.broadcast %cst_14 : f32 to vector<16x512xf32>
      %18 = arith.maximumf %16, %17 : vector<16x512xf32>
      %19 = arith.truncf %18 : vector<16x512xf32> to vector<16x512xbf16>
      %c0_15 = arith.constant 0 : index
      %c0_16 = arith.constant 0 : index
      %20 = vector.load %arg6[%c0_15, %c0_16] : memref<16x512xbf16, #tpu.memory_space<vmem>>, vector<16x512xbf16>
      tpu.vector_store %arg6[%c0_15, %c0_16], %19 {strides = array<i32>} : memref<16x512xbf16, #tpu.memory_space<vmem>>, vector<16x512xbf16>,
    } else {
    }
    return
  }
  func.func @transform_0(%arg0: i32, %arg1: i32, %arg2: i32) -> (i32, i32) {
    %c0_i32 = arith.constant 0 : i32
    return %arg0, %arg2 : i32, i32
  }
  func.func @transform_1(%arg0: i32, %arg1: i32, %arg2: i32) -> (i32, i32) {
    %c0_i32 = arith.constant 0 : i32
    return %arg2, %arg1 : i32, i32
  }
  func.func @transform_2(%arg0: i32, %arg1: i32, %arg2: i32) -> (i32, i32) {
    %c0_i32 = arith.constant 0 : i32
    %c0_i32_0 = arith.constant 0 : i32
    return %c0_i32, %arg1 : i32, i32
  }
  func.func @transform_3(%arg0: i32, %arg1: i32, %arg2: i32) -> (i32, i32) {
    %c0_i32 = arith.constant 0 : i32
    return %arg0, %arg1 : i32, i32
  }
}

module attributes {stable_mosaic.version = 11 : i64} {
  func.func @_mm_split_kernel(%arg0: i32, %arg1: i32, %arg2: i32, %arg3: memref<16x32xf32, #tpu.memory_space<vmem>>, %arg4: memref<1x32x32xbf16, #tpu.memory_space<vmem>>, %arg5: memref<1x1x32xf32, #tpu.memory_space<vmem>>, %arg6: memref<1x16x32xbf16, #tpu.memory_space<vmem>>, %arg7: memref<16x32xf32, #tpu.memory_space<vmem>>) attributes {dimension_semantics = [#tpu.dimension_semantics<parallel>, #tpu.dimension_semantics<parallel>, #tpu.dimension_semantics<arbitrary>], iteration_bounds = array<i64: 2, 1, 1>, scalar_prefetch = 0 : i64, scratch_operands = 1 : i64, tpu.core_type = #tpu.core_type<tc>, window_params = [{transform_indices = @transform_0, window_bounds = array<i64: 16, 32>}, {transform_indices = @transform_1, window_bounds = array<i64: 1, 32, 32>}, {transform_indices = @transform_2, window_bounds = array<i64: 1, 1, 32>}, {transform_indices = @transform_3, window_bounds = array<i64: 1, 16, 32>}]} {
    %c0_i32 = arith.constant 0 : i32
    %0 = arith.cmpi eq, %arg2, %c0_i32 : i32
    %1 = arith.extui %0 : i1 to i32
    %c0_i32_0 = arith.constant 0 : i32
    %2 = arith.cmpi ne, %1, %c0_i32_0 : i32
    scf.if %2 {
      %cst_11 = arith.constant 0.000000e+00 : f32
      %14 = vector.broadcast %cst_11 : f32 to vector<16x32xf32>
      %c0_12 = arith.constant 0 : index
      %c0_13 = arith.constant 0 : index
      %15 = vector.load %arg7[%c0_12, %c0_13] : memref<16x32xf32, #tpu.memory_space<vmem>>, vector<16x32xf32>
      tpu.vector_store %arg7[%c0_12, %c0_13], %14 {strides = array<i32>} : memref<16x32xf32, #tpu.memory_space<vmem>>, vector<16x32xf32>,
    } else {
    }
    %c0 = arith.constant 0 : index
    %c0_1 = arith.constant 0 : index
    %3 = vector.load %arg7[%c0, %c0_1] : memref<16x32xf32, #tpu.memory_space<vmem>>, vector<16x32xf32>
    %c0_2 = arith.constant 0 : index
    %c0_3 = arith.constant 0 : index
    %4 = vector.load %arg3[%c0_2, %c0_3] : memref<16x32xf32, #tpu.memory_space<vmem>>, vector<16x32xf32>
    %5 = arith.truncf %4 : vector<16x32xf32> to vector<16x32xbf16>
    %c0_4 = arith.constant 0 : index
    %c0_5 = arith.constant 0 : index
    %c0_6 = arith.constant 0 : index
    %6 = vector.load %arg4[%c0_4, %c0_5, %c0_6] : memref<1x32x32xbf16, #tpu.memory_space<vmem>>, vector<1x32x32xbf16>
    %7 = vector.shape_cast %6 : vector<1x32x32xbf16> to vector<32x32xbf16>
    %cst = arith.constant dense<0.000000e+00> : vector<16x32xf32>
    %8 = tpu.matmul %5, %7, %cst {dimension_numbers = #tpu.dot_dimension_numbers<[1], [0], [0], [1], [0, 0, 1, 1], [], []>} : vector<16x32xbf16>, vector<32x32xbf16>, vector<16x32xf32> -> vector<16x32xf32>
    %9 = arith.addf %3, %8 : vector<16x32xf32>
    %c0_7 = arith.constant 0 : index
    %c0_8 = arith.constant 0 : index
    %10 = vector.load %arg7[%c0_7, %c0_8] : memref<16x32xf32, #tpu.memory_space<vmem>>, vector<16x32xf32>
    tpu.vector_store %arg7[%c0_7, %c0_8], %9 {strides = array<i32>} : memref<16x32xf32, #tpu.memory_space<vmem>>, vector<16x32xf32>,
    %c0_i32_9 = arith.constant 0 : i32
    %11 = arith.cmpi eq, %arg2, %c0_i32_9 : i32
    %12 = arith.extui %11 : i1 to i32
    %c0_i32_10 = arith.constant 0 : i32
    %13 = arith.cmpi ne, %12, %c0_i32_10 : i32
    scf.if %13 {
      %c0_11 = arith.constant 0 : index
      %c0_12 = arith.constant 0 : index
      %14 = vector.load %arg7[%c0_11, %c0_12] : memref<16x32xf32, #tpu.memory_space<vmem>>, vector<16x32xf32>
      %c0_13 = arith.constant 0 : index
      %c0_14 = arith.constant 0 : index
      %c0_15 = arith.constant 0 : index
      %15 = vector.load %arg5[%c0_13, %c0_14, %c0_15] : memref<1x1x32xf32, #tpu.memory_space<vmem>>, vector<1x1x32xf32>
      %16 = vector.shape_cast %15 : vector<1x1x32xf32> to vector<1x32xf32>
      %17 = vector.broadcast %16 : vector<1x32xf32> to vector<16x32xf32>
      %18 = arith.addf %14, %17 : vector<16x32xf32>
      %19 = arith.truncf %18 : vector<16x32xf32> to vector<16x32xbf16>
      %c0_16 = arith.constant 0 : index
      %c0_17 = arith.constant 0 : index
      %c0_18 = arith.constant 0 : index
      %20 = vector.load %arg6[%c0_16, %c0_17, %c0_18] : memref<1x16x32xbf16, #tpu.memory_space<vmem>>, vector<1x16x32xbf16>
      %21 = vector.shape_cast %20 : vector<1x16x32xbf16> to vector<16x32xbf16>
      %22 = vector.shape_cast %19 : vector<16x32xbf16> to vector<1x16x32xbf16>
      tpu.vector_store %arg6[%c0_16, %c0_17, %c0_18], %22 {strides = array<i32>} : memref<1x16x32xbf16, #tpu.memory_space<vmem>>, vector<1x16x32xbf16>,
    } else {
    }
    return
  }
  func.func @transform_0(%arg0: i32, %arg1: i32, %arg2: i32) -> (i32, i32) {
    %c0_i32 = arith.constant 0 : i32
    return %arg1, %arg2 : i32, i32
  }
  func.func @transform_1(%arg0: i32, %arg1: i32, %arg2: i32) -> (i32, i32, i32) {
    %c0_i32 = arith.constant 0 : i32
    %c0_i32_0 = arith.constant 0 : i32
    return %arg0, %arg2, %c0_i32 : i32, i32, i32
  }
  func.func @transform_2(%arg0: i32, %arg1: i32, %arg2: i32) -> (i32, i32, i32) {
    %c0_i32 = arith.constant 0 : i32
    %c0_i32_0 = arith.constant 0 : i32
    %c0_i32_1 = arith.constant 0 : i32
    return %arg0, %c0_i32, %c0_i32_0 : i32, i32, i32
  }
  func.func @transform_3(%arg0: i32, %arg1: i32, %arg2: i32) -> (i32, i32, i32) {
    %c0_i32 = arith.constant 0 : i32
    %c0_i32_0 = arith.constant 0 : i32
    return %arg0, %arg1, %c0_i32 : i32, i32, i32
  }
}

module attributes {stable_mosaic.version = 11 : i64} {
  func.func @_mm_kernel(%arg0: i32, %arg1: i32, %arg2: i32, %arg3: memref<16x32xf32, #tpu.memory_space<vmem>>, %arg4: memref<32x64xbf16, #tpu.memory_space<vmem>>, %arg5: memref<1x64xf32, #tpu.memory_space<vmem>>, %arg6: memref<16x64xf32, #tpu.memory_space<vmem>>, %arg7: memref<16x64xf32, #tpu.memory_space<vmem>>) attributes {dimension_semantics = [#tpu.dimension_semantics<parallel>, #tpu.dimension_semantics<parallel>, #tpu.dimension_semantics<arbitrary>], iteration_bounds = array<i64: 1, 1, 1>, scalar_prefetch = 0 : i64, scratch_operands = 1 : i64, tpu.core_type = #tpu.core_type<tc>, window_params = [{transform_indices = @transform_0, window_bounds = array<i64: 16, 32>}, {transform_indices = @transform_1, window_bounds = array<i64: 32, 64>}, {transform_indices = @transform_2, window_bounds = array<i64: 1, 64>}, {transform_indices = @transform_3, window_bounds = array<i64: 16, 64>}]} {
    %c0_i32 = arith.constant 0 : i32
    %0 = arith.cmpi eq, %arg2, %c0_i32 : i32
    %1 = arith.extui %0 : i1 to i32
    %c0_i32_0 = arith.constant 0 : i32
    %2 = arith.cmpi ne, %1, %c0_i32_0 : i32
    scf.if %2 {
      %cst_10 = arith.constant 0.000000e+00 : f32
      %13 = vector.broadcast %cst_10 : f32 to vector<16x64xf32>
      %c0_11 = arith.constant 0 : index
      %c0_12 = arith.constant 0 : index
      %14 = vector.load %arg7[%c0_11, %c0_12] : memref<16x64xf32, #tpu.memory_space<vmem>>, vector<16x64xf32>
      tpu.vector_store %arg7[%c0_11, %c0_12], %13 {strides = array<i32>} : memref<16x64xf32, #tpu.memory_space<vmem>>, vector<16x64xf32>,
    } else {
    }
    %c0 = arith.constant 0 : index
    %c0_1 = arith.constant 0 : index
    %3 = vector.load %arg7[%c0, %c0_1] : memref<16x64xf32, #tpu.memory_space<vmem>>, vector<16x64xf32>
    %c0_2 = arith.constant 0 : index
    %c0_3 = arith.constant 0 : index
    %4 = vector.load %arg3[%c0_2, %c0_3] : memref<16x32xf32, #tpu.memory_space<vmem>>, vector<16x32xf32>
    %5 = arith.truncf %4 : vector<16x32xf32> to vector<16x32xbf16>
    %c0_4 = arith.constant 0 : index
    %c0_5 = arith.constant 0 : index
    %6 = vector.load %arg4[%c0_4, %c0_5] : memref<32x64xbf16, #tpu.memory_space<vmem>>, vector<32x64xbf16>
    %cst = arith.constant dense<0.000000e+00> : vector<16x64xf32>
    %7 = tpu.matmul %5, %6, %cst {dimension_numbers = #tpu.dot_dimension_numbers<[1], [0], [0], [1], [0, 0, 1, 1], [], []>} : vector<16x32xbf16>, vector<32x64xbf16>, vector<16x64xf32> -> vector<16x64xf32>
    %8 = arith.addf %3, %7 : vector<16x64xf32>
    %c0_6 = arith.constant 0 : index
    %c0_7 = arith.constant 0 : index
    %9 = vector.load %arg7[%c0_6, %c0_7] : memref<16x64xf32, #tpu.memory_space<vmem>>, vector<16x64xf32>
    tpu.vector_store %arg7[%c0_6, %c0_7], %8 {strides = array<i32>} : memref<16x64xf32, #tpu.memory_space<vmem>>, vector<16x64xf32>,
    %c0_i32_8 = arith.constant 0 : i32
    %10 = arith.cmpi eq, %arg2, %c0_i32_8 : i32
    %11 = arith.extui %10 : i1 to i32
    %c0_i32_9 = arith.constant 0 : i32
    %12 = arith.cmpi ne, %11, %c0_i32_9 : i32
    scf.if %12 {
      %c0_10 = arith.constant 0 : index
      %c0_11 = arith.constant 0 : index
      %13 = vector.load %arg7[%c0_10, %c0_11] : memref<16x64xf32, #tpu.memory_space<vmem>>, vector<16x64xf32>
      %c0_12 = arith.constant 0 : index
      %c0_13 = arith.constant 0 : index
      %14 = vector.load %arg5[%c0_12, %c0_13] : memref<1x64xf32, #tpu.memory_space<vmem>>, vector<1x64xf32>
      %15 = vector.broadcast %14 : vector<1x64xf32> to vector<16x64xf32>
      %16 = arith.addf %13, %15 : vector<16x64xf32>
      %c0_14 = arith.constant 0 : index
      %c0_15 = arith.constant 0 : index
      %17 = vector.load %arg6[%c0_14, %c0_15] : memref<16x64xf32, #tpu.memory_space<vmem>>, vector<16x64xf32>
      tpu.vector_store %arg6[%c0_14, %c0_15], %16 {strides = array<i32>} : memref<16x64xf32, #tpu.memory_space<vmem>>, vector<16x64xf32>,
    } else {
    }
    return
  }
  func.func @transform_0(%arg0: i32, %arg1: i32, %arg2: i32) -> (i32, i32) {
    %c0_i32 = arith.constant 0 : i32
    return %arg0, %arg2 : i32, i32
  }
  func.func @transform_1(%arg0: i32, %arg1: i32, %arg2: i32) -> (i32, i32) {
    %c0_i32 = arith.constant 0 : i32
    return %arg2, %arg1 : i32, i32
  }
  func.func @transform_2(%arg0: i32, %arg1: i32, %arg2: i32) -> (i32, i32) {
    %c0_i32 = arith.constant 0 : i32
    %c0_i32_0 = arith.constant 0 : i32
    return %c0_i32, %arg1 : i32, i32
  }
  func.func @transform_3(%arg0: i32, %arg1: i32, %arg2: i32) -> (i32, i32) {
    %c0_i32 = arith.constant 0 : i32
    return %arg0, %arg1 : i32, i32
  }
}

module attributes {stable_mosaic.version = 11 : i64} {
  func.func @_mm_ln_kernel(%arg0: i32, %arg1: i32, %arg2: i32, %arg3: memref<16x1024xbf16, #tpu.memory_space<vmem>>, %arg4: memref<1024x32xbf16, #tpu.memory_space<vmem>>, %arg5: memref<1x32xf32, #tpu.memory_space<vmem>>, %arg6: memref<16x32xf32, #tpu.memory_space<vmem>>, %arg7: memref<1x32xf32, #tpu.memory_space<vmem>>, %arg8: memref<1x32xf32, #tpu.memory_space<vmem>>, %arg9: memref<16x32xf32, #tpu.memory_space<vmem>>, %arg10: memref<16x32xf32, #tpu.memory_space<vmem>>) attributes {dimension_semantics = [#tpu.dimension_semantics<parallel>, #tpu.dimension_semantics<parallel>, #tpu.dimension_semantics<arbitrary>], iteration_bounds = array<i64: 1, 1, 2>, scalar_prefetch = 0 : i64, scratch_operands = 1 : i64, tpu.core_type = #tpu.core_type<tc>, window_params = [{transform_indices = @transform_0, window_bounds = array<i64: 16, 1024>}, {transform_indices = @transform_1, window_bounds = array<i64: 1024, 32>}, {transform_indices = @transform_2, window_bounds = array<i64: 1, 32>}, {transform_indices = @transform_3, window_bounds = array<i64: 16, 32>}, {transform_indices = @transform_4, window_bounds = array<i64: 1, 32>}, {transform_indices = @transform_5, window_bounds = array<i64: 1, 32>}, {transform_indices = @transform_6, window_bounds = array<i64: 16, 32>}]} {
    %c0_i32 = arith.constant 0 : i32
    %0 = arith.cmpi eq, %arg2, %c0_i32 : i32
    %1 = arith.extui %0 : i1 to i32
    %c0_i32_0 = arith.constant 0 : i32
    %2 = arith.cmpi ne, %1, %c0_i32_0 : i32
    scf.if %2 {
      %cst_9 = arith.constant 0.000000e+00 : f32
      %12 = vector.broadcast %cst_9 : f32 to vector<16x32xf32>
      %c0_10 = arith.constant 0 : index
      %c0_11 = arith.constant 0 : index
      %13 = vector.load %arg10[%c0_10, %c0_11] : memref<16x32xf32, #tpu.memory_space<vmem>>, vector<16x32xf32>
      tpu.vector_store %arg10[%c0_10, %c0_11], %12 {strides = array<i32>} : memref<16x32xf32, #tpu.memory_space<vmem>>, vector<16x32xf32>,
    } else {
    }
    %c0 = arith.constant 0 : index
    %c0_1 = arith.constant 0 : index
    %3 = vector.load %arg10[%c0, %c0_1] : memref<16x32xf32, #tpu.memory_space<vmem>>, vector<16x32xf32>
    %c0_2 = arith.constant 0 : index
    %c0_3 = arith.constant 0 : index
    %4 = vector.load %arg3[%c0_2, %c0_3] : memref<16x1024xbf16, #tpu.memory_space<vmem>>, vector<16x1024xbf16>
    %c0_4 = arith.constant 0 : index
    %c0_5 = arith.constant 0 : index
    %5 = vector.load %arg4[%c0_4, %c0_5] : memref<1024x32xbf16, #tpu.memory_space<vmem>>, vector<1024x32xbf16>
    %cst = arith.constant dense<0.000000e+00> : vector<16x32xf32>
    %6 = tpu.matmul %4, %5, %cst {dimension_numbers = #tpu.dot_dimension_numbers<[1], [0], [0], [1], [0, 0, 1, 1], [], []>} : vector<16x1024xbf16>, vector<1024x32xbf16>, vector<16x32xf32> -> vector<16x32xf32>
    %7 = arith.addf %3, %6 : vector<16x32xf32>
    %c0_6 = arith.constant 0 : index
    %c0_7 = arith.constant 0 : index
    %8 = vector.load %arg10[%c0_6, %c0_7] : memref<16x32xf32, #tpu.memory_space<vmem>>, vector<16x32xf32>
    tpu.vector_store %arg10[%c0_6, %c0_7], %7 {strides = array<i32>} : memref<16x32xf32, #tpu.memory_space<vmem>>, vector<16x32xf32>,
    %c1_i32 = arith.constant 1 : i32
    %9 = arith.cmpi eq, %arg2, %c1_i32 : i32
    %10 = arith.extui %9 : i1 to i32
    %c0_i32_8 = arith.constant 0 : i32
    %11 = arith.cmpi ne, %10, %c0_i32_8 : i32
    scf.if %11 {
      %c0_9 = arith.constant 0 : index
      %c0_10 = arith.constant 0 : index
      %12 = vector.load %arg10[%c0_9, %c0_10] : memref<16x32xf32, #tpu.memory_space<vmem>>, vector<16x32xf32>
      %c0_11 = arith.constant 0 : index
      %c0_12 = arith.constant 0 : index
      %13 = vector.load %arg5[%c0_11, %c0_12] : memref<1x32xf32, #tpu.memory_space<vmem>>, vector<1x32xf32>
      %14 = vector.broadcast %13 : vector<1x32xf32> to vector<16x32xf32>
      %15 = arith.addf %12, %14 : vector<16x32xf32>
      %c0_13 = arith.constant 0 : index
      %c0_14 = arith.constant 0 : index
      %16 = vector.load %arg6[%c0_13, %c0_14] : memref<16x32xf32, #tpu.memory_space<vmem>>, vector<16x32xf32>
      %17 = arith.addf %15, %16 : vector<16x32xf32>
      %cst_15 = arith.constant dense<0.000000e+00> : vector<16xf32>
      %18 = vector.multi_reduction <add>, %17, %cst_15 [1] : vector<16x32xf32> to vector<16xf32>
      %19 = vector.shape_cast %18 : vector<16xf32> to vector<16x1xf32>
      %cst_16 = arith.constant 3.200000e+01 : f32
      %20 = vector.broadcast %cst_16 : f32 to vector<16x1xf32>
      %21 = arith.divf %19, %20 : vector<16x1xf32>
      %22 = vector.broadcast %21 : vector<16x1xf32> to vector<16x32xf32>
      %23 = arith.subf %17, %22 : vector<16x32xf32>
      %24 = vector.broadcast %21 : vector<16x1xf32> to vector<16x32xf32>
      %25 = arith.subf %17, %24 : vector<16x32xf32>
      %26 = arith.mulf %23, %25 : vector<16x32xf32>
      %cst_17 = arith.constant dense<0.000000e+00> : vector<16xf32>
      %27 = vector.multi_reduction <add>, %26, %cst_17 [1] : vector<16x32xf32> to vector<16xf32>
      %28 = vector.shape_cast %27 : vector<16xf32> to vector<16x1xf32>
      %cst_18 = arith.constant 3.200000e+01 : f32
      %29 = vector.broadcast %cst_18 : f32 to vector<16x1xf32>
      %30 = arith.divf %28, %29 : vector<16x1xf32>
      %31 = vector.broadcast %21 : vector<16x1xf32> to vector<16x32xf32>
      %32 = arith.subf %17, %31 : vector<16x32xf32>
      %cst_19 = arith.constant 9.99999974E-6 : f32
      %33 = vector.broadcast %cst_19 : f32 to vector<16x1xf32>
      %34 = arith.addf %30, %33 : vector<16x1xf32>
      %35 = math.rsqrt %34 : vector<16x1xf32>
      %36 = vector.broadcast %35 : vector<16x1xf32> to vector<16x32xf32>
      %37 = arith.mulf %32, %36 : vector<16x32xf32>
      %c0_20 = arith.constant 0 : index
      %c0_21 = arith.constant 0 : index
      %38 = vector.load %arg7[%c0_20, %c0_21] : memref<1x32xf32, #tpu.memory_space<vmem>>, vector<1x32xf32>
      %39 = vector.broadcast %38 : vector<1x32xf32> to vector<16x32xf32>
      %40 = arith.mulf %37, %39 : vector<16x32xf32>
      %c0_22 = arith.constant 0 : index
      %c0_23 = arith.constant 0 : index
      %41 = vector.load %arg8[%c0_22, %c0_23] : memref<1x32xf32, #tpu.memory_space<vmem>>, vector<1x32xf32>
      %42 = vector.broadcast %41 : vector<1x32xf32> to vector<16x32xf32>
      %43 = arith.addf %40, %42 : vector<16x32xf32>
      %c0_24 = arith.constant 0 : index
      %c0_25 = arith.constant 0 : index
      %44 = vector.load %arg9[%c0_24, %c0_25] : memref<16x32xf32, #tpu.memory_space<vmem>>, vector<16x32xf32>
      tpu.vector_store %arg9[%c0_24, %c0_25], %43 {strides = array<i32>} : memref<16x32xf32, #tpu.memory_space<vmem>>, vector<16x32xf32>,
    } else {
    }
    return
  }
  func.func @transform_0(%arg0: i32, %arg1: i32, %arg2: i32) -> (i32, i32) {
    %c0_i32 = arith.constant 0 : i32
    return %arg0, %arg2 : i32, i32
  }
  func.func @transform_1(%arg0: i32, %arg1: i32, %arg2: i32) -> (i32, i32) {
    %c0_i32 = arith.constant 0 : i32
    return %arg2, %arg1 : i32, i32
  }
  func.func @transform_2(%arg0: i32, %arg1: i32, %arg2: i32) -> (i32, i32) {
    %c0_i32 = arith.constant 0 : i32
    %c0_i32_0 = arith.constant 0 : i32
    return %c0_i32, %arg1 : i32, i32
  }
  func.func @transform_3(%arg0: i32, %arg1: i32, %arg2: i32) -> (i32, i32) {
    %c0_i32 = arith.constant 0 : i32
    return %arg0, %arg1 : i32, i32
  }
  func.func @transform_4(%arg0: i32, %arg1: i32, %arg2: i32) -> (i32, i32) {
    %c0_i32 = arith.constant 0 : i32
    %c0_i32_0 = arith.constant 0 : i32
    return %c0_i32, %arg1 : i32, i32
  }
  func.func @transform_5(%arg0: i32, %arg1: i32, %arg2: i32) -> (i32, i32) {
    %c0_i32 = arith.constant 0 : i32
    %c0_i32_0 = arith.constant 0 : i32
    return %c0_i32, %arg1 : i32, i32
  }
  func.func @transform_6(%arg0: i32, %arg1: i32, %arg2: i32) -> (i32, i32) {
    %c0_i32 = arith.constant 0 : i32
    return %arg0, %arg1 : i32, i32
  }
}

</mosaic_0001>

<llo_original>
// kernel: forward_train.21
$region0: #{forward_train.21}
  #allocation0 [shape = 'u32[]', space=smem, size = 0x4, offset = 0x4, fixed_abs, tag = 'smem constant byte address 0x4 - core index']
  #allocation1 [shape = 'u32[144,128]{1,0:T(1,128)}', space=vmem, size = 0x12000, scoped, tag = 'internal scratch']
  #allocation2 [shape = 'f32[16,32]{1,0:T(8,128)}', space=vmem, size = 0x2000, scoped, tag = 'scratch operand']
  %s0 = inlined_call_operand.vmem [shape: bf16[16,32], index: 0, kind: input, shape index: {}]
  %s1 = inlined_call_operand.vmem [shape: bf16[32,32], index: 1, kind: input, shape index: {}]
  %s2 = inlined_call_operand.vmem [shape: f32[1,32], index: 2, kind: input, shape index: {}]
  %s3 = inlined_call_operand.vmem [shape: f32[16,32], index: 3, kind: input, shape index: {}]
  %s4 = inlined_call_operand.vmem [shape: f32[1,32], index: 4, kind: input, shape index: {}]
  %s5 = inlined_call_operand.vmem [shape: f32[1,32], index: 5, kind: input, shape index: {}]
  %s6 = inlined_call_operand.vmem [shape: f32[16,32], index: 6, kind: output, shape index: {}]
  %s7 = sld [smem:[#allocation0]]
  $region42: #{forward_train.21} parent=0
    _
  %s9 = ssub.s32 1, %s7
  %s10 = scalar_select 0, %s9, %s7
  // Predicated region
  $region2: #{forward_train.21} parent=0 // pred_check
    _
  $region3: #{forward_train.21} parent=0 // pred_check_branch
    %12 = sbr.rel (0) target = $region5
  $region4: #{forward_train.21} parent=0 // pred_region
    _
  $region5: #{forward_train.21} parent=0 // pred_fallthru
    _
  // Predicated region
  $region6: #{forward_train.21} parent=0 // pred_check
    _
  $region7: #{forward_train.21} parent=0 // pred_check_branch
    %14 = sbr.rel (0) target = $region9
  $region8: #{forward_train.21} parent=0 // pred_region
    _
  $region9: #{forward_train.21} parent=0 // pred_fallthru
    _
  // Predicated region
  $region10: #{forward_train.21} parent=0 // pred_check
    _
  $region11: #{forward_train.21} parent=0 // pred_check_branch
    %16 = sbr.rel (0) target = $region13
  $region12: #{forward_train.21} parent=0 // pred_region
    _
  $region13: #{forward_train.21} parent=0 // pred_fallthru
    _
  // Predicated region
  $region14: #{forward_train.21} parent=0 // pred_check
    _
  $region15: #{forward_train.21} parent=0 // pred_check_branch
    %18 = sbr.rel (0) target = $region17
  $region16: #{forward_train.21} parent=0 // pred_region
    _
  $region17: #{forward_train.21} parent=0 // pred_fallthru
    _
  // Predicated region
  $region18: #{forward_train.21} parent=0 // pred_check
    _
  $region19: #{forward_train.21} parent=0 // pred_check_branch
    %20 = sbr.rel (0) target = $region21
  $region20: #{forward_train.21} parent=0 // pred_region
    _
  $region21: #{forward_train.21} parent=0 // pred_fallthru
    _
  // Predicated region
  $region22: #{forward_train.21} parent=0 // pred_check
    _
  $region23: #{forward_train.21} parent=0 // pred_check_branch
    %22 = sbr.rel (0) target = $region25
  $region24: #{forward_train.21} parent=0 // pred_region
    _
  $region25: #{forward_train.21} parent=0 // pred_fallthru
    _
  %p24 = scmp.eq.s32.totalorder 0, 0
  // Predicated region
  $region26: #{forward_train.21} parent=0 // pred_check
    %p25 = pneg %p24
  $region27: #{forward_train.21} parent=0 // pred_check_branch
    %27 = sbr.rel (%p25) target = $region29
  $region28: #{forward_train.21} parent=0 // pred_region
    %vm28 = vcmask 261120
    %29 = vst.msk [vmem:[#allocation2] sm:$0xff] %vm28, 0.0
    %30 = vst.msk [vmem:[#allocation2 + $0x8] sm:$0xff] %vm28, 0.0
  $region29: #{forward_train.21} parent=0 // pred_fallthru
    _
  %v31 = vld [vmem:[#allocation2] sm:$0xff]
  %v32 = vld [vmem:[#allocation2 + $0x8] sm:$0xff]
  %v33 = vld [vmem:[%s0] sm:$0xf]
  %v34 = vld [vmem:[%s0 + $0x4] sm:$0xf]
  %v35 = vld [vmem:[%s1] sm:$0xf]
  %v36 = vld [vmem:[%s1 + $0x4] sm:$0xf]
  %v37 = vld [vmem:[%s1 + $0x8] sm:$0xf]
  %v38 = vld [vmem:[%s1 + $0xc] sm:$0xf]
  %v41 = vunpack.c.l.b16 %v33
  %v42 = vunpack.c.l.b16 %v34
  %v43 = vpack.c.b16 %v42, %v41
  %v48 = vunpack.c.l.b16 %v35
  %v49 = vunpack.c.l.b16 %v36
  %v50 = vunpack.c.l.b16 %v37
  %v51 = vunpack.c.l.b16 %v38
  %v52 = vpack.c.b16 %v49, %v48
  %v53 = vpack.c.b16 %v51, %v50
  %vm56 = vcmask 261120
  %v58 = vsel %vm56, %v43, 0
  %60 = vmatprep.subr.bf16.mxu0 0
  %61 = vmatpush1.bf16.msra.mxu0 %v52
  %62 = vmatprep.subr.bf16.mxu0 0
  %63 = vmatpush1.bf16.msra.mxu0 %v53
  %64 = vmatprep.subr.bf16.mxu0 0
  %65 = vmatpush1.bf16.msra.mxu0 0
  %66 = vmatprep.subr.bf16.mxu0 0
  %67 = vmatpush1.bf16.msra.mxu0 0
  %68 = vmatprep.subr.bf16.mxu0 0
  %69 = vmatpush1.bf16.msra.mxu0 0
  %70 = vmatprep.subr.bf16.mxu0 0
  %71 = vmatpush1.bf16.msra.mxu0 0
  %72 = vmatprep.subr.bf16.mxu0 0
  %73 = vmatpush1.bf16.msra.mxu0 0
  %74 = vmatprep.subr.bf16.mxu0 0
  %75 = vmatpush1.bf16.msra.mxu0 0
  %76 = vmatprep.subr.bf16.mxu0 0
  %77 = vmatpush1.bf16.msra.mxu0 0
  %78 = vmatprep.subr.bf16.mxu0 0
  %79 = vmatpush1.bf16.msra.mxu0 0
  %80 = vmatprep.subr.bf16.mxu0 0
  %81 = vmatpush1.bf16.msra.mxu0 0
  %82 = vmatprep.subr.bf16.mxu0 0
  %83 = vmatpush1.bf16.msra.mxu0 0
  %84 = vmatprep.subr.bf16.mxu0 0
  %85 = vmatpush1.bf16.msra.mxu0 0
  %86 = vmatprep.subr.bf16.mxu0 0
  %87 = vmatpush1.bf16.msra.mxu0 0
  %88 = vmatprep.subr.bf16.mxu0 0
  %89 = vmatpush1.bf16.msra.mxu0 0
  %90 = vmatprep.subr.bf16.mxu0 0
  %91 = vmatpush1.bf16.msra.mxu0 0
  %92 = vmatprep.mubr.bf16.mxu0 0
  %93 = vmatmul.mubr.bf16.gmra.mrb[0].mxu0 %v58
  %v94 = vpop.f32.mrb[0].mxu0
  %v95 = vadd.f32 0.0, %v94
  %v96 = vpop.f32.mrb[0].mxu0
  %v97 = vpop.f32.mrb[0].mxu0
  %v98 = vadd.f32 0.0, %v97
  %v99 = vpop.f32.mrb[0].mxu0
  %100 = vdwg.mxu0
  %v101 = vadd.f32 %v31, %v95
  %v102 = vadd.f32 %v32, %v98
  %103 = vst.msk [vmem:[#allocation2] sm:$0xff] %vm56, %v101
  %104 = vst.msk [vmem:[#allocation2 + $0x8] sm:$0xff] %vm56, %v102
  // Predicated region
  $region30: #{forward_train.21} parent=0 // pred_check
    %p105 = pneg %p24
  $region31: #{forward_train.21} parent=0 // pred_check_branch
    %107 = sbr.rel (%p105) target = $region33
  $region32: #{forward_train.21} parent=0 // pred_region
    %v108 = vld [vmem:[#allocation2] sm:$0xff]
    %v109 = vld [vmem:[#allocation2 + $0x8] sm:$0xff]
    %v110 = vld [vmem:[%s2] sm:$0x1]
    %v112 = vlaneseq
    %v113 = vshrl.u32 %v112, 7
    %v114 = vsub.s32 0, %v113
    %v115 = vrot.slane %v110, %v114
    %v117 = vadd.f32 %v108, %v115
    %v118 = vadd.f32 %v109, %v115
    %v119 = vld [vmem:[%s3] sm:$0xff]
    %v120 = vld [vmem:[%s3 + $0x8] sm:$0xff]
    %v121 = vadd.f32 %v117, %v119
    %v122 = vadd.f32 %v118, %v120
    %v123 = vsel %vm56, %v121, 0.0
    %124 = vadd.xlane.f32.xlu0 %v123
    %v125 = vpop.xlane.xlu0 %124
    %v126 = vsel %vm56, %v122, 0.0
    %127 = vadd.xlane.f32.xlu0 %v126
    %v128 = vpop.xlane.xlu0 %127
    %v129 = vrcp.pop 32.0
    %v130 = vmul.f32 %v125, %v129
    %v131 = vmul.f32 %v128, %v129
    %v132 = vsub.f32 %v121, %v130
    %v133 = vsub.f32 %v122, %v131
    %v134 = vmul.f32 %v132, %v132
    %v135 = vmul.f32 %v133, %v133
    %v136 = vsel %vm56, %v134, 0.0
    %137 = vadd.xlane.f32.xlu0 %v136
    %v138 = vpop.xlane.xlu0 %137
    %v139 = vsel %vm56, %v135, 0.0
    %140 = vadd.xlane.f32.xlu0 %v139
    %v141 = vpop.xlane.xlu0 %140
    %v142 = vmul.f32 %v138, %v129
    %v143 = vmul.f32 %v141, %v129
    %v144 = vadd.f32 %v142, 1e-05
    %v145 = vadd.f32 %v143, 1e-05
    %v146 = vrsqrt.pop %v144
    %v147 = vrsqrt.pop %v145
    %v148 = vmul.f32 %v132, %v146
    %v149 = vmul.f32 %v133, %v147
    %v150 = vld [vmem:[%s4] sm:$0x1]
    %v152 = vlaneseq
    %v153 = vshrl.u32 %v152, 7
    %v154 = vsub.s32 0, %v153
    %v155 = vrot.slane %v150, %v154
    %v157 = vmul.f32 %v148, %v155
    %v158 = vmul.f32 %v149, %v155
    %v159 = vld [vmem:[%s5] sm:$0x1]
    %v161 = vlaneseq
    %v162 = vshrl.u32 %v161, 7
    %v163 = vsub.s32 0, %v162
    %v164 = vrot.slane %v159, %v163
    %v166 = vadd.f32 %v157, %v164
    %v167 = vadd.f32 %v158, %v164
    %168 = vst.msk [vmem:[%s6] sm:$0xff] %vm56, %v166
    %169 = vst.msk [vmem:[%s6 + $0x8] sm:$0xff] %vm56, %v167
  $region33: #{forward_train.21} parent=0 // pred_fallthru
    _
  // Predicated region
  $region34: #{forward_train.21} parent=0 // pred_check
    _
  $region35: #{forward_train.21} parent=0 // pred_check_branch
    %171 = sbr.rel (0) target = $region37
  $region36: #{forward_train.21} parent=0 // pred_region
    _
  $region37: #{forward_train.21} parent=0 // pred_fallthru
    _
  // Predicated region
  $region38: #{forward_train.21} parent=0 // pred_check
    _
  $region39: #{forward_train.21} parent=0 // pred_check_branch
    %173 = sbr.rel (0) target = $region41
  $region40: #{forward_train.21} parent=0 // pred_region
    _
  $region41: #{forward_train.21} parent=0 // pred_fallthru
    _

// kernel: forward_train.19
$region0: #{forward_train.19}
  #allocation0 [shape = 'u32[]', space=smem, size = 0x4, offset = 0x4, fixed_abs, tag = 'smem constant byte address 0x4 - core index']
  #allocation1 [shape = 'u32[144,128]{1,0:T(1,128)}', space=vmem, size = 0x12000, scoped, tag = 'internal scratch']
  #allocation2 [shape = 'f32[16,32]{1,0:T(8,128)}', space=vmem, size = 0x2000, scoped, tag = 'scratch operand']
  %s0 = inlined_call_operand.vmem [shape: f32[16,32], index: 0, kind: input, shape index: {}]
  %s1 = inlined_call_operand.vmem [shape: bf16[3,32,32], index: 1, kind: input, shape index: {}]
  %s2 = inlined_call_operand.vmem [shape: f32[3,1,32], index: 2, kind: input, shape index: {}]
  %s3 = inlined_call_operand.vmem [shape: bf16[3,16,32], index: 3, kind: output, shape index: {}]
  %s4 = sld [smem:[#allocation0]]
  $region53: #{forward_train.19} parent=0
    _
  %s6 = ssub.s32 1, %s4
  %s7 = scalar_select 0, %s6, %s4
  loop: start=0, step=1, limit=5
  $region2: #{forward_train.19} parent=0 // loop_pre_header
    _
  $region3: #{forward_train.19} parent=0 // loop_header
    %s9 = sphi 0, %s13
    %p10 = scmp.ge.s32.totalorder %s9, 5
    %s16 = sphi 0, %s35
    %s17 = sphi 0, %s31
    %s18 = sphi 0, %s27
    %s19 = sphi 0, %s16
    %s20 = sphi 0, %s17
    %s21 = sphi 0, %s18
    %s22 = sphi 0, %s19
    %s23 = sphi 0, %s20
    %s24 = sphi 0, %s21
    %s40 = sphi 0, %s42
    %s43 = sphi 0, %s40
    %s44 = sphi 0, %s43
    %s60 = sphi 0, %s44
    %s68 = sphi 0, %s70
    %s71 = sphi 0, %s68
    %s72 = sphi 0, %s71
    %s88 = sphi 0, %s72
    %s94 = sphi 0, %s96
    %s97 = sphi 0, %s94
    %s98 = sphi 0, %s97
    %s114 = sphi 0, %s98
    %s122 = sphi 0, %s124
    %s125 = sphi 0, %s122
    %s126 = sphi 0, %s125
    %s142 = sphi 0, %s126
  $region4: #{forward_train.19} parent=0 // loop_header_branch
    %12 = sbr.rel (%p10) target = $region8
  $region5: #{forward_train.19} parent=0 // loop_body
    %s14 = ssub.s32 %s9, 1
    %s15 = ssub.s32 %s9, 2
    %s25 = sadd.s32 1, %s18
    %p26 = scmp.ge.s32.totalorder %s25, 1
    %s27 = scalar_select %p26, 0, %s25
    %s28 = sadd.s32 1, %s17
    %s29 = scalar_select %p26, %s28, %s17
    %p30 = scmp.ge.s32.totalorder %s29, 1
    %s31 = scalar_select %p30, 0, %s29
    %s32 = sadd.s32 1, %s16
    %s33 = scalar_select %p30, %s32, %s16
    %p34 = scmp.ge.s32.totalorder %s33, 3
    %s35 = scalar_select %p34, 0, %s33
    %s36 = ssub.s32 %s17, %s31
    %s37 = ssub.s32 %s18, %s27
    %s38 = sor.u32 %s36, %s37
    %p39 = scmp.eq.s32.totalorder %s38, 0
    %s41 = sadd.s32 %s40, 1
    %s42 = scalar_select %p39, %s40, %s41
    %p45 = pneg %p39
    %p46 = scmp.eq.s32.totalorder %s9, 2
    %p47 = por %p45, %p46
    %p48 = scmp.ne.s32.totalorder %s40, %s43
    %p49 = scmp.eq.s32.totalorder %s9, 0
    %p50 = por %p48, %p49
    %p51 = scmp.ne.s32.totalorder %s40, %s43
    %p52 = scmp.eq.s32.totalorder %s14, 2
    %p53 = por %p51, %p52
    %p54 = scmp.ne.s32.totalorder %s43, %s44
    %p55 = scmp.eq.s32.totalorder %s14, 0
    %p56 = por %p54, %p55
    %p57 = scmp.ne.s32.totalorder %s43, %s44
    %p58 = scmp.eq.s32.totalorder %s15, 2
    %p59 = por %p57, %p58
    %p61 = scmp.ne.s32.totalorder %s44, %s60
    %p62 = scmp.eq.s32.totalorder %s15, 0
    %p63 = por %p61, %p62
    %s64 = ssub.s32 %s16, %s35
    %s65 = ssub.s32 %s18, %s27
    %s66 = sor.u32 %s64, %s65
    %p67 = scmp.eq.s32.totalorder %s66, 0
    %s69 = sadd.s32 %s68, 1
    %s70 = scalar_select %p67, %s68, %s69
    %p73 = pneg %p67
    %p74 = scmp.eq.s32.totalorder %s9, 2
    %p75 = por %p73, %p74
    %p76 = scmp.ne.s32.totalorder %s68, %s71
    %p77 = scmp.eq.s32.totalorder %s9, 0
    %p78 = por %p76, %p77
    %p79 = scmp.ne.s32.totalorder %s68, %s71
    %p80 = scmp.eq.s32.totalorder %s14, 2
    %p81 = por %p79, %p80
    %p82 = scmp.ne.s32.totalorder %s71, %s72
    %p83 = scmp.eq.s32.totalorder %s14, 0
    %p84 = por %p82, %p83
    %p85 = scmp.ne.s32.totalorder %s71, %s72
    %p86 = scmp.eq.s32.totalorder %s15, 2
    %p87 = por %p85, %p86
    %p89 = scmp.ne.s32.totalorder %s72, %s88
    %p90 = scmp.eq.s32.totalorder %s15, 0
    %p91 = por %p89, %p90
    %s92 = ssub.s32 %s16, %s35
    %p93 = scmp.eq.s32.totalorder %s92, 0
    %s95 = sadd.s32 %s94, 1
    %s96 = scalar_select %p93, %s94, %s95
    %p99 = pneg %p93
    %p100 = scmp.eq.s32.totalorder %s9, 2
    %p101 = por %p99, %p100
    %p102 = scmp.ne.s32.totalorder %s94, %s97
    %p103 = scmp.eq.s32.totalorder %s9, 0
    %p104 = por %p102, %p103
    %p105 = scmp.ne.s32.totalorder %s94, %s97
    %p106 = scmp.eq.s32.totalorder %s14, 2
    %p107 = por %p105, %p106
    %p108 = scmp.ne.s32.totalorder %s97, %s98
    %p109 = scmp.eq.s32.totalorder %s14, 0
    %p110 = por %p108, %p109
    %p111 = scmp.ne.s32.totalorder %s97, %s98
    %p112 = scmp.eq.s32.totalorder %s15, 2
    %p113 = por %p111, %p112
    %p115 = scmp.ne.s32.totalorder %s98, %s114
    %p116 = scmp.eq.s32.totalorder %s15, 0
    %p117 = por %p115, %p116
    %s118 = ssub.s32 %s16, %s35
    %s119 = ssub.s32 %s17, %s31
    %s120 = sor.u32 %s118, %s119
    %p121 = scmp.eq.s32.totalorder %s120, 0
    %s123 = sadd.s32 %s122, 1
    %s124 = scalar_select %p121, %s122, %s123
    %p127 = pneg %p121
    %p128 = scmp.eq.s32.totalorder %s9, 2
    %p129 = por %p127, %p128
    %p130 = scmp.ne.s32.totalorder %s122, %s125
    %p131 = scmp.eq.s32.totalorder %s9, 0
    %p132 = por %p130, %p131
    %p133 = scmp.ne.s32.totalorder %s122, %s125
    %p134 = scmp.eq.s32.totalorder %s14, 2
    %p135 = por %p133, %p134
    %p136 = scmp.ne.s32.totalorder %s125, %s126
    %p137 = scmp.eq.s32.totalorder %s14, 0
    %p138 = por %p136, %p137
    %p139 = scmp.ne.s32.totalorder %s125, %s126
    %p140 = scmp.eq.s32.totalorder %s15, 2
    %p141 = por %p139, %p140
    %p143 = scmp.ne.s32.totalorder %s126, %s142
    %p144 = scmp.eq.s32.totalorder %s15, 0
    %p145 = por %p143, %p144
    %p146 = scmp.le.s32.totalorder 1, %s9
    %p147 = scmp.lt.s32.totalorder %s9, 4
    %p148 = pnand %p146, %p147
    %p149 = pneg %p148
    // Predicated region
    $region9: #{forward_train.19} parent=5 // pred_check
      _
    $region10: #{forward_train.19} parent=5 // pred_check_branch
      %151 = sbr.rel (%p148) target = $region12
    $region11: #{forward_train.19} parent=5 // pred_region
      %s152 = ssub.s32 %s9, 1
      // Predicated region
      $region13: #{forward_train.19} parent=11 // pred_check
        %p153 = pneg %p56
      $region14: #{forward_train.19} parent=11 // pred_check_branch
        %155 = sbr.rel (%p153) target = $region16
      $region15: #{forward_train.19} parent=11 // pred_region
        %s156 = smul.u32 2, %s20
        %p157 = scmp.lt.s32.totalorder %s156, 1
        %s158 = scalar_select %p157, %s156, 1
        %p159 = scmp.lt.s32.totalorder %s21, 0
        %s160 = scalar_select %p159, %s21, 0
        %s161 = sadd.s32 %s160, %s158
        %s162 = smul.addr %s161, 8
        %s163 = scalar_lea.vmem %s0, %s162
        %s164 = smul.u32 2, %s20
      $region16: #{forward_train.19} parent=11 // pred_fallthru
        _
    $region12: #{forward_train.19} parent=5 // pred_fallthru
      _
    %p165 = scmp.lt.s32.totalorder %s9, 3
    // Predicated region
    $region17: #{forward_train.19} parent=5 // pred_check
      %p166 = pneg %p165
    $region18: #{forward_train.19} parent=5 // pred_check_branch
      %168 = sbr.rel (%p166) target = $region20
    $region19: #{forward_train.19} parent=5 // pred_region
      // Predicated region
      $region21: #{forward_train.19} parent=19 // pred_check
        %p169 = pneg %p78
      $region22: #{forward_train.19} parent=19 // pred_check_branch
        %171 = sbr.rel (%p169) target = $region24
      $region23: #{forward_train.19} parent=19 // pred_region
        %s172 = smul.u32 4, %s18
        %p173 = scmp.lt.s32.totalorder %s16, 2
        %s174 = scalar_select %p173, %s16, 2
        %p175 = scmp.lt.s32.totalorder %s172, 3
        %s176 = scalar_select %p175, %s172, 3
        %s177 = smul.addr %s174, 4
        %s178 = sadd.s32 %s176, %s177
        %s179 = smul.addr %s178, 4
        %s180 = scalar_lea.vmem %s1, %s179
        %s181 = smul.u32 4, %s18
      $region24: #{forward_train.19} parent=19 // pred_fallthru
        _
      // Predicated region
      $region25: #{forward_train.19} parent=19 // pred_check
        %p182 = pneg %p104
      $region26: #{forward_train.19} parent=19 // pred_check_branch
        %184 = sbr.rel (%p182) target = $region28
      $region27: #{forward_train.19} parent=19 // pred_region
        %p185 = scmp.lt.s32.totalorder %s16, 2
        %s186 = scalar_select %p185, %s16, 2
        %s187 = scalar_lea.vmem %s2, %s186
      $region28: #{forward_train.19} parent=19 // pred_fallthru
        _
    $region20: #{forward_train.19} parent=5 // pred_fallthru
      _
    %p188 = scmp.le.s32.totalorder 1, %s9
    %p189 = scmp.lt.s32.totalorder %s9, 4
    %p190 = pnand %p188, %p189
    %p191 = pneg %p190
    // Predicated region
    $region29: #{forward_train.19} parent=5 // pred_check
      _
    $region30: #{forward_train.19} parent=5 // pred_check_branch
      %193 = sbr.rel (%p190) target = $region32
    $region31: #{forward_train.19} parent=5 // pred_region
      %s194 = ssub.s32 %s9, 1
      %s195 = smul.u32 2, %s20
      %p196 = scmp.lt.s32.totalorder %s195, 1
      %s197 = scalar_select %p196, %s195, 1
      %p198 = scmp.lt.s32.totalorder %s21, 0
      %s199 = scalar_select %p198, %s21, 0
      %s200 = sadd.s32 %s199, %s197
      %s201 = smul.addr %s200, 8
      %s202 = scalar_lea.vmem %s0, %s201
      %p203 = pneg %p56
      %p204 = pneg %p53
      %s205 = smul.u32 4, %s21
      %p206 = scmp.lt.s32.totalorder %s19, 2
      %s207 = scalar_select %p206, %s19, 2
      %p208 = scmp.lt.s32.totalorder %s205, 3
      %s209 = scalar_select %p208, %s205, 3
      %s210 = smul.addr %s207, 4
      %s211 = sadd.s32 %s209, %s210
      %s212 = smul.addr %s211, 4
      %s213 = scalar_lea.vmem %s1, %s212
      %p214 = pneg %p84
      %p215 = pneg %p81
      %p216 = scmp.lt.s32.totalorder %s19, 2
      %s217 = scalar_select %p216, %s19, 2
      %s218 = scalar_lea.vmem %s2, %s217
      %p219 = pneg %p110
      %p220 = pneg %p107
      %p221 = pneg %p138
      %p222 = pneg %p135
      %s223 = smul.u32 2, %s20
      %p224 = scmp.lt.s32.totalorder %s19, 2
      %s225 = scalar_select %p224, %s19, 2
      %p226 = scmp.lt.s32.totalorder %s223, 1
      %s227 = scalar_select %p226, %s223, 1
      %s228 = smul.addr %s225, 2
      %s229 = sadd.s32 %s227, %s228
      %s230 = smul.addr %s229, 4
      %s231 = scalar_lea.vmem %s3, %s230
      %s232 = smul.u32 2, %s20
      %p233 = scmp.lt.s32.totalorder %s232, 1
      %s234 = scalar_select %p233, %s232, 1
      %p235 = scmp.lt.s32.totalorder %s21, 0
      %s236 = scalar_select %p235, %s21, 0
      %s237 = sadd.s32 %s236, %s234
      %s238 = smul.addr %s237, 8
      %s239 = scalar_lea.vmem %s0, %s238
      %s240 = smul.u32 2, %s20
      %s241 = smul.u32 4, %s21
      %p242 = scmp.lt.s32.totalorder %s19, 2
      %s243 = scalar_select %p242, %s19, 2
      %p244 = scmp.lt.s32.totalorder %s241, 3
      %s245 = scalar_select %p244, %s241, 3
      %s246 = smul.addr %s243, 4
      %s247 = sadd.s32 %s245, %s246
      %s248 = smul.addr %s247, 4
      %s249 = scalar_lea.vmem %s1, %s248
      %s250 = smul.u32 4, %s21
      %p251 = scmp.lt.s32.totalorder %s19, 2
      %s252 = scalar_select %p251, %s19, 2
      %s253 = scalar_lea.vmem %s2, %s252
      %s254 = smul.u32 2, %s20
      %p255 = scmp.lt.s32.totalorder %s19, 2
      %s256 = scalar_select %p255, %s19, 2
      %p257 = scmp.lt.s32.totalorder %s254, 1
      %s258 = scalar_select %p257, %s254, 1
      %s259 = smul.addr %s256, 2
      %s260 = sadd.s32 %s258, %s259
      %s261 = smul.addr %s260, 4
      %s262 = scalar_lea.vmem %s3, %s261
      %s263 = smul.u32 2, %s20
      %p265 = scmp.eq.s32.totalorder %s21, 0
      // Predicated region
      $region33: #{forward_train.19} parent=31 // pred_check
        %p266 = pneg %p265
      $region34: #{forward_train.19} parent=31 // pred_check_branch
        %268 = sbr.rel (%p266) target = $region36
      $region35: #{forward_train.19} parent=31 // pred_region
        %vm269 = vcmask 261120
        %270 = vst.msk [vmem:[#allocation2] sm:$0xff] %vm269, 0.0
        %271 = vst.msk [vmem:[#allocation2 + $0x8] sm:$0xff] %vm269, 0.0
      $region36: #{forward_train.19} parent=31 // pred_fallthru
        _
      %v272 = vld [vmem:[#allocation2] sm:$0xff]
      %v273 = vld [vmem:[#allocation2 + $0x8] sm:$0xff]
      %v274 = vld [vmem:[%s239] sm:$0xff]
      %v275 = vld [vmem:[%s239 + $0x8] sm:$0xff]
      %v276 = vpack.c.bf16 %v275, %v274
      %v277 = vld [vmem:[%s249] sm:$0xf]
      %v278 = vld [vmem:[%s249 + $0x4] sm:$0xf]
      %v279 = vld [vmem:[%s249 + $0x8] sm:$0xf]
      %v280 = vld [vmem:[%s249 + $0xc] sm:$0xf]
      %v285 = vunpack.c.l.b16 %v277
      %v286 = vunpack.c.l.b16 %v278
      %v287 = vunpack.c.l.b16 %v279
      %v288 = vunpack.c.l.b16 %v280
      %v289 = vpack.c.b16 %v286, %v285
      %v290 = vpack.c.b16 %v288, %v287
      %vm293 = vcmask 261120
      %v295 = vsel %vm293, %v276, 0
      %297 = vmatprep.subr.bf16.mxu0 0
      %298 = vmatpush1.bf16.msra.mxu0 %v289
      %299 = vmatprep.subr.bf16.mxu0 0
      %300 = vmatpush1.bf16.msra.mxu0 %v290
      %301 = vmatprep.subr.bf16.mxu0 0
      %302 = vmatpush1.bf16.msra.mxu0 0
      %303 = vmatprep.subr.bf16.mxu0 0
      %304 = vmatpush1.bf16.msra.mxu0 0
      %305 = vmatprep.subr.bf16.mxu0 0
      %306 = vmatpush1.bf16.msra.mxu0 0
      %307 = vmatprep.subr.bf16.mxu0 0
      %308 = vmatpush1.bf16.msra.mxu0 0
      %309 = vmatprep.subr.bf16.mxu0 0
      %310 = vmatpush1.bf16.msra.mxu0 0
      %311 = vmatprep.subr.bf16.mxu0 0
      %312 = vmatpush1.bf16.msra.mxu0 0
      %313 = vmatprep.subr.bf16.mxu0 0
      %314 = vmatpush1.bf16.msra.mxu0 0
      %315 = vmatprep.subr.bf16.mxu0 0
      %316 = vmatpush1.bf16.msra.mxu0 0
      %317 = vmatprep.subr.bf16.mxu0 0
      %318 = vmatpush1.bf16.msra.mxu0 0
      %319 = vmatprep.subr.bf16.mxu0 0
      %320 = vmatpush1.bf16.msra.mxu0 0
      %321 = vmatprep.subr.bf16.mxu0 0
      %322 = vmatpush1.bf16.msra.mxu0 0
      %323 = vmatprep.subr.bf16.mxu0 0
      %324 = vmatpush1.bf16.msra.mxu0 0
      %325 = vmatprep.subr.bf16.mxu0 0
      %326 = vmatpush1.bf16.msra.mxu0 0
      %327 = vmatprep.subr.bf16.mxu0 0
      %328 = vmatpush1.bf16.msra.mxu0 0
      %329 = vmatprep.mubr.bf16.mxu0 0
      %330 = vmatmul.mubr.bf16.gmra.mrb[0].mxu0 %v295
      %v331 = vpop.f32.mrb[0].mxu0
      %v332 = vadd.f32 0.0, %v331
      %v333 = vpop.f32.mrb[0].mxu0
      %v334 = vpop.f32.mrb[0].mxu0
      %v335 = vadd.f32 0.0, %v334
      %v336 = vpop.f32.mrb[0].mxu0
      %337 = vdwg.mxu0
      %v338 = vadd.f32 %v272, %v332
      %v339 = vadd.f32 %v273, %v335
      %340 = vst.msk [vmem:[#allocation2] sm:$0xff] %vm293, %v338
      %341 = vst.msk [vmem:[#allocation2 + $0x8] sm:$0xff] %vm293, %v339
      // Predicated region
      $region37: #{forward_train.19} parent=31 // pred_check
        %p342 = pneg %p265
      $region38: #{forward_train.19} parent=31 // pred_check_branch
        %344 = sbr.rel (%p342) target = $region40
      $region39: #{forward_train.19} parent=31 // pred_region
        %v345 = vld [vmem:[#allocation2] sm:$0xff]
        %v346 = vld [vmem:[#allocation2 + $0x8] sm:$0xff]
        %v347 = vld [vmem:[%s253] sm:$0x1]
        %v349 = vlaneseq
        %v350 = vshrl.u32 %v349, 7
        %v351 = vsub.s32 0, %v350
        %v352 = vrot.slane %v347, %v351
        %v354 = vadd.f32 %v345, %v352
        %v355 = vadd.f32 %v346, %v352
        %v356 = vpack.c.bf16 %v355, %v354
        %v358 = vunpack.c.l.b16 %v356
        %v359 = vunpack.c.h.b16 %v356
        %v360 = vpack.c.b16 %v358, %v358
        %v361 = vpack.c.b16 %v359, %v359
        %vm364 = vcmask 257024
        %365 = vst.msk [vmem:[%s262] sm:$0xf] %vm364, %v360
        %366 = vst.msk [vmem:[%s262 + $0x4] sm:$0xf] %vm364, %v361
      $region40: #{forward_train.19} parent=31 // pred_fallthru
        _
      %s367 = smul.u32 2, %s20
      %p368 = scmp.lt.s32.totalorder %s19, 2
      %s369 = scalar_select %p368, %s19, 2
      %p370 = scmp.lt.s32.totalorder %s367, 1
      %s371 = scalar_select %p370, %s367, 1
      %s372 = smul.addr %s369, 2
      %s373 = sadd.s32 %s371, %s372
      %s374 = smul.addr %s373, 4
      %s375 = scalar_lea.vmem %s3, %s374
      // Predicated region
      $region41: #{forward_train.19} parent=31 // pred_check
        %p376 = pneg %p135
      $region42: #{forward_train.19} parent=31 // pred_check_branch
        %378 = sbr.rel (%p376) target = $region44
      $region43: #{forward_train.19} parent=31 // pred_region
        %s379 = smul.u32 2, %s20
      $region44: #{forward_train.19} parent=31 // pred_fallthru
        _
    $region32: #{forward_train.19} parent=5 // pred_fallthru
      _
    %p380 = scmp.le.s32.totalorder 2, %s9
    // Predicated region
    $region45: #{forward_train.19} parent=5 // pred_check
      %p381 = pneg %p380
    $region46: #{forward_train.19} parent=5 // pred_check_branch
      %383 = sbr.rel (%p381) target = $region48
    $region47: #{forward_train.19} parent=5 // pred_region
      %s384 = ssub.s32 %s9, 2
      // Predicated region
      $region49: #{forward_train.19} parent=47 // pred_check
        %p385 = pneg %p141
      $region50: #{forward_train.19} parent=47 // pred_check_branch
        %387 = sbr.rel (%p385) target = $region52
      $region51: #{forward_train.19} parent=47 // pred_region
        %s388 = smul.u32 2, %s23
        %p389 = scmp.lt.s32.totalorder %s22, 2
        %s390 = scalar_select %p389, %s22, 2
        %p391 = scmp.lt.s32.totalorder %s388, 1
        %s392 = scalar_select %p391, %s388, 1
        %s393 = smul.addr %s390, 2
        %s394 = sadd.s32 %s392, %s393
        %s395 = smul.addr %s394, 4
        %s396 = scalar_lea.vmem %s3, %s395
      $region52: #{forward_train.19} parent=47 // pred_fallthru
        _
    $region48: #{forward_train.19} parent=5 // pred_fallthru
      _
  $region6: #{forward_train.19} parent=0 // loop_footer
    %s13 = sadd.s32 1, %s9
  $region7: #{forward_train.19} parent=0 // loop_footer_branch
    %8 = sbr.rel target = $region3
  $region8: #{forward_train.19} parent=0 // loop_exit
    _

// kernel: forward_train.22
$region0: #{forward_train.22}
  #allocation0 [shape = 'u32[]', space=smem, size = 0x4, offset = 0x4, fixed_abs, tag = 'smem constant byte address 0x4 - core index']
  #allocation1 [shape = 'u32[144,128]{1,0:T(1,128)}', space=vmem, size = 0x12000, scoped, tag = 'internal scratch']
  #allocation2 [shape = 'f32[16,32]{1,0:T(8,128)}', space=vmem, size = 0x2000, scoped, tag = 'scratch operand']
  %s0 = inlined_call_operand.vmem [shape: f32[16,32], index: 0, kind: input, shape index: {}]
  %s1 = inlined_call_operand.vmem [shape: bf16[32,32], index: 1, kind: input, shape index: {}]
  %s2 = inlined_call_operand.vmem [shape: f32[1,32], index: 2, kind: input, shape index: {}]
  %s3 = inlined_call_operand.vmem [shape: bf16[16,32], index: 3, kind: output, shape index: {}]
  %s4 = sld [smem:[#allocation0]]
  $region30: #{forward_train.22} parent=0
    _
  %s6 = ssub.s32 1, %s4
  %s7 = scalar_select 0, %s6, %s4
  // Predicated region
  $region2: #{forward_train.22} parent=0 // pred_check
    _
  $region3: #{forward_train.22} parent=0 // pred_check_branch
    %9 = sbr.rel (0) target = $region5
  $region4: #{forward_train.22} parent=0 // pred_region
    _
  $region5: #{forward_train.22} parent=0 // pred_fallthru
    _
  // Predicated region
  $region6: #{forward_train.22} parent=0 // pred_check
    _
  $region7: #{forward_train.22} parent=0 // pred_check_branch
    %11 = sbr.rel (0) target = $region9
  $region8: #{forward_train.22} parent=0 // pred_region
    _
  $region9: #{forward_train.22} parent=0 // pred_fallthru
    _
  // Predicated region
  $region10: #{forward_train.22} parent=0 // pred_check
    _
  $region11: #{forward_train.22} parent=0 // pred_check_branch
    %13 = sbr.rel (0) target = $region13
  $region12: #{forward_train.22} parent=0 // pred_region
    _
  $region13: #{forward_train.22} parent=0 // pred_fallthru
    _
  %p15 = scmp.eq.s32.totalorder 0, 0
  // Predicated region
  $region14: #{forward_train.22} parent=0 // pred_check
    %p16 = pneg %p15
  $region15: #{forward_train.22} parent=0 // pred_check_branch
    %18 = sbr.rel (%p16) target = $region17
  $region16: #{forward_train.22} parent=0 // pred_region
    %vm19 = vcmask 261120
    %20 = vst.msk [vmem:[#allocation2] sm:$0xff] %vm19, 0.0
    %21 = vst.msk [vmem:[#allocation2 + $0x8] sm:$0xff] %vm19, 0.0
  $region17: #{forward_train.22} parent=0 // pred_fallthru
    _
  %v22 = vld [vmem:[#allocation2] sm:$0xff]
  %v23 = vld [vmem:[#allocation2 + $0x8] sm:$0xff]
  %v24 = vld [vmem:[%s0] sm:$0xff]
  %v25 = vld [vmem:[%s0 + $0x8] sm:$0xff]
  %v26 = vpack.c.bf16 %v25, %v24
  %v27 = vld [vmem:[%s1] sm:$0xf]
  %v28 = vld [vmem:[%s1 + $0x4] sm:$0xf]
  %v29 = vld [vmem:[%s1 + $0x8] sm:$0xf]
  %v30 = vld [vmem:[%s1 + $0xc] sm:$0xf]
  %v35 = vunpack.c.l.b16 %v27
  %v36 = vunpack.c.l.b16 %v28
  %v37 = vunpack.c.l.b16 %v29
  %v38 = vunpack.c.l.b16 %v30
  %v39 = vpack.c.b16 %v36, %v35
  %v40 = vpack.c.b16 %v38, %v37
  %vm43 = vcmask 261120
  %v45 = vsel %vm43, %v26, 0
  %47 = vmatprep.subr.bf16.mxu0 0
  %48 = vmatpush1.bf16.msra.mxu0 %v39
  %49 = vmatprep.subr.bf16.mxu0 0
  %50 = vmatpush1.bf16.msra.mxu0 %v40
  %51 = vmatprep.subr.bf16.mxu0 0
  %52 = vmatpush1.bf16.msra.mxu0 0
  %53 = vmatprep.subr.bf16.mxu0 0
  %54 = vmatpush1.bf16.msra.mxu0 0
  %55 = vmatprep.subr.bf16.mxu0 0
  %56 = vmatpush1.bf16.msra.mxu0 0
  %57 = vmatprep.subr.bf16.mxu0 0
  %58 = vmatpush1.bf16.msra.mxu0 0
  %59 = vmatprep.subr.bf16.mxu0 0
  %60 = vmatpush1.bf16.msra.mxu0 0
  %61 = vmatprep.subr.bf16.mxu0 0
  %62 = vmatpush1.bf16.msra.mxu0 0
  %63 = vmatprep.subr.bf16.mxu0 0
  %64 = vmatpush1.bf16.msra.mxu0 0
  %65 = vmatprep.subr.bf16.mxu0 0
  %66 = vmatpush1.bf16.msra.mxu0 0
  %67 = vmatprep.subr.bf16.mxu0 0
  %68 = vmatpush1.bf16.msra.mxu0 0
  %69 = vmatprep.subr.bf16.mxu0 0
  %70 = vmatpush1.bf16.msra.mxu0 0
  %71 = vmatprep.subr.bf16.mxu0 0
  %72 = vmatpush1.bf16.msra.mxu0 0
  %73 = vmatprep.subr.bf16.mxu0 0
  %74 = vmatpush1.bf16.msra.mxu0 0
  %75 = vmatprep.subr.bf16.mxu0 0
  %76 = vmatpush1.bf16.msra.mxu0 0
  %77 = vmatprep.subr.bf16.mxu0 0
  %78 = vmatpush1.bf16.msra.mxu0 0
  %79 = vmatprep.mubr.bf16.mxu0 0
  %80 = vmatmul.mubr.bf16.gmra.mrb[0].mxu0 %v45
  %v81 = vpop.f32.mrb[0].mxu0
  %v82 = vadd.f32 0.0, %v81
  %v83 = vpop.f32.mrb[0].mxu0
  %v84 = vpop.f32.mrb[0].mxu0
  %v85 = vadd.f32 0.0, %v84
  %v86 = vpop.f32.mrb[0].mxu0
  %87 = vdwg.mxu0
  %v88 = vadd.f32 %v22, %v82
  %v89 = vadd.f32 %v23, %v85
  %90 = vst.msk [vmem:[#allocation2] sm:$0xff] %vm43, %v88
  %91 = vst.msk [vmem:[#allocation2 + $0x8] sm:$0xff] %vm43, %v89
  // Predicated region
  $region18: #{forward_train.22} parent=0 // pred_check
    %p92 = pneg %p15
  $region19: #{forward_train.22} parent=0 // pred_check_branch
    %94 = sbr.rel (%p92) target = $region21
  $region20: #{forward_train.22} parent=0 // pred_region
    %v95 = vld [vmem:[#allocation2] sm:$0xff]
    %v96 = vld [vmem:[#allocation2 + $0x8] sm:$0xff]
    %v97 = vld [vmem:[%s2] sm:$0x1]
    %v99 = vlaneseq
    %v100 = vshrl.u32 %v99, 7
    %v101 = vsub.s32 0, %v100
    %v102 = vrot.slane %v97, %v101
    %v104 = vadd.f32 %v95, %v102
    %v105 = vadd.f32 %v96, %v102
    %v106 = vpack.c.bf16 %v105, %v104
    %v108 = vunpack.c.l.b16 %v106
    %v109 = vunpack.c.h.b16 %v106
    %v110 = vpack.c.b16 %v108, %v108
    %v111 = vpack.c.b16 %v109, %v109
    %vm114 = vcmask 257024
    %115 = vst.msk [vmem:[%s3] sm:$0xf] %vm114, %v110
    %116 = vst.msk [vmem:[%s3 + $0x4] sm:$0xf] %vm114, %v111
  $region21: #{forward_train.22} parent=0 // pred_fallthru
    _
  // Predicated region
  $region22: #{forward_train.22} parent=0 // pred_check
    _
  $region23: #{forward_train.22} parent=0 // pred_check_branch
    %118 = sbr.rel (0) target = $region25
  $region24: #{forward_train.22} parent=0 // pred_region
    _
  $region25: #{forward_train.22} parent=0 // pred_fallthru
    _
  // Predicated region
  $region26: #{forward_train.22} parent=0 // pred_check
    _
  $region27: #{forward_train.22} parent=0 // pred_check_branch
    %120 = sbr.rel (0) target = $region29
  $region28: #{forward_train.22} parent=0 // pred_region
    _
  $region29: #{forward_train.22} parent=0 // pred_fallthru
    _

// kernel: forward_train.20
$region0: #{forward_train.20}
  #allocation0 [shape = 'u32[]', space=smem, size = 0x4, offset = 0x4, fixed_abs, tag = 'smem constant byte address 0x4 - core index']
  #allocation1 [shape = 'u32[144,128]{1,0:T(1,128)}', space=vmem, size = 0x12000, scoped, tag = 'internal scratch']
  %s0 = inlined_call_operand.vmem [shape: bf16[3,2,8,32], index: 0, kind: input, shape index: {}, may-alias: {0,1,2}]
  %s1 = inlined_call_operand.vmem [shape: bf16[3,2,8,32], index: 1, kind: input, shape index: {}, may-alias: {0,1,2}]
  %s2 = inlined_call_operand.vmem [shape: bf16[3,2,8,32], index: 2, kind: input, shape index: {}, may-alias: {0,1,2}]
  %s3 = inlined_call_operand.vmem [shape: f32[2,1,8], index: 3, kind: input, shape index: {}]
  %s4 = inlined_call_operand.vmem [shape: bf16[2,8,32], index: 4, kind: output, shape index: {}]
  %s5 = sld [smem:[#allocation0]]
  $region49: #{forward_train.20} parent=0
    _
  %s7 = ssub.s32 1, %s5
  %s8 = scalar_select 0, %s7, %s5
  loop: start=0, step=1, limit=4
  $region2: #{forward_train.20} parent=0 // loop_pre_header
    _
  $region3: #{forward_train.20} parent=0 // loop_header
    %s10 = sphi 0, %s14
    %p11 = scmp.ge.s32.totalorder %s10, 4
    %s17 = sphi 0, %s29
    %s18 = sphi 0, %s25
    %s19 = sphi 0, %s17
    %s20 = sphi 0, %s18
    %s21 = sphi 0, %s19
    %s22 = sphi 0, %s20
    %s34 = sphi 0, %s36
    %s37 = sphi 0, %s34
    %s38 = sphi 0, %s37
    %s54 = sphi 0, %s38
    %s60 = sphi 0, %s62
    %s63 = sphi 0, %s60
    %s64 = sphi 0, %s63
    %s80 = sphi 0, %s64
    %s86 = sphi 0, %s88
    %s89 = sphi 0, %s86
    %s90 = sphi 0, %s89
    %s106 = sphi 0, %s90
    %s112 = sphi 0, %s114
    %s115 = sphi 0, %s112
    %s116 = sphi 0, %s115
    %s132 = sphi 0, %s116
    %s140 = sphi 0, %s142
    %s143 = sphi 0, %s140
    %s144 = sphi 0, %s143
    %s160 = sphi 0, %s144
  $region4: #{forward_train.20} parent=0 // loop_header_branch
    %13 = sbr.rel (%p11) target = $region8
  $region5: #{forward_train.20} parent=0 // loop_body
    %s15 = ssub.s32 %s10, 1
    %s16 = ssub.s32 %s10, 2
    %s23 = sadd.s32 1, %s18
    %p24 = scmp.ge.s32.totalorder %s23, 1
    %s25 = scalar_select %p24, 0, %s23
    %s26 = sadd.s32 1, %s17
    %s27 = scalar_select %p24, %s26, %s17
    %p28 = scmp.ge.s32.totalorder %s27, 2
    %s29 = scalar_select %p28, 0, %s27
    %s30 = ssub.s32 %s17, %s29
    %s31 = ssub.s32 %s18, %s25
    %s32 = sor.u32 %s30, %s31
    %p33 = scmp.eq.s32.totalorder %s32, 0
    %s35 = sadd.s32 %s34, 1
    %s36 = scalar_select %p33, %s34, %s35
    %p39 = pneg %p33
    %p40 = scmp.eq.s32.totalorder %s10, 1
    %p41 = por %p39, %p40
    %p42 = scmp.ne.s32.totalorder %s34, %s37
    %p43 = scmp.eq.s32.totalorder %s10, 0
    %p44 = por %p42, %p43
    %p45 = scmp.ne.s32.totalorder %s34, %s37
    %p46 = scmp.eq.s32.totalorder %s15, 1
    %p47 = por %p45, %p46
    %p48 = scmp.ne.s32.totalorder %s37, %s38
    %p49 = scmp.eq.s32.totalorder %s15, 0
    %p50 = por %p48, %p49
    %p51 = scmp.ne.s32.totalorder %s37, %s38
    %p52 = scmp.eq.s32.totalorder %s16, 1
    %p53 = por %p51, %p52
    %p55 = scmp.ne.s32.totalorder %s38, %s54
    %p56 = scmp.eq.s32.totalorder %s16, 0
    %p57 = por %p55, %p56
    %s58 = ssub.s32 %s17, %s29
    %p59 = scmp.eq.s32.totalorder %s58, 0
    %s61 = sadd.s32 %s60, 1
    %s62 = scalar_select %p59, %s60, %s61
    %p65 = pneg %p59
    %p66 = scmp.eq.s32.totalorder %s10, 1
    %p67 = por %p65, %p66
    %p68 = scmp.ne.s32.totalorder %s60, %s63
    %p69 = scmp.eq.s32.totalorder %s10, 0
    %p70 = por %p68, %p69
    %p71 = scmp.ne.s32.totalorder %s60, %s63
    %p72 = scmp.eq.s32.totalorder %s15, 1
    %p73 = por %p71, %p72
    %p74 = scmp.ne.s32.totalorder %s63, %s64
    %p75 = scmp.eq.s32.totalorder %s15, 0
    %p76 = por %p74, %p75
    %p77 = scmp.ne.s32.totalorder %s63, %s64
    %p78 = scmp.eq.s32.totalorder %s16, 1
    %p79 = por %p77, %p78
    %p81 = scmp.ne.s32.totalorder %s64, %s80
    %p82 = scmp.eq.s32.totalorder %s16, 0
    %p83 = por %p81, %p82
    %s84 = ssub.s32 %s17, %s29
    %p85 = scmp.eq.s32.totalorder %s84, 0
    %s87 = sadd.s32 %s86, 1
    %s88 = scalar_select %p85, %s86, %s87
    %p91 = pneg %p85
    %p92 = scmp.eq.s32.totalorder %s10, 1
    %p93 = por %p91, %p92
    %p94 = scmp.ne.s32.totalorder %s86, %s89
    %p95 = scmp.eq.s32.totalorder %s10, 0
    %p96 = por %p94, %p95
    %p97 = scmp.ne.s32.totalorder %s86, %s89
    %p98 = scmp.eq.s32.totalorder %s15, 1
    %p99 = por %p97, %p98
    %p100 = scmp.ne.s32.totalorder %s89, %s90
    %p101 = scmp.eq.s32.totalorder %s15, 0
    %p102 = por %p100, %p101
    %p103 = scmp.ne.s32.totalorder %s89, %s90
    %p104 = scmp.eq.s32.totalorder %s16, 1
    %p105 = por %p103, %p104
    %p107 = scmp.ne.s32.totalorder %s90, %s106
    %p108 = scmp.eq.s32.totalorder %s16, 0
    %p109 = por %p107, %p108
    %s110 = ssub.s32 %s17, %s29
    %p111 = scmp.eq.s32.totalorder %s110, 0
    %s113 = sadd.s32 %s112, 1
    %s114 = scalar_select %p111, %s112, %s113
    %p117 = pneg %p111
    %p118 = scmp.eq.s32.totalorder %s10, 1
    %p119 = por %p117, %p118
    %p120 = scmp.ne.s32.totalorder %s112, %s115
    %p121 = scmp.eq.s32.totalorder %s10, 0
    %p122 = por %p120, %p121
    %p123 = scmp.ne.s32.totalorder %s112, %s115
    %p124 = scmp.eq.s32.totalorder %s15, 1
    %p125 = por %p123, %p124
    %p126 = scmp.ne.s32.totalorder %s115, %s116
    %p127 = scmp.eq.s32.totalorder %s15, 0
    %p128 = por %p126, %p127
    %p129 = scmp.ne.s32.totalorder %s115, %s116
    %p130 = scmp.eq.s32.totalorder %s16, 1
    %p131 = por %p129, %p130
    %p133 = scmp.ne.s32.totalorder %s116, %s132
    %p134 = scmp.eq.s32.totalorder %s16, 0
    %p135 = por %p133, %p134
    %s136 = ssub.s32 %s17, %s29
    %s137 = ssub.s32 %s18, %s25
    %s138 = sor.u32 %s136, %s137
    %p139 = scmp.eq.s32.totalorder %s138, 0
    %s141 = sadd.s32 %s140, 1
    %s142 = scalar_select %p139, %s140, %s141
    %p145 = pneg %p139
    %p146 = scmp.eq.s32.totalorder %s10, 1
    %p147 = por %p145, %p146
    %p148 = scmp.ne.s32.totalorder %s140, %s143
    %p149 = scmp.eq.s32.totalorder %s10, 0
    %p150 = por %p148, %p149
    %p151 = scmp.ne.s32.totalorder %s140, %s143
    %p152 = scmp.eq.s32.totalorder %s15, 1
    %p153 = por %p151, %p152
    %p154 = scmp.ne.s32.totalorder %s143, %s144
    %p155 = scmp.eq.s32.totalorder %s15, 0
    %p156 = por %p154, %p155
    %p157 = scmp.ne.s32.totalorder %s143, %s144
    %p158 = scmp.eq.s32.totalorder %s16, 1
    %p159 = por %p157, %p158
    %p161 = scmp.ne.s32.totalorder %s144, %s160
    %p162 = scmp.eq.s32.totalorder %s16, 0
    %p163 = por %p161, %p162
    %p164 = scmp.le.s32.totalorder 1, %s10
    %p165 = scmp.lt.s32.totalorder %s10, 3
    %p166 = pnand %p164, %p165
    %p167 = pneg %p166
    // Predicated region
    $region9: #{forward_train.20} parent=5 // pred_check
      _
    $region10: #{forward_train.20} parent=5 // pred_check_branch
      %169 = sbr.rel (%p166) target = $region12
    $region11: #{forward_train.20} parent=5 // pred_region
      %s170 = ssub.s32 %s10, 1
    $region12: #{forward_train.20} parent=5 // pred_fallthru
      _
    %p171 = scmp.lt.s32.totalorder %s10, 2
    // Predicated region
    $region13: #{forward_train.20} parent=5 // pred_check
      %p172 = pneg %p171
    $region14: #{forward_train.20} parent=5 // pred_check_branch
      %174 = sbr.rel (%p172) target = $region16
    $region15: #{forward_train.20} parent=5 // pred_region
      // Predicated region
      $region17: #{forward_train.20} parent=15 // pred_check
        %p175 = pneg %p44
      $region18: #{forward_train.20} parent=15 // pred_check_branch
        %177 = sbr.rel (%p175) target = $region20
      $region19: #{forward_train.20} parent=15 // pred_region
        %p178 = scmp.lt.s32.totalorder %s17, 1
        %s179 = scalar_select %p178, %s17, 1
        %p180 = scmp.lt.s32.totalorder %s18, 0
        %s181 = scalar_select %p180, %s18, 0
        %s182 = sadd.s32 %s181, %s179
        %s183 = smul.addr %s182, 4
        %s184 = scalar_lea.vmem %s0, %s183
      $region20: #{forward_train.20} parent=15 // pred_fallthru
        _
      // Predicated region
      $region21: #{forward_train.20} parent=15 // pred_check
        %p185 = pneg %p70
      $region22: #{forward_train.20} parent=15 // pred_check_branch
        %187 = sbr.rel (%p185) target = $region24
      $region23: #{forward_train.20} parent=15 // pred_region
        %p188 = scmp.lt.s32.totalorder %s17, 1
        %s189 = scalar_select %p188, %s17, 1
        %s190 = sadd.s32 %s189, 2
        %s191 = smul.addr %s190, 4
        %s192 = scalar_lea.vmem %s1, %s191
      $region24: #{forward_train.20} parent=15 // pred_fallthru
        _
      // Predicated region
      $region25: #{forward_train.20} parent=15 // pred_check
        %p193 = pneg %p96
      $region26: #{forward_train.20} parent=15 // pred_check_branch
        %195 = sbr.rel (%p193) target = $region28
      $region27: #{forward_train.20} parent=15 // pred_region
        %p196 = scmp.lt.s32.totalorder %s17, 1
        %s197 = scalar_select %p196, %s17, 1
        %s198 = sadd.s32 %s197, 4
        %s199 = smul.addr %s198, 4
        %s200 = scalar_lea.vmem %s2, %s199
      $region28: #{forward_train.20} parent=15 // pred_fallthru
        _
      // Predicated region
      $region29: #{forward_train.20} parent=15 // pred_check
        %p201 = pneg %p122
      $region30: #{forward_train.20} parent=15 // pred_check_branch
        %203 = sbr.rel (%p201) target = $region32
      $region31: #{forward_train.20} parent=15 // pred_region
        %p204 = scmp.lt.s32.totalorder %s17, 1
        %s205 = scalar_select %p204, %s17, 1
        %s206 = scalar_lea.vmem %s3, %s205
      $region32: #{forward_train.20} parent=15 // pred_fallthru
        _
    $region16: #{forward_train.20} parent=5 // pred_fallthru
      _
    %p207 = scmp.le.s32.totalorder 1, %s10
    %p208 = scmp.lt.s32.totalorder %s10, 3
    %p209 = pnand %p207, %p208
    %p210 = pneg %p209
    // Predicated region
    $region33: #{forward_train.20} parent=5 // pred_check
      _
    $region34: #{forward_train.20} parent=5 // pred_check_branch
      %212 = sbr.rel (%p209) target = $region36
    $region35: #{forward_train.20} parent=5 // pred_region
      %s213 = ssub.s32 %s10, 1
      %p214 = scmp.lt.s32.totalorder %s19, 1
      %s215 = scalar_select %p214, %s19, 1
      %p216 = scmp.lt.s32.totalorder %s20, 0
      %s217 = scalar_select %p216, %s20, 0
      %s218 = sadd.s32 %s217, %s215
      %s219 = smul.addr %s218, 4
      %s220 = scalar_lea.vmem %s0, %s219
      %p221 = pneg %p50
      %p222 = pneg %p47
      %p223 = scmp.lt.s32.totalorder %s19, 1
      %s224 = scalar_select %p223, %s19, 1
      %s225 = sadd.s32 %s224, 2
      %s226 = smul.addr %s225, 4
      %s227 = scalar_lea.vmem %s1, %s226
      %p228 = pneg %p76
      %p229 = pneg %p73
      %p230 = scmp.lt.s32.totalorder %s19, 1
      %s231 = scalar_select %p230, %s19, 1
      %s232 = sadd.s32 %s231, 4
      %s233 = smul.addr %s232, 4
      %s234 = scalar_lea.vmem %s2, %s233
      %p235 = pneg %p102
      %p236 = pneg %p99
      %p237 = scmp.lt.s32.totalorder %s19, 1
      %s238 = scalar_select %p237, %s19, 1
      %s239 = scalar_lea.vmem %s3, %s238
      %p240 = pneg %p128
      %p241 = pneg %p125
      %p242 = pneg %p156
      %p243 = pneg %p153
      %p244 = scmp.lt.s32.totalorder %s19, 1
      %s245 = scalar_select %p244, %s19, 1
      %p246 = scmp.lt.s32.totalorder %s20, 0
      %s247 = scalar_select %p246, %s20, 0
      %s248 = sadd.s32 %s247, %s245
      %s249 = smul.addr %s248, 4
      %s250 = scalar_lea.vmem %s4, %s249
      %p251 = scmp.lt.s32.totalorder %s19, 1
      %s252 = scalar_select %p251, %s19, 1
      %p253 = scmp.lt.s32.totalorder %s20, 0
      %s254 = scalar_select %p253, %s20, 0
      %s255 = sadd.s32 %s254, %s252
      %s256 = smul.addr %s255, 4
      %s257 = scalar_lea.vmem %s0, %s256
      %p258 = scmp.lt.s32.totalorder %s19, 1
      %s259 = scalar_select %p258, %s19, 1
      %s260 = sadd.s32 %s259, 2
      %s261 = smul.addr %s260, 4
      %s262 = scalar_lea.vmem %s1, %s261
      %p263 = scmp.lt.s32.totalorder %s19, 1
      %s264 = scalar_select %p263, %s19, 1
      %s265 = sadd.s32 %s264, 4
      %s266 = smul.addr %s265, 4
      %s267 = scalar_lea.vmem %s2, %s266
      %p268 = scmp.lt.s32.totalorder %s19, 1
      %s269 = scalar_select %p268, %s19, 1
      %s270 = scalar_lea.vmem %s3, %s269
      %p271 = scmp.lt.s32.totalorder %s19, 1
      %s272 = scalar_select %p271, %s19, 1
      %p273 = scmp.lt.s32.totalorder %s20, 0
      %s274 = scalar_select %p273, %s20, 0
      %s275 = sadd.s32 %s274, %s272
      %s276 = smul.addr %s275, 4
      %s277 = scalar_lea.vmem %s4, %s276
      %v279 = vld [vmem:[%s257] sm:$0xf]
      %v280 = vld [vmem:[%s262] sm:$0xf]
      %v281 = vld [vmem:[%s267] sm:$0xf]
      %v282 = vld [vmem:[%s270] sm:$0x1]
      %284 = vrot.lane.b32.xlu0 %v279, 120
      %v285 = vpop.permute.xlu0 %284
      %286 = vrot.lane.b32.xlu0 %v279, 112
      %v287 = vpop.permute.xlu0 %286
      %288 = vrot.lane.b32.xlu0 %v279, 104
      %v289 = vpop.permute.xlu0 %288
      %291 = vrot.lane.b32.xlu0 %v280, 120
      %v292 = vpop.permute.xlu0 %291
      %293 = vrot.lane.b32.xlu0 %v280, 112
      %v294 = vpop.permute.xlu0 %293
      %295 = vrot.lane.b32.xlu0 %v280, 104
      %v296 = vpop.permute.xlu0 %295
      %298 = vrot.lane.b32.xlu0 %v281, 120
      %v299 = vpop.permute.xlu0 %298
      %300 = vrot.lane.b32.xlu0 %v281, 112
      %v301 = vpop.permute.xlu0 %300
      %302 = vrot.lane.b32.xlu0 %v281, 104
      %v303 = vpop.permute.xlu0 %302
      %vm304 = vcmask 64512
      %v306 = vsel %vm304, %v279, 0
      %v309 = vsel %vm304, %v280, 0
      %311 = vmatprep.subr.bf16.mxu0 0
      %312 = vmatpush1.bf16.xpose.msra.mxu0 %v309
      %313 = vmatprep.subr.bf16.mxu0 0
      %314 = vmatpush1.bf16.xpose.msra.mxu0 0
      %315 = vmatprep.subr.bf16.mxu0 0
      %316 = vmatpush1.bf16.xpose.msra.mxu0 0
      %317 = vmatprep.subr.bf16.mxu0 0
      %318 = vmatpush1.bf16.xpose.msra.mxu0 0
      %319 = vmatprep.subr.bf16.mxu0 0
      %320 = vmatpush1.bf16.xpose.msra.mxu0 0
      %321 = vmatprep.subr.bf16.mxu0 0
      %322 = vmatpush1.bf16.xpose.msra.mxu0 0
      %323 = vmatprep.subr.bf16.mxu0 0
      %324 = vmatpush1.bf16.xpose.msra.mxu0 0
      %325 = vmatprep.subr.bf16.mxu0 0
      %326 = vmatpush1.bf16.xpose.msra.mxu0 0
      %327 = vmatprep.subr.bf16.mxu0 0
      %328 = vmatpush1.bf16.xpose.msra.mxu0 0
      %329 = vmatprep.subr.bf16.mxu0 0
      %330 = vmatpush1.bf16.xpose.msra.mxu0 0
      %331 = vmatprep.subr.bf16.mxu0 0
      %332 = vmatpush1.bf16.xpose.msra.mxu0 0
      %333 = vmatprep.subr.bf16.mxu0 0
      %334 = vmatpush1.bf16.xpose.msra.mxu0 0
      %335 = vmatprep.subr.bf16.mxu0 0
      %336 = vmatpush1.bf16.xpose.msra.mxu0 0
      %337 = vmatprep.subr.bf16.mxu0 0
      %338 = vmatpush1.bf16.xpose.msra.mxu0 0
      %339 = vmatprep.subr.bf16.mxu0 0
      %340 = vmatpush1.bf16.xpose.msra.mxu0 0
      %341 = vmatprep.subr.bf16.mxu0 0
      %342 = vmatpush1.bf16.xpose.msra.mxu0 0
      %343 = vmatprep.mubr.bf16.mxu0 0
      %344 = vmatmul.mubr.bf16.gmra.mrb[0].mxu0 %v306
      %v345 = vpop.f32.mrb[0].mxu0
      %v346 = vadd.f32 0.0, %v345
      %v347 = vpop.f32.mrb[0].mxu0
      %v348 = vpop.f32.mrb[0].mxu0
      %v349 = vpop.f32.mrb[0].mxu0
      %350 = vdwg.mxu0
      %v352 = vsel %vm304, %v285, 0
      %v355 = vsel %vm304, %v292, 0
      %357 = vmatprep.subr.bf16.mxu0 0
      %358 = vmatpush1.bf16.xpose.msra.mxu0 %v355
      %359 = vmatprep.subr.bf16.mxu0 0
      %360 = vmatpush1.bf16.xpose.msra.mxu0 0
      %361 = vmatprep.subr.bf16.mxu0 0
      %362 = vmatpush1.bf16.xpose.msra.mxu0 0
      %363 = vmatprep.subr.bf16.mxu0 0
      %364 = vmatpush1.bf16.xpose.msra.mxu0 0
      %365 = vmatprep.subr.bf16.mxu0 0
      %366 = vmatpush1.bf16.xpose.msra.mxu0 0
      %367 = vmatprep.subr.bf16.mxu0 0
      %368 = vmatpush1.bf16.xpose.msra.mxu0 0
      %369 = vmatprep.subr.bf16.mxu0 0
      %370 = vmatpush1.bf16.xpose.msra.mxu0 0
      %371 = vmatprep.subr.bf16.mxu0 0
      %372 = vmatpush1.bf16.xpose.msra.mxu0 0
      %373 = vmatprep.subr.bf16.mxu0 0
      %374 = vmatpush1.bf16.xpose.msra.mxu0 0
      %375 = vmatprep.subr.bf16.mxu0 0
      %376 = vmatpush1.bf16.xpose.msra.mxu0 0
      %377 = vmatprep.subr.bf16.mxu0 0
      %378 = vmatpush1.bf16.xpose.msra.mxu0 0
      %379 = vmatprep.subr.bf16.mxu0 0
      %380 = vmatpush1.bf16.xpose.msra.mxu0 0
      %381 = vmatprep.subr.bf16.mxu0 0
      %382 = vmatpush1.bf16.xpose.msra.mxu0 0
      %383 = vmatprep.subr.bf16.mxu0 0
      %384 = vmatpush1.bf16.xpose.msra.mxu0 0
      %385 = vmatprep.subr.bf16.mxu0 0
      %386 = vmatpush1.bf16.xpose.msra.mxu0 0
      %387 = vmatprep.subr.bf16.mxu0 0
      %388 = vmatpush1.bf16.xpose.msra.mxu0 0
      %389 = vmatprep.mubr.bf16.mxu0 0
      %390 = vmatmul.mubr.bf16.gmra.mrb[0].mxu0 %v352
      %v391 = vpop.f32.mrb[0].mxu0
      %v392 = vadd.f32 0.0, %v391
      %v393 = vpop.f32.mrb[0].mxu0
      %v394 = vpop.f32.mrb[0].mxu0
      %v395 = vpop.f32.mrb[0].mxu0
      %396 = vdwg.mxu0
      %v398 = vsel %vm304, %v287, 0
      %v401 = vsel %vm304, %v294, 0
      %403 = vmatprep.subr.bf16.mxu0 0
      %404 = vmatpush1.bf16.xpose.msra.mxu0 %v401
      %405 = vmatprep.subr.bf16.mxu0 0
      %406 = vmatpush1.bf16.xpose.msra.mxu0 0
      %407 = vmatprep.subr.bf16.mxu0 0
      %408 = vmatpush1.bf16.xpose.msra.mxu0 0
      %409 = vmatprep.subr.bf16.mxu0 0
      %410 = vmatpush1.bf16.xpose.msra.mxu0 0
      %411 = vmatprep.subr.bf16.mxu0 0
      %412 = vmatpush1.bf16.xpose.msra.mxu0 0
      %413 = vmatprep.subr.bf16.mxu0 0
      %414 = vmatpush1.bf16.xpose.msra.mxu0 0
      %415 = vmatprep.subr.bf16.mxu0 0
      %416 = vmatpush1.bf16.xpose.msra.mxu0 0
      %417 = vmatprep.subr.bf16.mxu0 0
      %418 = vmatpush1.bf16.xpose.msra.mxu0 0
      %419 = vmatprep.subr.bf16.mxu0 0
      %420 = vmatpush1.bf16.xpose.msra.mxu0 0
      %421 = vmatprep.subr.bf16.mxu0 0
      %422 = vmatpush1.bf16.xpose.msra.mxu0 0
      %423 = vmatprep.subr.bf16.mxu0 0
      %424 = vmatpush1.bf16.xpose.msra.mxu0 0
      %425 = vmatprep.subr.bf16.mxu0 0
      %426 = vmatpush1.bf16.xpose.msra.mxu0 0
      %427 = vmatprep.subr.bf16.mxu0 0
      %428 = vmatpush1.bf16.xpose.msra.mxu0 0
      %429 = vmatprep.subr.bf16.mxu0 0
      %430 = vmatpush1.bf16.xpose.msra.mxu0 0
      %431 = vmatprep.subr.bf16.mxu0 0
      %432 = vmatpush1.bf16.xpose.msra.mxu0 0
      %433 = vmatprep.subr.bf16.mxu0 0
      %434 = vmatpush1.bf16.xpose.msra.mxu0 0
      %435 = vmatprep.mubr.bf16.mxu0 0
      %436 = vmatmul.mubr.bf16.gmra.mrb[0].mxu0 %v398
      %v437 = vpop.f32.mrb[0].mxu0
      %v438 = vadd.f32 0.0, %v437
      %v439 = vpop.f32.mrb[0].mxu0
      %v440 = vpop.f32.mrb[0].mxu0
      %v441 = vpop.f32.mrb[0].mxu0
      %442 = vdwg.mxu0
      %v444 = vsel %vm304, %v289, 0
      %v447 = vsel %vm304, %v296, 0
      %449 = vmatprep.subr.bf16.mxu0 0
      %450 = vmatpush1.bf16.xpose.msra.mxu0 %v447
      %451 = vmatprep.subr.bf16.mxu0 0
      %452 = vmatpush1.bf16.xpose.msra.mxu0 0
      %453 = vmatprep.subr.bf16.mxu0 0
      %454 = vmatpush1.bf16.xpose.msra.mxu0 0
      %455 = vmatprep.subr.bf16.mxu0 0
      %456 = vmatpush1.bf16.xpose.msra.mxu0 0
      %457 = vmatprep.subr.bf16.mxu0 0
      %458 = vmatpush1.bf16.xpose.msra.mxu0 0
      %459 = vmatprep.subr.bf16.mxu0 0
      %460 = vmatpush1.bf16.xpose.msra.mxu0 0
      %461 = vmatprep.subr.bf16.mxu0 0
      %462 = vmatpush1.bf16.xpose.msra.mxu0 0
      %463 = vmatprep.subr.bf16.mxu0 0
      %464 = vmatpush1.bf16.xpose.msra.mxu0 0
      %465 = vmatprep.subr.bf16.mxu0 0
      %466 = vmatpush1.bf16.xpose.msra.mxu0 0
      %467 = vmatprep.subr.bf16.mxu0 0
      %468 = vmatpush1.bf16.xpose.msra.mxu0 0
      %469 = vmatprep.subr.bf16.mxu0 0
      %470 = vmatpush1.bf16.xpose.msra.mxu0 0
      %471 = vmatprep.subr.bf16.mxu0 0
      %472 = vmatpush1.bf16.xpose.msra.mxu0 0
      %473 = vmatprep.subr.bf16.mxu0 0
      %474 = vmatpush1.bf16.xpose.msra.mxu0 0
      %475 = vmatprep.subr.bf16.mxu0 0
      %476 = vmatpush1.bf16.xpose.msra.mxu0 0
      %477 = vmatprep.subr.bf16.mxu0 0
      %478 = vmatpush1.bf16.xpose.msra.mxu0 0
      %479 = vmatprep.subr.bf16.mxu0 0
      %480 = vmatpush1.bf16.xpose.msra.mxu0 0
      %481 = vmatprep.mubr.bf16.mxu0 0
      %482 = vmatmul.mubr.bf16.gmra.mrb[0].mxu0 %v444
      %v483 = vpop.f32.mrb[0].mxu0
      %v484 = vadd.f32 0.0, %v483
      %v485 = vpop.f32.mrb[0].mxu0
      %v486 = vpop.f32.mrb[0].mxu0
      %v487 = vpop.f32.mrb[0].mxu0
      %488 = vdwg.mxu0
      %s489 = smul.u32 %s20, 8
      %v490 = vlaneseq
      %v491 = vshrl.u32 %v490, 7
      %v492 = vstv %s489
      %v493 = vadd.s32 %v492, %v491
      %v494 = vlaneseq
      %v495 = vand.u32 %v494, 127
      %vm496 = vcmp.gt.s32.totalorder %v495, %v493
      %v497 = vsel %vm496, -1e+09, 0.0
      %v499 = vlaneseq
      %v500 = vshrl.u32 %v499, 7
      %v501 = vsub.s32 0, %v500
      %v502 = vrot.slane %v282, %v501
      %v504 = vadd.f32 %v502, %v497
      %v505 = vmul.f32 %v346, 0.35355338
      %v506 = vmul.f32 %v392, 0.35355338
      %v507 = vmul.f32 %v438, 0.35355338
      %v508 = vmul.f32 %v484, 0.35355338
      %v509 = vadd.f32 %v505, %v504
      %v510 = vadd.f32 %v506, %v504
      %v511 = vadd.f32 %v507, %v504
      %v512 = vadd.f32 %v508, %v504
      %v513 = vsel %vm304, %v509, -inf
      %514 = vmax.xlane.f32.xlu0 %v513
      %v515 = vpop.xlane.xlu0 %514
      %v516 = vsel %vm304, %v510, -inf
      %517 = vmax.xlane.f32.xlu0 %v516
      %v518 = vpop.xlane.xlu0 %517
      %v519 = vsel %vm304, %v511, -inf
      %520 = vmax.xlane.f32.xlu0 %v519
      %v521 = vpop.xlane.xlu0 %520
      %v522 = vsel %vm304, %v512, -inf
      %523 = vmax.xlane.f32.xlu0 %v522
      %v524 = vpop.xlane.xlu0 %523
      %v525 = vsub.f32 %v509, %v515
      %v526 = vsub.f32 %v510, %v518
      %v527 = vsub.f32 %v511, %v521
      %v528 = vsub.f32 %v512, %v524
      %v529 = vmul.f32 %v525, 1.442695
      %v530 = vpow.pop %v529
      %v531 = vmul.f32 %v526, 1.442695
      %v532 = vpow.pop %v531
      %v533 = vmul.f32 %v527, 1.442695
      %v534 = vpow.pop %v533
      %v535 = vmul.f32 %v528, 1.442695
      %v536 = vpow.pop %v535
      %v537 = vsel %vm304, %v530, 0.0
      %538 = vadd.xlane.f32.xlu0 %v537
      %v539 = vpop.xlane.xlu0 %538
      %v540 = vsel %vm304, %v532, 0.0
      %541 = vadd.xlane.f32.xlu0 %v540
      %v542 = vpop.xlane.xlu0 %541
      %v543 = vsel %vm304, %v534, 0.0
      %544 = vadd.xlane.f32.xlu0 %v543
      %v545 = vpop.xlane.xlu0 %544
      %v546 = vsel %vm304, %v536, 0.0
      %547 = vadd.xlane.f32.xlu0 %v546
      %v548 = vpop.xlane.xlu0 %547
      %v549 = vpack.c.bf16 %v530, %v530
      %v550 = vpack.c.bf16 %v532, %v532
      %v551 = vpack.c.bf16 %v534, %v534
      %v552 = vpack.c.bf16 %v536, %v536
      %v554 = vsel %vm304, %v549, 0
      %vm556 = vcmask 1043456
      %v558 = vsel %vm556, %v281, 0
      %560 = vmatprep.subr.bf16.mxu0 0
      %561 = vmatpush1.bf16.msra.mxu0 %v558
      %562 = vmatprep.subr.bf16.mxu0 0
      %563 = vmatpush1.bf16.msra.mxu0 0
      %564 = vmatprep.subr.bf16.mxu0 0
      %565 = vmatpush1.bf16.msra.mxu0 0
      %566 = vmatprep.subr.bf16.mxu0 0
      %567 = vmatpush1.bf16.msra.mxu0 0
      %568 = vmatprep.subr.bf16.mxu0 0
      %569 = vmatpush1.bf16.msra.mxu0 0
      %570 = vmatprep.subr.bf16.mxu0 0
      %571 = vmatpush1.bf16.msra.mxu0 0
      %572 = vmatprep.subr.bf16.mxu0 0
      %573 = vmatpush1.bf16.msra.mxu0 0
      %574 = vmatprep.subr.bf16.mxu0 0
      %575 = vmatpush1.bf16.msra.mxu0 0
      %576 = vmatprep.subr.bf16.mxu0 0
      %577 = vmatpush1.bf16.msra.mxu0 0
      %578 = vmatprep.subr.bf16.mxu0 0
      %579 = vmatpush1.bf16.msra.mxu0 0
      %580 = vmatprep.subr.bf16.mxu0 0
      %581 = vmatpush1.bf16.msra.mxu0 0
      %582 = vmatprep.subr.bf16.mxu0 0
      %583 = vmatpush1.bf16.msra.mxu0 0
      %584 = vmatprep.subr.bf16.mxu0 0
      %585 = vmatpush1.bf16.msra.mxu0 0
      %586 = vmatprep.subr.bf16.mxu0 0
      %587 = vmatpush1.bf16.msra.mxu0 0
      %588 = vmatprep.subr.bf16.mxu0 0
      %589 = vmatpush1.bf16.msra.mxu0 0
      %590 = vmatprep.subr.bf16.mxu0 0
      %591 = vmatpush1.bf16.msra.mxu0 0
      %592 = vmatprep.mubr.bf16.mxu0 0
      %593 = vmatmul.mubr.bf16.gmra.mrb[0].mxu0 %v554
      %v594 = vpop.f32.mrb[0].mxu0
      %v595 = vadd.f32 0.0, %v594
      %v596 = vpop.f32.mrb[0].mxu0
      %v597 = vpop.f32.mrb[0].mxu0
      %v598 = vpop.f32.mrb[0].mxu0
      %599 = vdwg.mxu0
      %v601 = vsel %vm304, %v550, 0
      %v604 = vsel %vm556, %v299, 0
      %606 = vmatprep.subr.bf16.mxu0 0
      %607 = vmatpush1.bf16.msra.mxu0 %v604
      %608 = vmatprep.subr.bf16.mxu0 0
      %609 = vmatpush1.bf16.msra.mxu0 0
      %610 = vmatprep.subr.bf16.mxu0 0
      %611 = vmatpush1.bf16.msra.mxu0 0
      %612 = vmatprep.subr.bf16.mxu0 0
      %613 = vmatpush1.bf16.msra.mxu0 0
      %614 = vmatprep.subr.bf16.mxu0 0
      %615 = vmatpush1.bf16.msra.mxu0 0
      %616 = vmatprep.subr.bf16.mxu0 0
      %617 = vmatpush1.bf16.msra.mxu0 0
      %618 = vmatprep.subr.bf16.mxu0 0
      %619 = vmatpush1.bf16.msra.mxu0 0
      %620 = vmatprep.subr.bf16.mxu0 0
      %621 = vmatpush1.bf16.msra.mxu0 0
      %622 = vmatprep.subr.bf16.mxu0 0
      %623 = vmatpush1.bf16.msra.mxu0 0
      %624 = vmatprep.subr.bf16.mxu0 0
      %625 = vmatpush1.bf16.msra.mxu0 0
      %626 = vmatprep.subr.bf16.mxu0 0
      %627 = vmatpush1.bf16.msra.mxu0 0
      %628 = vmatprep.subr.bf16.mxu0 0
      %629 = vmatpush1.bf16.msra.mxu0 0
      %630 = vmatprep.subr.bf16.mxu0 0
      %631 = vmatpush1.bf16.msra.mxu0 0
      %632 = vmatprep.subr.bf16.mxu0 0
      %633 = vmatpush1.bf16.msra.mxu0 0
      %634 = vmatprep.subr.bf16.mxu0 0
      %635 = vmatpush1.bf16.msra.mxu0 0
      %636 = vmatprep.subr.bf16.mxu0 0
      %637 = vmatpush1.bf16.msra.mxu0 0
      %638 = vmatprep.mubr.bf16.mxu0 0
      %639 = vmatmul.mubr.bf16.gmra.mrb[0].mxu0 %v601
      %v640 = vpop.f32.mrb[0].mxu0
      %v641 = vadd.f32 0.0, %v640
      %v642 = vpop.f32.mrb[0].mxu0
      %v643 = vpop.f32.mrb[0].mxu0
      %v644 = vpop.f32.mrb[0].mxu0
      %645 = vdwg.mxu0
      %v647 = vsel %vm304, %v551, 0
      %v650 = vsel %vm556, %v301, 0
      %652 = vmatprep.subr.bf16.mxu0 0
      %653 = vmatpush1.bf16.msra.mxu0 %v650
      %654 = vmatprep.subr.bf16.mxu0 0
      %655 = vmatpush1.bf16.msra.mxu0 0
      %656 = vmatprep.subr.bf16.mxu0 0
      %657 = vmatpush1.bf16.msra.mxu0 0
      %658 = vmatprep.subr.bf16.mxu0 0
      %659 = vmatpush1.bf16.msra.mxu0 0
      %660 = vmatprep.subr.bf16.mxu0 0
      %661 = vmatpush1.bf16.msra.mxu0 0
      %662 = vmatprep.subr.bf16.mxu0 0
      %663 = vmatpush1.bf16.msra.mxu0 0
      %664 = vmatprep.subr.bf16.mxu0 0
      %665 = vmatpush1.bf16.msra.mxu0 0
      %666 = vmatprep.subr.bf16.mxu0 0
      %667 = vmatpush1.bf16.msra.mxu0 0
      %668 = vmatprep.subr.bf16.mxu0 0
      %669 = vmatpush1.bf16.msra.mxu0 0
      %670 = vmatprep.subr.bf16.mxu0 0
      %671 = vmatpush1.bf16.msra.mxu0 0
      %672 = vmatprep.subr.bf16.mxu0 0
      %673 = vmatpush1.bf16.msra.mxu0 0
      %674 = vmatprep.subr.bf16.mxu0 0
      %675 = vmatpush1.bf16.msra.mxu0 0
      %676 = vmatprep.subr.bf16.mxu0 0
      %677 = vmatpush1.bf16.msra.mxu0 0
      %678 = vmatprep.subr.bf16.mxu0 0
      %679 = vmatpush1.bf16.msra.mxu0 0
      %680 = vmatprep.subr.bf16.mxu0 0
      %681 = vmatpush1.bf16.msra.mxu0 0
      %682 = vmatprep.subr.bf16.mxu0 0
      %683 = vmatpush1.bf16.msra.mxu0 0
      %684 = vmatprep.mubr.bf16.mxu0 0
      %685 = vmatmul.mubr.bf16.gmra.mrb[0].mxu0 %v647
      %v686 = vpop.f32.mrb[0].mxu0
      %v687 = vadd.f32 0.0, %v686
      %v688 = vpop.f32.mrb[0].mxu0
      %v689 = vpop.f32.mrb[0].mxu0
      %v690 = vpop.f32.mrb[0].mxu0
      %691 = vdwg.mxu0
      %v693 = vsel %vm304, %v552, 0
      %v696 = vsel %vm556, %v303, 0
      %698 = vmatprep.subr.bf16.mxu0 0
      %699 = vmatpush1.bf16.msra.mxu0 %v696
      %700 = vmatprep.subr.bf16.mxu0 0
      %701 = vmatpush1.bf16.msra.mxu0 0
      %702 = vmatprep.subr.bf16.mxu0 0
      %703 = vmatpush1.bf16.msra.mxu0 0
      %704 = vmatprep.subr.bf16.mxu0 0
      %705 = vmatpush1.bf16.msra.mxu0 0
      %706 = vmatprep.subr.bf16.mxu0 0
      %707 = vmatpush1.bf16.msra.mxu0 0
      %708 = vmatprep.subr.bf16.mxu0 0
      %709 = vmatpush1.bf16.msra.mxu0 0
      %710 = vmatprep.subr.bf16.mxu0 0
      %711 = vmatpush1.bf16.msra.mxu0 0
      %712 = vmatprep.subr.bf16.mxu0 0
      %713 = vmatpush1.bf16.msra.mxu0 0
      %714 = vmatprep.subr.bf16.mxu0 0
      %715 = vmatpush1.bf16.msra.mxu0 0
      %716 = vmatprep.subr.bf16.mxu0 0
      %717 = vmatpush1.bf16.msra.mxu0 0
      %718 = vmatprep.subr.bf16.mxu0 0
      %719 = vmatpush1.bf16.msra.mxu0 0
      %720 = vmatprep.subr.bf16.mxu0 0
      %721 = vmatpush1.bf16.msra.mxu0 0
      %722 = vmatprep.subr.bf16.mxu0 0
      %723 = vmatpush1.bf16.msra.mxu0 0
      %724 = vmatprep.subr.bf16.mxu0 0
      %725 = vmatpush1.bf16.msra.mxu0 0
      %726 = vmatprep.subr.bf16.mxu0 0
      %727 = vmatpush1.bf16.msra.mxu0 0
      %728 = vmatprep.subr.bf16.mxu0 0
      %729 = vmatpush1.bf16.msra.mxu0 0
      %730 = vmatprep.mubr.bf16.mxu0 0
      %731 = vmatmul.mubr.bf16.gmra.mrb[0].mxu0 %v693
      %v732 = vpop.f32.mrb[0].mxu0
      %v733 = vadd.f32 0.0, %v732
      %v734 = vpop.f32.mrb[0].mxu0
      %v735 = vpop.f32.mrb[0].mxu0
      %v736 = vpop.f32.mrb[0].mxu0
      %737 = vdwg.mxu0
      %v738 = vrcp.pop %v539
      %v739 = vrcp.pop %v542
      %v740 = vrcp.pop %v545
      %v741 = vrcp.pop %v548
      %v742 = vmul.f32 %v595, %v738
      %v743 = vmul.f32 %v641, %v739
      %v744 = vmul.f32 %v687, %v740
      %v745 = vmul.f32 %v733, %v741
      %747 = vrot.lane.b32.xlu0 %v743, 8
      %v748 = vpop.permute.xlu0 %747
      %751 = vrot.lane.b32.xlu0 %v744, 16
      %v752 = vpop.permute.xlu0 %751
      %755 = vrot.lane.b32.xlu0 %v745, 24
      %v756 = vpop.permute.xlu0 %755
      %v758 = vsel %vm304, %v742, %v748
      %vm759 = vcmask 130048
      %v760 = vsel %vm759, %v758, %v752
      %vm761 = vcmask 195584
      %v762 = vsel %vm761, %v760, %v756
      %v763 = vpack.c.bf16 %v762, %v762
      %vm764 = vcmask 257024
      %765 = vst.msk [vmem:[%s277] sm:$0xf] %vm764, %v763
      %p766 = scmp.lt.s32.totalorder %s19, 1
      %s767 = scalar_select %p766, %s19, 1
      %p768 = scmp.lt.s32.totalorder %s20, 0
      %s769 = scalar_select %p768, %s20, 0
      %s770 = sadd.s32 %s769, %s767
      %s771 = smul.addr %s770, 4
      %s772 = scalar_lea.vmem %s4, %s771
      // Predicated region
      $region37: #{forward_train.20} parent=35 // pred_check
        %p773 = pneg %p153
      $region38: #{forward_train.20} parent=35 // pred_check_branch
        %775 = sbr.rel (%p773) target = $region40
      $region39: #{forward_train.20} parent=35 // pred_region
        _
      $region40: #{forward_train.20} parent=35 // pred_fallthru
        _
    $region36: #{forward_train.20} parent=5 // pred_fallthru
      _
    %p776 = scmp.le.s32.totalorder 2, %s10
    // Predicated region
    $region41: #{forward_train.20} parent=5 // pred_check
      %p777 = pneg %p776
    $region42: #{forward_train.20} parent=5 // pred_check_branch
      %779 = sbr.rel (%p777) target = $region44
    $region43: #{forward_train.20} parent=5 // pred_region
      %s780 = ssub.s32 %s10, 2
      // Predicated region
      $region45: #{forward_train.20} parent=43 // pred_check
        %p781 = pneg %p159
      $region46: #{forward_train.20} parent=43 // pred_check_branch
        %783 = sbr.rel (%p781) target = $region48
      $region47: #{forward_train.20} parent=43 // pred_region
        %p784 = scmp.lt.s32.totalorder %s21, 1
        %s785 = scalar_select %p784, %s21, 1
        %p786 = scmp.lt.s32.totalorder %s22, 0
        %s787 = scalar_select %p786, %s22, 0
        %s788 = sadd.s32 %s787, %s785
        %s789 = smul.addr %s788, 4
        %s790 = scalar_lea.vmem %s4, %s789
      $region48: #{forward_train.20} parent=43 // pred_fallthru
        _
    $region44: #{forward_train.20} parent=5 // pred_fallthru
      _
  $region6: #{forward_train.20} parent=0 // loop_footer
    %s14 = sadd.s32 1, %s10
  $region7: #{forward_train.20} parent=0 // loop_footer_branch
    %9 = sbr.rel target = $region3
  $region8: #{forward_train.20} parent=0 // loop_exit
    _

// kernel: forward_train.26
$region0: #{forward_train.26}
  #allocation0 [shape = 'u32[]', space=smem, size = 0x4, offset = 0x4, fixed_abs, tag = 'smem constant byte address 0x4 - core index']
  #allocation1 [shape = 'u32[144,128]{1,0:T(1,128)}', space=vmem, size = 0x12000, scoped, tag = 'internal scratch']
  #allocation2 [shape = 'f32[16,512]{1,0:T(8,128)}', space=vmem, size = 0x8000, scoped, tag = 'scratch operand']
  %s0 = inlined_call_operand.vmem [shape: f32[16,32], index: 0, kind: input, shape index: {}]
  %s1 = inlined_call_operand.vmem [shape: bf16[32,2048], index: 1, kind: input, shape index: {}]
  %s2 = inlined_call_operand.vmem [shape: f32[1,2048], index: 2, kind: input, shape index: {}]
  %s3 = inlined_call_operand.vmem [shape: bf16[16,2048], index: 3, kind: output, shape index: {}]
  %s4 = sld [smem:[#allocation0]]
  $region95: #{forward_train.26} parent=0
    _
  %s6 = ssub.s32 1, %s4
  %s7 = scalar_select 0, %s6, %s4
  $region1: #{forward_train.26} parent=0
    #allocation3 [shape = 'u8[65536]{0}', space=vmem, size = 0x10000, scoped, tag = 'input window, operand 1']
    #allocation4 [shape = 'u8[32768]{0}', space=vmem, size = 0x8000, scoped, tag = 'output window, operand 0']
    loop: start=0, step=1, limit=6
    $region2: #{forward_train.26} parent=1 // loop_pre_header
      _
    $region3: #{forward_train.26} parent=1 // loop_header
      %s9 = sphi 0, %s13
      %p10 = scmp.ge.s32.totalorder %s9, 6
      %s16 = sphi 0, %s35
      %s17 = sphi 0, %s31
      %s18 = sphi 0, %s27
      %s19 = sphi 0, %s16
      %s20 = sphi 0, %s17
      %s21 = sphi 0, %s18
      %s22 = sphi 0, %s19
      %s23 = sphi 0, %s20
      %s24 = sphi 0, %s21
      %s40 = sphi 0, %s42
      %s43 = sphi 0, %s40
      %s44 = sphi 0, %s43
      %s60 = sphi 0, %s44
      %s68 = sphi 0, %s70
      %s71 = sphi 0, %s68
      %s72 = sphi 0, %s71
      %s88 = sphi 0, %s72
      %s94 = sphi 0, %s96
      %s97 = sphi 0, %s94
      %s98 = sphi 0, %s97
      %s114 = sphi 0, %s98
      %s122 = sphi 0, %s124
      %s125 = sphi 0, %s122
      %s126 = sphi 0, %s125
      %s142 = sphi 0, %s126
    $region4: #{forward_train.26} parent=1 // loop_header_branch
      %12 = sbr.rel (%p10) target = $region8
    $region5: #{forward_train.26} parent=1 // loop_body
      %s14 = ssub.s32 %s9, 1
      %s15 = ssub.s32 %s9, 2
      %s25 = sadd.s32 1, %s18
      %p26 = scmp.ge.s32.totalorder %s25, 1
      %s27 = scalar_select %p26, 0, %s25
      %s28 = sadd.s32 1, %s17
      %s29 = scalar_select %p26, %s28, %s17
      %p30 = scmp.ge.s32.totalorder %s29, 4
      %s31 = scalar_select %p30, 0, %s29
      %s32 = sadd.s32 1, %s16
      %s33 = scalar_select %p30, %s32, %s16
      %p34 = scmp.ge.s32.totalorder %s33, 1
      %s35 = scalar_select %p34, 0, %s33
      %s36 = ssub.s32 %s16, %s35
      %s37 = ssub.s32 %s18, %s27
      %s38 = sor.u32 %s36, %s37
      %p39 = scmp.eq.s32.totalorder %s38, 0
      %s41 = sadd.s32 %s40, 1
      %s42 = scalar_select %p39, %s40, %s41
      %p45 = pneg %p39
      %p46 = scmp.eq.s32.totalorder %s9, 3
      %p47 = por %p45, %p46
      %p48 = scmp.ne.s32.totalorder %s40, %s43
      %p49 = scmp.eq.s32.totalorder %s9, 0
      %p50 = por %p48, %p49
      %p51 = scmp.ne.s32.totalorder %s40, %s43
      %p52 = scmp.eq.s32.totalorder %s14, 3
      %p53 = por %p51, %p52
      %p54 = scmp.ne.s32.totalorder %s43, %s44
      %p55 = scmp.eq.s32.totalorder %s14, 0
      %p56 = por %p54, %p55
      %p57 = scmp.ne.s32.totalorder %s43, %s44
      %p58 = scmp.eq.s32.totalorder %s15, 3
      %p59 = por %p57, %p58
      %p61 = scmp.ne.s32.totalorder %s44, %s60
      %p62 = scmp.eq.s32.totalorder %s15, 0
      %p63 = por %p61, %p62
      %s64 = ssub.s32 %s18, %s27
      %s65 = ssub.s32 %s17, %s31
      %s66 = sor.u32 %s64, %s65
      %p67 = scmp.eq.s32.totalorder %s66, 0
      %s69 = sadd.s32 %s68, 1
      %s70 = scalar_select %p67, %s68, %s69
      %p73 = pneg %p67
      %p74 = scmp.eq.s32.totalorder %s9, 3
      %p75 = por %p73, %p74
      %p76 = scmp.ne.s32.totalorder %s68, %s71
      %p77 = scmp.eq.s32.totalorder %s9, 0
      %p78 = por %p76, %p77
      %p79 = scmp.ne.s32.totalorder %s68, %s71
      %p80 = scmp.eq.s32.totalorder %s14, 3
      %p81 = por %p79, %p80
      %p82 = scmp.ne.s32.totalorder %s71, %s72
      %p83 = scmp.eq.s32.totalorder %s14, 0
      %p84 = por %p82, %p83
      %p85 = scmp.ne.s32.totalorder %s71, %s72
      %p86 = scmp.eq.s32.totalorder %s15, 3
      %p87 = por %p85, %p86
      %p89 = scmp.ne.s32.totalorder %s72, %s88
      %p90 = scmp.eq.s32.totalorder %s15, 0
      %p91 = por %p89, %p90
      %s92 = ssub.s32 %s17, %s31
      %p93 = scmp.eq.s32.totalorder %s92, 0
      %s95 = sadd.s32 %s94, 1
      %s96 = scalar_select %p93, %s94, %s95
      %p99 = pneg %p93
      %p100 = scmp.eq.s32.totalorder %s9, 3
      %p101 = por %p99, %p100
      %p102 = scmp.ne.s32.totalorder %s94, %s97
      %p103 = scmp.eq.s32.totalorder %s9, 0
      %p104 = por %p102, %p103
      %p105 = scmp.ne.s32.totalorder %s94, %s97
      %p106 = scmp.eq.s32.totalorder %s14, 3
      %p107 = por %p105, %p106
      %p108 = scmp.ne.s32.totalorder %s97, %s98
      %p109 = scmp.eq.s32.totalorder %s14, 0
      %p110 = por %p108, %p109
      %p111 = scmp.ne.s32.totalorder %s97, %s98
      %p112 = scmp.eq.s32.totalorder %s15, 3
      %p113 = por %p111, %p112
      %p115 = scmp.ne.s32.totalorder %s98, %s114
      %p116 = scmp.eq.s32.totalorder %s15, 0
      %p117 = por %p115, %p116
      %s118 = ssub.s32 %s16, %s35
      %s119 = ssub.s32 %s17, %s31
      %s120 = sor.u32 %s118, %s119
      %p121 = scmp.eq.s32.totalorder %s120, 0
      %s123 = sadd.s32 %s122, 1
      %s124 = scalar_select %p121, %s122, %s123
      %p127 = pneg %p121
      %p128 = scmp.eq.s32.totalorder %s9, 3
      %p129 = por %p127, %p128
      %p130 = scmp.ne.s32.totalorder %s122, %s125
      %p131 = scmp.eq.s32.totalorder %s9, 0
      %p132 = por %p130, %p131
      %p133 = scmp.ne.s32.totalorder %s122, %s125
      %p134 = scmp.eq.s32.totalorder %s14, 3
      %p135 = por %p133, %p134
      %p136 = scmp.ne.s32.totalorder %s125, %s126
      %p137 = scmp.eq.s32.totalorder %s14, 0
      %p138 = por %p136, %p137
      %p139 = scmp.ne.s32.totalorder %s125, %s126
      %p140 = scmp.eq.s32.totalorder %s15, 3
      %p141 = por %p139, %p140
      %p143 = scmp.ne.s32.totalorder %s126, %s142
      %p144 = scmp.eq.s32.totalorder %s15, 0
      %p145 = por %p143, %p144
      %p146 = scmp.le.s32.totalorder 1, %s9
      %p147 = scmp.lt.s32.totalorder %s9, 5
      %p148 = pnand %p146, %p147
      %p149 = pneg %p148
      // Predicated region
      $region9: #{forward_train.26} parent=5 // pred_check
        _
      $region10: #{forward_train.26} parent=5 // pred_check_branch
        %151 = sbr.rel (%p148) target = $region12
      $region11: #{forward_train.26} parent=5 // pred_region
        %s152 = ssub.s32 %s9, 1
        // Predicated region
        $region13: #{forward_train.26} parent=11 // pred_check
          %p153 = pneg %p56
        $region14: #{forward_train.26} parent=11 // pred_check_branch
          %155 = sbr.rel (%p153) target = $region16
        $region15: #{forward_train.26} parent=11 // pred_region
          %s156 = smul.u32 2, %s19
          %p157 = scmp.lt.s32.totalorder %s156, 1
          %s158 = scalar_select %p157, %s156, 1
          %p159 = scmp.lt.s32.totalorder %s21, 0
          %s160 = scalar_select %p159, %s21, 0
          %s161 = sadd.s32 %s160, %s158
          %s162 = smul.addr %s161, 8
          %s163 = scalar_lea.vmem %s0, %s162
          %s164 = smul.u32 2, %s19
        $region16: #{forward_train.26} parent=11 // pred_fallthru
          _
      $region12: #{forward_train.26} parent=5 // pred_fallthru
        _
      %p165 = scmp.lt.s32.totalorder %s9, 4
      // Predicated region
      $region17: #{forward_train.26} parent=5 // pred_check
        %p166 = pneg %p165
      $region18: #{forward_train.26} parent=5 // pred_check_branch
        %168 = sbr.rel (%p166) target = $region20
      $region19: #{forward_train.26} parent=5 // pred_region
        // Predicated region
        $region21: #{forward_train.26} parent=19 // pred_check
          %p169 = pneg %p78
        $region22: #{forward_train.26} parent=19 // pred_check_branch
          %171 = sbr.rel (%p169) target = $region24
        $region23: #{forward_train.26} parent=19 // pred_region
          %s172 = sand.u32 %s68, 1
          %s173 = sand.u32 %s68, 1
          %s174 = smul.addr %s173, 64
          %s175 = scalar_lea.vmem [#allocation3], %s174
          %s176 = smul.u32 4, %s18
          %s177 = smul.u32 4, %s17
          %s178 = smul.addr %s176, 16
          %s179 = sadd.s32 %s177, %s178
          %s180 = smul.addr %s179, 4
          %s181 = scalar_lea.vmem %s1, %s180
          // Predicated region
          $region25: #{forward_train.26} parent=23 // pred_check
            _
          $region26: #{forward_train.26} parent=23 // pred_check_branch
            %183 = sbr.rel (0) target = $region28
          $region27: #{forward_train.26} parent=23 // pred_region
            // Predicated region
            $region29: #{forward_train.26} parent=27 // pred_check
              _
            $region30: #{forward_train.26} parent=27 // pred_check_branch
              %185 = sbr.rel (0) target = $region32
            $region31: #{forward_train.26} parent=27 // pred_region
              loop: start=0, step=1, limit=1
              $region33: #{forward_train.26} parent=31 // loop_pre_header
                _
              $region34: #{forward_train.26} parent=31 // loop_header
                %s187 = sphi 0, %s191
                %p188 = scmp.ge.s32.totalorder %s187, 1
                %s192 = sphi %s181, %s181
                %s193 = sphi %s175, %s175
              $region35: #{forward_train.26} parent=31 // loop_header_branch
                %190 = sbr.rel (%p188) target = $region39
              $region36: #{forward_train.26} parent=31 // loop_body
                %v194 = vld [vmem:[%s192] sm:$0xff]
                %195 = vst [vmem:[%s193] sm:$0xff] %v194
                %v196 = vld [vmem:[%s192 + $0x8] sm:$0xff]
                %197 = vst [vmem:[%s193 + $0x8] sm:$0xff] %v196
                %v198 = vld [vmem:[%s192 + $0x40] sm:$0xff]
                %199 = vst [vmem:[%s193 + $0x10] sm:$0xff] %v198
                %v200 = vld [vmem:[%s192 + $0x48] sm:$0xff]
                %201 = vst [vmem:[%s193 + $0x18] sm:$0xff] %v200
                %v202 = vld [vmem:[%s192 + $0x80] sm:$0xff]
                %203 = vst [vmem:[%s193 + $0x20] sm:$0xff] %v202
                %v204 = vld [vmem:[%s192 + $0x88] sm:$0xff]
                %205 = vst [vmem:[%s193 + $0x28] sm:$0xff] %v204
                %v206 = vld [vmem:[%s192 + $0xc0] sm:$0xff]
                %207 = vst [vmem:[%s193 + $0x30] sm:$0xff] %v206
                %v208 = vld [vmem:[%s192 + $0xc8] sm:$0xff]
                %209 = vst [vmem:[%s193 + $0x38] sm:$0xff] %v208
              $region37: #{forward_train.26} parent=31 // loop_footer
                %s191 = sadd.s32 1, %s187
              $region38: #{forward_train.26} parent=31 // loop_footer_branch
                %186 = sbr.rel target = $region34
              $region39: #{forward_train.26} parent=31 // loop_exit
                _
            $region32: #{forward_train.26} parent=27 // pred_fallthru
              _
            // Predicated region
            $region40: #{forward_train.26} parent=27 // pred_check
              _
            $region41: #{forward_train.26} parent=27 // pred_check_branch
              %211 = sbr.rel target = $region43
            $region42: #{forward_train.26} parent=27 // pred_region
              _
            $region43: #{forward_train.26} parent=27 // pred_fallthru
              _
          $region28: #{forward_train.26} parent=23 // pred_fallthru
            _
          %212 = vnop
        $region24: #{forward_train.26} parent=19 // pred_fallthru
          _
        // Predicated region
        $region44: #{forward_train.26} parent=19 // pred_check
          %p213 = pneg %p104
        $region45: #{forward_train.26} parent=19 // pred_check_branch
          %215 = sbr.rel (%p213) target = $region47
        $region46: #{forward_train.26} parent=19 // pred_region
          %s216 = smul.u32 4, %s17
          %p217 = scmp.lt.s32.totalorder %s216, 15
          %s218 = scalar_select %p217, %s216, 15
          %s219 = scalar_lea.vmem %s2, %s218
          %s220 = smul.u32 4, %s17
        $region47: #{forward_train.26} parent=19 // pred_fallthru
          _
      $region20: #{forward_train.26} parent=5 // pred_fallthru
        _
      %p221 = scmp.le.s32.totalorder 1, %s9
      %p222 = scmp.lt.s32.totalorder %s9, 5
      %p223 = pnand %p221, %p222
      %p224 = pneg %p223
      // Predicated region
      $region48: #{forward_train.26} parent=5 // pred_check
        _
      $region49: #{forward_train.26} parent=5 // pred_check_branch
        %226 = sbr.rel (%p223) target = $region51
      $region50: #{forward_train.26} parent=5 // pred_region
        %s227 = ssub.s32 %s9, 1
        %s228 = sand.u32 %s71, 1
        %s229 = sand.u32 %s71, 1
        %s230 = smul.addr %s229, 64
        %s231 = scalar_lea.vmem [#allocation3], %s230
        // Predicated region
        $region52: #{forward_train.26} parent=50 // pred_check
          %p232 = pneg %p84
        $region53: #{forward_train.26} parent=50 // pred_check_branch
          %234 = sbr.rel (%p232) target = $region55
        $region54: #{forward_train.26} parent=50 // pred_region
          _
        $region55: #{forward_train.26} parent=50 // pred_fallthru
          _
        %s235 = smul.u32 2, %s19
        %p236 = scmp.lt.s32.totalorder %s235, 1
        %s237 = scalar_select %p236, %s235, 1
        %p238 = scmp.lt.s32.totalorder %s21, 0
        %s239 = scalar_select %p238, %s21, 0
        %s240 = sadd.s32 %s239, %s237
        %s241 = smul.addr %s240, 8
        %s242 = scalar_lea.vmem %s0, %s241
        %p243 = pneg %p56
        %p244 = pneg %p53
        %s245 = sand.u32 %s71, 1
        %s246 = sand.u32 %s71, 1
        %s247 = smul.addr %s246, 64
        %s248 = scalar_lea.vmem [#allocation3], %s247
        %p249 = pneg %p84
        %p250 = pneg %p81
        %s251 = smul.u32 4, %s20
        %p252 = scmp.lt.s32.totalorder %s251, 15
        %s253 = scalar_select %p252, %s251, 15
        %s254 = scalar_lea.vmem %s2, %s253
        %p255 = pneg %p110
        %p256 = pneg %p107
        %p257 = pneg %p138
        %p258 = pneg %p135
        %s259 = sand.u32 %s125, 1
        %s260 = sand.u32 %s125, 1
        %s261 = smul.addr %s260, 32
        %s262 = scalar_lea.vmem [#allocation4], %s261
        %s263 = smul.u32 2, %s19
        %p264 = scmp.lt.s32.totalorder %s263, 1
        %s265 = scalar_select %p264, %s263, 1
        %p266 = scmp.lt.s32.totalorder %s21, 0
        %s267 = scalar_select %p266, %s21, 0
        %s268 = sadd.s32 %s267, %s265
        %s269 = smul.addr %s268, 8
        %s270 = scalar_lea.vmem %s0, %s269
        %s271 = smul.u32 2, %s19
        %s272 = smul.u32 4, %s21
        %s273 = smul.u32 4, %s20
        %s274 = smul.u32 4, %s20
        %p275 = scmp.lt.s32.totalorder %s274, 15
        %s276 = scalar_select %p275, %s274, 15
        %s277 = scalar_lea.vmem %s2, %s276
        %s278 = smul.u32 4, %s20
        %s279 = smul.u32 2, %s19
        %s280 = smul.u32 4, %s20
        %p282 = scmp.eq.s32.totalorder %s21, 0
        // Predicated region
        $region56: #{forward_train.26} parent=50 // pred_check
          %p283 = pneg %p282
        $region57: #{forward_train.26} parent=50 // pred_check_branch
          %285 = sbr.rel (%p283) target = $region59
        $region58: #{forward_train.26} parent=50 // pred_region
          %286 = vst [vmem:[#allocation2] sm:$0xff] 0.0
          %287 = vst [vmem:[#allocation2 + $0x8] sm:$0xff] 0.0
          %288 = vst [vmem:[#allocation2 + $0x10] sm:$0xff] 0.0
          %289 = vst [vmem:[#allocation2 + $0x18] sm:$0xff] 0.0
          %290 = vst [vmem:[#allocation2 + $0x20] sm:$0xff] 0.0
          %291 = vst [vmem:[#allocation2 + $0x28] sm:$0xff] 0.0
          %292 = vst [vmem:[#allocation2 + $0x30] sm:$0xff] 0.0
          %293 = vst [vmem:[#allocation2 + $0x38] sm:$0xff] 0.0
        $region59: #{forward_train.26} parent=50 // pred_fallthru
          _
        %v294 = vld [vmem:[#allocation2] sm:$0xff]
        %v295 = vld [vmem:[#allocation2 + $0x8] sm:$0xff]
        %v296 = vld [vmem:[#allocation2 + $0x10] sm:$0xff]
        %v297 = vld [vmem:[#allocation2 + $0x18] sm:$0xff]
        %v298 = vld [vmem:[#allocation2 + $0x20] sm:$0xff]
        %v299 = vld [vmem:[#allocation2 + $0x28] sm:$0xff]
        %v300 = vld [vmem:[#allocation2 + $0x30] sm:$0xff]
        %v301 = vld [vmem:[#allocation2 + $0x38] sm:$0xff]
        %v302 = vld [vmem:[%s270] sm:$0xff]
        %v303 = vld [vmem:[%s270 + $0x8] sm:$0xff]
        %v304 = vpack.c.bf16 %v303, %v302
        %v305 = vld [vmem:[%s231] sm:$0xff]
        %v306 = vld [vmem:[%s231 + $0x8] sm:$0xff]
        %v307 = vld [vmem:[%s231 + $0x10] sm:$0xff]
        %v308 = vld [vmem:[%s231 + $0x18] sm:$0xff]
        %v309 = vld [vmem:[%s231 + $0x20] sm:$0xff]
        %v310 = vld [vmem:[%s231 + $0x28] sm:$0xff]
        %v311 = vld [vmem:[%s231 + $0x30] sm:$0xff]
        %v312 = vld [vmem:[%s231 + $0x38] sm:$0xff]
        %v321 = vunpack.c.l.b16 %v305
        %v322 = vunpack.c.h.b16 %v305
        %v323 = vunpack.c.l.b16 %v306
        %v324 = vunpack.c.h.b16 %v306
        %v325 = vunpack.c.l.b16 %v307
        %v326 = vunpack.c.h.b16 %v307
        %v327 = vunpack.c.l.b16 %v308
        %v328 = vunpack.c.h.b16 %v308
        %v329 = vunpack.c.l.b16 %v309
        %v330 = vunpack.c.h.b16 %v309
        %v331 = vunpack.c.l.b16 %v310
        %v332 = vunpack.c.h.b16 %v310
        %v333 = vunpack.c.l.b16 %v311
        %v334 = vunpack.c.h.b16 %v311
        %v335 = vunpack.c.l.b16 %v312
        %v336 = vunpack.c.h.b16 %v312
        %v337 = vpack.c.b16 %v325, %v321
        %v338 = vpack.c.b16 %v326, %v322
        %v339 = vpack.c.b16 %v327, %v323
        %v340 = vpack.c.b16 %v328, %v324
        %v341 = vpack.c.b16 %v333, %v329
        %v342 = vpack.c.b16 %v334, %v330
        %v343 = vpack.c.b16 %v335, %v331
        %v344 = vpack.c.b16 %v336, %v332
        %vm353 = vcmask 261120
        %v355 = vsel %vm353, %v304, 0
        %357 = vmatprep.subr.bf16.mxu0 %v338
        %358 = vmatpush1.bf16.msra.mxu0 %v337
        %359 = vmatprep.subr.bf16.mxu0 %v342
        %360 = vmatpush1.bf16.msra.mxu0 %v341
        %361 = vmatprep.subr.bf16.mxu0 0
        %362 = vmatpush1.bf16.msra.mxu0 0
        %363 = vmatprep.subr.bf16.mxu0 0
        %364 = vmatpush1.bf16.msra.mxu0 0
        %365 = vmatprep.subr.bf16.mxu0 0
        %366 = vmatpush1.bf16.msra.mxu0 0
        %367 = vmatprep.subr.bf16.mxu0 0
        %368 = vmatpush1.bf16.msra.mxu0 0
        %369 = vmatprep.subr.bf16.mxu0 0
        %370 = vmatpush1.bf16.msra.mxu0 0
        %371 = vmatprep.subr.bf16.mxu0 0
        %372 = vmatpush1.bf16.msra.mxu0 0
        %373 = vmatprep.subr.bf16.mxu0 0
        %374 = vmatpush1.bf16.msra.mxu0 0
        %375 = vmatprep.subr.bf16.mxu0 0
        %376 = vmatpush1.bf16.msra.mxu0 0
        %377 = vmatprep.subr.bf16.mxu0 0
        %378 = vmatpush1.bf16.msra.mxu0 0
        %379 = vmatprep.subr.bf16.mxu0 0
        %380 = vmatpush1.bf16.msra.mxu0 0
        %381 = vmatprep.subr.bf16.mxu0 0
        %382 = vmatpush1.bf16.msra.mxu0 0
        %383 = vmatprep.subr.bf16.mxu0 0
        %384 = vmatpush1.bf16.msra.mxu0 0
        %385 = vmatprep.subr.bf16.mxu0 0
        %386 = vmatpush1.bf16.msra.mxu0 0
        %387 = vmatprep.subr.bf16.mxu0 0
        %388 = vmatpush1.bf16.msra.mxu0 0
        %389 = vmatprep.mubr.bf16.mxu0 0
        %390 = vmatmul.mubr.bf16.gmra.mrb[0].mxu0 %v355
        %v391 = vpop.f32.mrb[0].mxu0
        %v392 = vadd.f32 0.0, %v391
        %v393 = vpop.f32.mrb[0].mxu0
        %v394 = vadd.f32 0.0, %v393
        %v395 = vpop.f32.mrb[0].mxu0
        %v396 = vadd.f32 0.0, %v395
        %v397 = vpop.f32.mrb[0].mxu0
        %v398 = vadd.f32 0.0, %v397
        %399 = vdwg.mxu0
        %400 = vmatprep.subr.bf16.mxu0 %v340
        %401 = vmatpush1.bf16.msra.mxu0 %v339
        %402 = vmatprep.subr.bf16.mxu0 %v344
        %403 = vmatpush1.bf16.msra.mxu0 %v343
        %404 = vmatprep.subr.bf16.mxu0 0
        %405 = vmatpush1.bf16.msra.mxu0 0
        %406 = vmatprep.subr.bf16.mxu0 0
        %407 = vmatpush1.bf16.msra.mxu0 0
        %408 = vmatprep.subr.bf16.mxu0 0
        %409 = vmatpush1.bf16.msra.mxu0 0
        %410 = vmatprep.subr.bf16.mxu0 0
        %411 = vmatpush1.bf16.msra.mxu0 0
        %412 = vmatprep.subr.bf16.mxu0 0
        %413 = vmatpush1.bf16.msra.mxu0 0
        %414 = vmatprep.subr.bf16.mxu0 0
        %415 = vmatpush1.bf16.msra.mxu0 0
        %416 = vmatprep.subr.bf16.mxu0 0
        %417 = vmatpush1.bf16.msra.mxu0 0
        %418 = vmatprep.subr.bf16.mxu0 0
        %419 = vmatpush1.bf16.msra.mxu0 0
        %420 = vmatprep.subr.bf16.mxu0 0
        %421 = vmatpush1.bf16.msra.mxu0 0
        %422 = vmatprep.subr.bf16.mxu0 0
        %423 = vmatpush1.bf16.msra.mxu0 0
        %424 = vmatprep.subr.bf16.mxu0 0
        %425 = vmatpush1.bf16.msra.mxu0 0
        %426 = vmatprep.subr.bf16.mxu0 0
        %427 = vmatpush1.bf16.msra.mxu0 0
        %428 = vmatprep.subr.bf16.mxu0 0
        %429 = vmatpush1.bf16.msra.mxu0 0
        %430 = vmatprep.subr.bf16.mxu0 0
        %431 = vmatpush1.bf16.msra.mxu0 0
        %432 = vmatprep.mubr.bf16.mxu0 0
        %433 = vmatmul.mubr.bf16.gmra.mrb[0].mxu0 %v355
        %v434 = vpop.f32.mrb[0].mxu0
        %v435 = vadd.f32 0.0, %v434
        %v436 = vpop.f32.mrb[0].mxu0
        %v437 = vadd.f32 0.0, %v436
        %v438 = vpop.f32.mrb[0].mxu0
        %v439 = vadd.f32 0.0, %v438
        %v440 = vpop.f32.mrb[0].mxu0
        %v441 = vadd.f32 0.0, %v440
        %442 = vdwg.mxu0
        %v443 = vadd.f32 %v294, %v392
        %v444 = vadd.f32 %v295, %v394
        %v445 = vadd.f32 %v296, %v435
        %v446 = vadd.f32 %v297, %v437
        %v447 = vadd.f32 %v298, %v396
        %v448 = vadd.f32 %v299, %v398
        %v449 = vadd.f32 %v300, %v439
        %v450 = vadd.f32 %v301, %v441
        %451 = vst [vmem:[#allocation2] sm:$0xff] %v443
        %452 = vst [vmem:[#allocation2 + $0x8] sm:$0xff] %v444
        %453 = vst [vmem:[#allocation2 + $0x10] sm:$0xff] %v445
        %454 = vst [vmem:[#allocation2 + $0x18] sm:$0xff] %v446
        %455 = vst [vmem:[#allocation2 + $0x20] sm:$0xff] %v447
        %456 = vst [vmem:[#allocation2 + $0x28] sm:$0xff] %v448
        %457 = vst [vmem:[#allocation2 + $0x30] sm:$0xff] %v449
        %458 = vst [vmem:[#allocation2 + $0x38] sm:$0xff] %v450
        // Predicated region
        $region60: #{forward_train.26} parent=50 // pred_check
          %p459 = pneg %p282
        $region61: #{forward_train.26} parent=50 // pred_check_branch
          %461 = sbr.rel (%p459) target = $region63
        $region62: #{forward_train.26} parent=50 // pred_region
          %v462 = vld [vmem:[#allocation2] sm:$0xff]
          %v463 = vld [vmem:[#allocation2 + $0x8] sm:$0xff]
          %v464 = vld [vmem:[#allocation2 + $0x10] sm:$0xff]
          %v465 = vld [vmem:[#allocation2 + $0x18] sm:$0xff]
          %v466 = vld [vmem:[#allocation2 + $0x20] sm:$0xff]
          %v467 = vld [vmem:[#allocation2 + $0x28] sm:$0xff]
          %v468 = vld [vmem:[#allocation2 + $0x30] sm:$0xff]
          %v469 = vld [vmem:[#allocation2 + $0x38] sm:$0xff]
          %v470 = vld [vmem:[%s277] sm:$0xf]
          %v472 = vlaneseq
          %v473 = vshrl.u32 %v472, 7
          %v474 = vsub.s32 0, %v473
          %v475 = vrot.slane %v470, %v474
          %v476 = vlaneseq
          %v477 = vshrl.u32 %v476, 7
          %v478 = vsub.s32 1, %v477
          %v479 = vrot.slane %v470, %v478
          %v480 = vlaneseq
          %v481 = vshrl.u32 %v480, 7
          %v482 = vsub.s32 2, %v481
          %v483 = vrot.slane %v470, %v482
          %v484 = vlaneseq
          %v485 = vshrl.u32 %v484, 7
          %v486 = vsub.s32 3, %v485
          %v487 = vrot.slane %v470, %v486
          %v492 = vadd.f32 %v462, %v475
          %v493 = vadd.f32 %v463, %v479
          %v494 = vadd.f32 %v464, %v483
          %v495 = vadd.f32 %v465, %v487
          %v496 = vadd.f32 %v466, %v475
          %v497 = vadd.f32 %v467, %v479
          %v498 = vadd.f32 %v468, %v483
          %v499 = vadd.f32 %v469, %v487
          %v500 = vmax.f32 %v492, 0.0
          %v501 = vmax.f32 %v493, 0.0
          %v502 = vmax.f32 %v494, 0.0
          %v503 = vmax.f32 %v495, 0.0
          %v504 = vmax.f32 %v496, 0.0
          %v505 = vmax.f32 %v497, 0.0
          %v506 = vmax.f32 %v498, 0.0
          %v507 = vmax.f32 %v499, 0.0
          %v508 = vpack.c.bf16 %v504, %v500
          %v509 = vpack.c.bf16 %v505, %v501
          %v510 = vpack.c.bf16 %v506, %v502
          %v511 = vpack.c.bf16 %v507, %v503
          %v516 = vunpack.c.l.b16 %v508
          %v517 = vunpack.c.l.b16 %v509
          %v518 = vunpack.c.l.b16 %v510
          %v519 = vunpack.c.l.b16 %v511
          %v520 = vunpack.c.h.b16 %v508
          %v521 = vunpack.c.h.b16 %v509
          %v522 = vunpack.c.h.b16 %v510
          %v523 = vunpack.c.h.b16 %v511
          %v524 = vpack.c.b16 %v517, %v516
          %v525 = vpack.c.b16 %v519, %v518
          %v526 = vpack.c.b16 %v521, %v520
          %v527 = vpack.c.b16 %v523, %v522
          %532 = vst [vmem:[%s262] sm:$0xff] %v524
          %533 = vst [vmem:[%s262 + $0x8] sm:$0xff] %v525
          %534 = vst [vmem:[%s262 + $0x10] sm:$0xff] %v526
          %535 = vst [vmem:[%s262 + $0x18] sm:$0xff] %v527
        $region63: #{forward_train.26} parent=50 // pred_fallthru
          _
        %s536 = sand.u32 %s125, 1
        %s537 = sand.u32 %s125, 1
        %s538 = smul.addr %s537, 32
        %s539 = scalar_lea.vmem [#allocation4], %s538
        // Predicated region
        $region64: #{forward_train.26} parent=50 // pred_check
          %p540 = pneg %p135
        $region65: #{forward_train.26} parent=50 // pred_check_branch
          %542 = sbr.rel (%p540) target = $region67
        $region66: #{forward_train.26} parent=50 // pred_region
          %s543 = smul.u32 2, %s19
          %s544 = smul.u32 4, %s20
          %s545 = smul.addr %s543, 16
          %s546 = sadd.s32 %s544, %s545
          %s547 = smul.addr %s546, 4
          %s548 = scalar_lea.vmem %s3, %s547
          // Predicated region
          $region68: #{forward_train.26} parent=66 // pred_check
            _
          $region69: #{forward_train.26} parent=66 // pred_check_branch
            %550 = sbr.rel (0) target = $region71
          $region70: #{forward_train.26} parent=66 // pred_region
            // Predicated region
            $region72: #{forward_train.26} parent=70 // pred_check
              _
            $region73: #{forward_train.26} parent=70 // pred_check_branch
              %552 = sbr.rel (0) target = $region75
            $region74: #{forward_train.26} parent=70 // pred_region
              loop: start=0, step=1, limit=1
              $region76: #{forward_train.26} parent=74 // loop_pre_header
                _
              $region77: #{forward_train.26} parent=74 // loop_header
                %s554 = sphi 0, %s558
                %p555 = scmp.ge.s32.totalorder %s554, 1
                %s559 = sphi %s539, %s539
                %s560 = sphi %s548, %s548
              $region78: #{forward_train.26} parent=74 // loop_header_branch
                %557 = sbr.rel (%p555) target = $region82
              $region79: #{forward_train.26} parent=74 // loop_body
                %v561 = vld [vmem:[%s559] sm:$0xff]
                %562 = vst [vmem:[%s560] sm:$0xff] %v561
                %v563 = vld [vmem:[%s559 + $0x8] sm:$0xff]
                %564 = vst [vmem:[%s560 + $0x8] sm:$0xff] %v563
                %v565 = vld [vmem:[%s559 + $0x10] sm:$0xff]
                %566 = vst [vmem:[%s560 + $0x40] sm:$0xff] %v565
                %v567 = vld [vmem:[%s559 + $0x18] sm:$0xff]
                %568 = vst [vmem:[%s560 + $0x48] sm:$0xff] %v567
              $region80: #{forward_train.26} parent=74 // loop_footer
                %s558 = sadd.s32 1, %s554
              $region81: #{forward_train.26} parent=74 // loop_footer_branch
                %553 = sbr.rel target = $region77
              $region82: #{forward_train.26} parent=74 // loop_exit
                _
            $region75: #{forward_train.26} parent=70 // pred_fallthru
              _
            // Predicated region
            $region83: #{forward_train.26} parent=70 // pred_check
              _
            $region84: #{forward_train.26} parent=70 // pred_check_branch
              %570 = sbr.rel target = $region86
            $region85: #{forward_train.26} parent=70 // pred_region
              _
            $region86: #{forward_train.26} parent=70 // pred_fallthru
              _
          $region71: #{forward_train.26} parent=66 // pred_fallthru
            _
          %571 = vnop
        $region67: #{forward_train.26} parent=50 // pred_fallthru
          _
      $region51: #{forward_train.26} parent=5 // pred_fallthru
        _
      %p572 = scmp.le.s32.totalorder 2, %s9
      // Predicated region
      $region87: #{forward_train.26} parent=5 // pred_check
        %p573 = pneg %p572
      $region88: #{forward_train.26} parent=5 // pred_check_branch
        %575 = sbr.rel (%p573) target = $region90
      $region89: #{forward_train.26} parent=5 // pred_region
        %s576 = ssub.s32 %s9, 2
        // Predicated region
        $region91: #{forward_train.26} parent=89 // pred_check
          %p577 = pneg %p141
        $region92: #{forward_train.26} parent=89 // pred_check_branch
          %579 = sbr.rel (%p577) target = $region94
        $region93: #{forward_train.26} parent=89 // pred_region
          %s580 = sand.u32 %s126, 1
          %s581 = sand.u32 %s126, 1
          %s582 = smul.addr %s581, 32
          %s583 = scalar_lea.vmem [#allocation4], %s582
        $region94: #{forward_train.26} parent=89 // pred_fallthru
          _
      $region90: #{forward_train.26} parent=5 // pred_fallthru
        _
    $region6: #{forward_train.26} parent=1 // loop_footer
      %s13 = sadd.s32 1, %s9
    $region7: #{forward_train.26} parent=1 // loop_footer_branch
      %8 = sbr.rel target = $region3
    $region8: #{forward_train.26} parent=1 // loop_exit
      _

// kernel: forward_train.23
$region0: #{forward_train.23}
  #allocation0 [shape = 'u32[]', space=smem, size = 0x4, offset = 0x4, fixed_abs, tag = 'smem constant byte address 0x4 - core index']
  #allocation1 [shape = 'u32[144,128]{1,0:T(1,128)}', space=vmem, size = 0x12000, scoped, tag = 'internal scratch']
  #allocation2 [shape = 'f32[16,32]{1,0:T(8,128)}', space=vmem, size = 0x2000, scoped, tag = 'scratch operand']
  %s0 = inlined_call_operand.vmem [shape: f32[16,32], index: 0, kind: input, shape index: {}]
  %s1 = inlined_call_operand.vmem [shape: bf16[2,32,32], index: 1, kind: input, shape index: {}]
  %s2 = inlined_call_operand.vmem [shape: f32[2,1,32], index: 2, kind: input, shape index: {}]
  %s3 = inlined_call_operand.vmem [shape: bf16[2,16,32], index: 3, kind: output, shape index: {}]
  %s4 = sld [smem:[#allocation0]]
  $region53: #{forward_train.23} parent=0
    _
  %s6 = ssub.s32 1, %s4
  %s7 = scalar_select 0, %s6, %s4
  loop: start=0, step=1, limit=4
  $region2: #{forward_train.23} parent=0 // loop_pre_header
    _
  $region3: #{forward_train.23} parent=0 // loop_header
    %s9 = sphi 0, %s13
    %p10 = scmp.ge.s32.totalorder %s9, 4
    %s16 = sphi 0, %s35
    %s17 = sphi 0, %s31
    %s18 = sphi 0, %s27
    %s19 = sphi 0, %s16
    %s20 = sphi 0, %s17
    %s21 = sphi 0, %s18
    %s22 = sphi 0, %s19
    %s23 = sphi 0, %s20
    %s24 = sphi 0, %s21
    %s40 = sphi 0, %s42
    %s43 = sphi 0, %s40
    %s44 = sphi 0, %s43
    %s60 = sphi 0, %s44
    %s68 = sphi 0, %s70
    %s71 = sphi 0, %s68
    %s72 = sphi 0, %s71
    %s88 = sphi 0, %s72
    %s94 = sphi 0, %s96
    %s97 = sphi 0, %s94
    %s98 = sphi 0, %s97
    %s114 = sphi 0, %s98
    %s122 = sphi 0, %s124
    %s125 = sphi 0, %s122
    %s126 = sphi 0, %s125
    %s142 = sphi 0, %s126
  $region4: #{forward_train.23} parent=0 // loop_header_branch
    %12 = sbr.rel (%p10) target = $region8
  $region5: #{forward_train.23} parent=0 // loop_body
    %s14 = ssub.s32 %s9, 1
    %s15 = ssub.s32 %s9, 2
    %s25 = sadd.s32 1, %s18
    %p26 = scmp.ge.s32.totalorder %s25, 1
    %s27 = scalar_select %p26, 0, %s25
    %s28 = sadd.s32 1, %s17
    %s29 = scalar_select %p26, %s28, %s17
    %p30 = scmp.ge.s32.totalorder %s29, 1
    %s31 = scalar_select %p30, 0, %s29
    %s32 = sadd.s32 1, %s16
    %s33 = scalar_select %p30, %s32, %s16
    %p34 = scmp.ge.s32.totalorder %s33, 2
    %s35 = scalar_select %p34, 0, %s33
    %s36 = ssub.s32 %s17, %s31
    %s37 = ssub.s32 %s18, %s27
    %s38 = sor.u32 %s36, %s37
    %p39 = scmp.eq.s32.totalorder %s38, 0
    %s41 = sadd.s32 %s40, 1
    %s42 = scalar_select %p39, %s40, %s41
    %p45 = pneg %p39
    %p46 = scmp.eq.s32.totalorder %s9, 1
    %p47 = por %p45, %p46
    %p48 = scmp.ne.s32.totalorder %s40, %s43
    %p49 = scmp.eq.s32.totalorder %s9, 0
    %p50 = por %p48, %p49
    %p51 = scmp.ne.s32.totalorder %s40, %s43
    %p52 = scmp.eq.s32.totalorder %s14, 1
    %p53 = por %p51, %p52
    %p54 = scmp.ne.s32.totalorder %s43, %s44
    %p55 = scmp.eq.s32.totalorder %s14, 0
    %p56 = por %p54, %p55
    %p57 = scmp.ne.s32.totalorder %s43, %s44
    %p58 = scmp.eq.s32.totalorder %s15, 1
    %p59 = por %p57, %p58
    %p61 = scmp.ne.s32.totalorder %s44, %s60
    %p62 = scmp.eq.s32.totalorder %s15, 0
    %p63 = por %p61, %p62
    %s64 = ssub.s32 %s16, %s35
    %s65 = ssub.s32 %s18, %s27
    %s66 = sor.u32 %s64, %s65
    %p67 = scmp.eq.s32.totalorder %s66, 0
    %s69 = sadd.s32 %s68, 1
    %s70 = scalar_select %p67, %s68, %s69
    %p73 = pneg %p67
    %p74 = scmp.eq.s32.totalorder %s9, 1
    %p75 = por %p73, %p74
    %p76 = scmp.ne.s32.totalorder %s68, %s71
    %p77 = scmp.eq.s32.totalorder %s9, 0
    %p78 = por %p76, %p77
    %p79 = scmp.ne.s32.totalorder %s68, %s71
    %p80 = scmp.eq.s32.totalorder %s14, 1
    %p81 = por %p79, %p80
    %p82 = scmp.ne.s32.totalorder %s71, %s72
    %p83 = scmp.eq.s32.totalorder %s14, 0
    %p84 = por %p82, %p83
    %p85 = scmp.ne.s32.totalorder %s71, %s72
    %p86 = scmp.eq.s32.totalorder %s15, 1
    %p87 = por %p85, %p86
    %p89 = scmp.ne.s32.totalorder %s72, %s88
    %p90 = scmp.eq.s32.totalorder %s15, 0
    %p91 = por %p89, %p90
    %s92 = ssub.s32 %s16, %s35
    %p93 = scmp.eq.s32.totalorder %s92, 0
    %s95 = sadd.s32 %s94, 1
    %s96 = scalar_select %p93, %s94, %s95
    %p99 = pneg %p93
    %p100 = scmp.eq.s32.totalorder %s9, 1
    %p101 = por %p99, %p100
    %p102 = scmp.ne.s32.totalorder %s94, %s97
    %p103 = scmp.eq.s32.totalorder %s9, 0
    %p104 = por %p102, %p103
    %p105 = scmp.ne.s32.totalorder %s94, %s97
    %p106 = scmp.eq.s32.totalorder %s14, 1
    %p107 = por %p105, %p106
    %p108 = scmp.ne.s32.totalorder %s97, %s98
    %p109 = scmp.eq.s32.totalorder %s14, 0
    %p110 = por %p108, %p109
    %p111 = scmp.ne.s32.totalorder %s97, %s98
    %p112 = scmp.eq.s32.totalorder %s15, 1
    %p113 = por %p111, %p112
    %p115 = scmp.ne.s32.totalorder %s98, %s114
    %p116 = scmp.eq.s32.totalorder %s15, 0
    %p117 = por %p115, %p116
    %s118 = ssub.s32 %s16, %s35
    %s119 = ssub.s32 %s17, %s31
    %s120 = sor.u32 %s118, %s119
    %p121 = scmp.eq.s32.totalorder %s120, 0
    %s123 = sadd.s32 %s122, 1
    %s124 = scalar_select %p121, %s122, %s123
    %p127 = pneg %p121
    %p128 = scmp.eq.s32.totalorder %s9, 1
    %p129 = por %p127, %p128
    %p130 = scmp.ne.s32.totalorder %s122, %s125
    %p131 = scmp.eq.s32.totalorder %s9, 0
    %p132 = por %p130, %p131
    %p133 = scmp.ne.s32.totalorder %s122, %s125
    %p134 = scmp.eq.s32.totalorder %s14, 1
    %p135 = por %p133, %p134
    %p136 = scmp.ne.s32.totalorder %s125, %s126
    %p137 = scmp.eq.s32.totalorder %s14, 0
    %p138 = por %p136, %p137
    %p139 = scmp.ne.s32.totalorder %s125, %s126
    %p140 = scmp.eq.s32.totalorder %s15, 1
    %p141 = por %p139, %p140
    %p143 = scmp.ne.s32.totalorder %s126, %s142
    %p144 = scmp.eq.s32.totalorder %s15, 0
    %p145 = por %p143, %p144
    %p146 = scmp.le.s32.totalorder 1, %s9
    %p147 = scmp.lt.s32.totalorder %s9, 3
    %p148 = pnand %p146, %p147
    %p149 = pneg %p148
    // Predicated region
    $region9: #{forward_train.23} parent=5 // pred_check
      _
    $region10: #{forward_train.23} parent=5 // pred_check_branch
      %151 = sbr.rel (%p148) target = $region12
    $region11: #{forward_train.23} parent=5 // pred_region
      %s152 = ssub.s32 %s9, 1
      // Predicated region
      $region13: #{forward_train.23} parent=11 // pred_check
        %p153 = pneg %p56
      $region14: #{forward_train.23} parent=11 // pred_check_branch
        %155 = sbr.rel (%p153) target = $region16
      $region15: #{forward_train.23} parent=11 // pred_region
        %s156 = smul.u32 2, %s20
        %p157 = scmp.lt.s32.totalorder %s156, 1
        %s158 = scalar_select %p157, %s156, 1
        %p159 = scmp.lt.s32.totalorder %s21, 0
        %s160 = scalar_select %p159, %s21, 0
        %s161 = sadd.s32 %s160, %s158
        %s162 = smul.addr %s161, 8
        %s163 = scalar_lea.vmem %s0, %s162
        %s164 = smul.u32 2, %s20
      $region16: #{forward_train.23} parent=11 // pred_fallthru
        _
    $region12: #{forward_train.23} parent=5 // pred_fallthru
      _
    %p165 = scmp.lt.s32.totalorder %s9, 2
    // Predicated region
    $region17: #{forward_train.23} parent=5 // pred_check
      %p166 = pneg %p165
    $region18: #{forward_train.23} parent=5 // pred_check_branch
      %168 = sbr.rel (%p166) target = $region20
    $region19: #{forward_train.23} parent=5 // pred_region
      // Predicated region
      $region21: #{forward_train.23} parent=19 // pred_check
        %p169 = pneg %p78
      $region22: #{forward_train.23} parent=19 // pred_check_branch
        %171 = sbr.rel (%p169) target = $region24
      $region23: #{forward_train.23} parent=19 // pred_region
        %s172 = smul.u32 4, %s18
        %p173 = scmp.lt.s32.totalorder %s16, 1
        %s174 = scalar_select %p173, %s16, 1
        %p175 = scmp.lt.s32.totalorder %s172, 3
        %s176 = scalar_select %p175, %s172, 3
        %s177 = smul.addr %s174, 4
        %s178 = sadd.s32 %s176, %s177
        %s179 = smul.addr %s178, 4
        %s180 = scalar_lea.vmem %s1, %s179
        %s181 = smul.u32 4, %s18
      $region24: #{forward_train.23} parent=19 // pred_fallthru
        _
      // Predicated region
      $region25: #{forward_train.23} parent=19 // pred_check
        %p182 = pneg %p104
      $region26: #{forward_train.23} parent=19 // pred_check_branch
        %184 = sbr.rel (%p182) target = $region28
      $region27: #{forward_train.23} parent=19 // pred_region
        %p185 = scmp.lt.s32.totalorder %s16, 1
        %s186 = scalar_select %p185, %s16, 1
        %s187 = scalar_lea.vmem %s2, %s186
      $region28: #{forward_train.23} parent=19 // pred_fallthru
        _
    $region20: #{forward_train.23} parent=5 // pred_fallthru
      _
    %p188 = scmp.le.s32.totalorder 1, %s9
    %p189 = scmp.lt.s32.totalorder %s9, 3
    %p190 = pnand %p188, %p189
    %p191 = pneg %p190
    // Predicated region
    $region29: #{forward_train.23} parent=5 // pred_check
      _
    $region30: #{forward_train.23} parent=5 // pred_check_branch
      %193 = sbr.rel (%p190) target = $region32
    $region31: #{forward_train.23} parent=5 // pred_region
      %s194 = ssub.s32 %s9, 1
      %s195 = smul.u32 2, %s20
      %p196 = scmp.lt.s32.totalorder %s195, 1
      %s197 = scalar_select %p196, %s195, 1
      %p198 = scmp.lt.s32.totalorder %s21, 0
      %s199 = scalar_select %p198, %s21, 0
      %s200 = sadd.s32 %s199, %s197
      %s201 = smul.addr %s200, 8
      %s202 = scalar_lea.vmem %s0, %s201
      %p203 = pneg %p56
      %p204 = pneg %p53
      %s205 = smul.u32 4, %s21
      %p206 = scmp.lt.s32.totalorder %s19, 1
      %s207 = scalar_select %p206, %s19, 1
      %p208 = scmp.lt.s32.totalorder %s205, 3
      %s209 = scalar_select %p208, %s205, 3
      %s210 = smul.addr %s207, 4
      %s211 = sadd.s32 %s209, %s210
      %s212 = smul.addr %s211, 4
      %s213 = scalar_lea.vmem %s1, %s212
      %p214 = pneg %p84
      %p215 = pneg %p81
      %p216 = scmp.lt.s32.totalorder %s19, 1
      %s217 = scalar_select %p216, %s19, 1
      %s218 = scalar_lea.vmem %s2, %s217
      %p219 = pneg %p110
      %p220 = pneg %p107
      %p221 = pneg %p138
      %p222 = pneg %p135
      %s223 = smul.u32 2, %s20
      %p224 = scmp.lt.s32.totalorder %s19, 1
      %s225 = scalar_select %p224, %s19, 1
      %p226 = scmp.lt.s32.totalorder %s223, 1
      %s227 = scalar_select %p226, %s223, 1
      %s228 = smul.addr %s225, 2
      %s229 = sadd.s32 %s227, %s228
      %s230 = smul.addr %s229, 4
      %s231 = scalar_lea.vmem %s3, %s230
      %s232 = smul.u32 2, %s20
      %p233 = scmp.lt.s32.totalorder %s232, 1
      %s234 = scalar_select %p233, %s232, 1
      %p235 = scmp.lt.s32.totalorder %s21, 0
      %s236 = scalar_select %p235, %s21, 0
      %s237 = sadd.s32 %s236, %s234
      %s238 = smul.addr %s237, 8
      %s239 = scalar_lea.vmem %s0, %s238
      %s240 = smul.u32 2, %s20
      %s241 = smul.u32 4, %s21
      %p242 = scmp.lt.s32.totalorder %s19, 1
      %s243 = scalar_select %p242, %s19, 1
      %p244 = scmp.lt.s32.totalorder %s241, 3
      %s245 = scalar_select %p244, %s241, 3
      %s246 = smul.addr %s243, 4
      %s247 = sadd.s32 %s245, %s246
      %s248 = smul.addr %s247, 4
      %s249 = scalar_lea.vmem %s1, %s248
      %s250 = smul.u32 4, %s21
      %p251 = scmp.lt.s32.totalorder %s19, 1
      %s252 = scalar_select %p251, %s19, 1
      %s253 = scalar_lea.vmem %s2, %s252
      %s254 = smul.u32 2, %s20
      %p255 = scmp.lt.s32.totalorder %s19, 1
      %s256 = scalar_select %p255, %s19, 1
      %p257 = scmp.lt.s32.totalorder %s254, 1
      %s258 = scalar_select %p257, %s254, 1
      %s259 = smul.addr %s256, 2
      %s260 = sadd.s32 %s258, %s259
      %s261 = smul.addr %s260, 4
      %s262 = scalar_lea.vmem %s3, %s261
      %s263 = smul.u32 2, %s20
      %p265 = scmp.eq.s32.totalorder %s21, 0
      // Predicated region
      $region33: #{forward_train.23} parent=31 // pred_check
        %p266 = pneg %p265
      $region34: #{forward_train.23} parent=31 // pred_check_branch
        %268 = sbr.rel (%p266) target = $region36
      $region35: #{forward_train.23} parent=31 // pred_region
        %vm269 = vcmask 261120
        %270 = vst.msk [vmem:[#allocation2] sm:$0xff] %vm269, 0.0
        %271 = vst.msk [vmem:[#allocation2 + $0x8] sm:$0xff] %vm269, 0.0
      $region36: #{forward_train.23} parent=31 // pred_fallthru
        _
      %v272 = vld [vmem:[#allocation2] sm:$0xff]
      %v273 = vld [vmem:[#allocation2 + $0x8] sm:$0xff]
      %v274 = vld [vmem:[%s239] sm:$0xff]
      %v275 = vld [vmem:[%s239 + $0x8] sm:$0xff]
      %v276 = vpack.c.bf16 %v275, %v274
      %v277 = vld [vmem:[%s249] sm:$0xf]
      %v278 = vld [vmem:[%s249 + $0x4] sm:$0xf]
      %v279 = vld [vmem:[%s249 + $0x8] sm:$0xf]
      %v280 = vld [vmem:[%s249 + $0xc] sm:$0xf]
      %v285 = vunpack.c.l.b16 %v277
      %v286 = vunpack.c.l.b16 %v278
      %v287 = vunpack.c.l.b16 %v279
      %v288 = vunpack.c.l.b16 %v280
      %v289 = vpack.c.b16 %v286, %v285
      %v290 = vpack.c.b16 %v288, %v287
      %vm293 = vcmask 261120
      %v295 = vsel %vm293, %v276, 0
      %297 = vmatprep.subr.bf16.mxu0 0
      %298 = vmatpush1.bf16.msra.mxu0 %v289
      %299 = vmatprep.subr.bf16.mxu0 0
      %300 = vmatpush1.bf16.msra.mxu0 %v290
      %301 = vmatprep.subr.bf16.mxu0 0
      %302 = vmatpush1.bf16.msra.mxu0 0
      %303 = vmatprep.subr.bf16.mxu0 0
      %304 = vmatpush1.bf16.msra.mxu0 0
      %305 = vmatprep.subr.bf16.mxu0 0
      %306 = vmatpush1.bf16.msra.mxu0 0
      %307 = vmatprep.subr.bf16.mxu0 0
      %308 = vmatpush1.bf16.msra.mxu0 0
      %309 = vmatprep.subr.bf16.mxu0 0
      %310 = vmatpush1.bf16.msra.mxu0 0
      %311 = vmatprep.subr.bf16.mxu0 0
      %312 = vmatpush1.bf16.msra.mxu0 0
      %313 = vmatprep.subr.bf16.mxu0 0
      %314 = vmatpush1.bf16.msra.mxu0 0
      %315 = vmatprep.subr.bf16.mxu0 0
      %316 = vmatpush1.bf16.msra.mxu0 0
      %317 = vmatprep.subr.bf16.mxu0 0
      %318 = vmatpush1.bf16.msra.mxu0 0
      %319 = vmatprep.subr.bf16.mxu0 0
      %320 = vmatpush1.bf16.msra.mxu0 0
      %321 = vmatprep.subr.bf16.mxu0 0
      %322 = vmatpush1.bf16.msra.mxu0 0
      %323 = vmatprep.subr.bf16.mxu0 0
      %324 = vmatpush1.bf16.msra.mxu0 0
      %325 = vmatprep.subr.bf16.mxu0 0
      %326 = vmatpush1.bf16.msra.mxu0 0
      %327 = vmatprep.subr.bf16.mxu0 0
      %328 = vmatpush1.bf16.msra.mxu0 0
      %329 = vmatprep.mubr.bf16.mxu0 0
      %330 = vmatmul.mubr.bf16.gmra.mrb[0].mxu0 %v295
      %v331 = vpop.f32.mrb[0].mxu0
      %v332 = vadd.f32 0.0, %v331
      %v333 = vpop.f32.mrb[0].mxu0
      %v334 = vpop.f32.mrb[0].mxu0
      %v335 = vadd.f32 0.0, %v334
      %v336 = vpop.f32.mrb[0].mxu0
      %337 = vdwg.mxu0
      %v338 = vadd.f32 %v272, %v332
      %v339 = vadd.f32 %v273, %v335
      %340 = vst.msk [vmem:[#allocation2] sm:$0xff] %vm293, %v338
      %341 = vst.msk [vmem:[#allocation2 + $0x8] sm:$0xff] %vm293, %v339
      // Predicated region
      $region37: #{forward_train.23} parent=31 // pred_check
        %p342 = pneg %p265
      $region38: #{forward_train.23} parent=31 // pred_check_branch
        %344 = sbr.rel (%p342) target = $region40
      $region39: #{forward_train.23} parent=31 // pred_region
        %v345 = vld [vmem:[#allocation2] sm:$0xff]
        %v346 = vld [vmem:[#allocation2 + $0x8] sm:$0xff]
        %v347 = vld [vmem:[%s253] sm:$0x1]
        %v349 = vlaneseq
        %v350 = vshrl.u32 %v349, 7
        %v351 = vsub.s32 0, %v350
        %v352 = vrot.slane %v347, %v351
        %v354 = vadd.f32 %v345, %v352
        %v355 = vadd.f32 %v346, %v352
        %v356 = vpack.c.bf16 %v355, %v354
        %v358 = vunpack.c.l.b16 %v356
        %v359 = vunpack.c.h.b16 %v356
        %v360 = vpack.c.b16 %v358, %v358
        %v361 = vpack.c.b16 %v359, %v359
        %vm364 = vcmask 257024
        %365 = vst.msk [vmem:[%s262] sm:$0xf] %vm364, %v360
        %366 = vst.msk [vmem:[%s262 + $0x4] sm:$0xf] %vm364, %v361
      $region40: #{forward_train.23} parent=31 // pred_fallthru
        _
      %s367 = smul.u32 2, %s20
      %p368 = scmp.lt.s32.totalorder %s19, 1
      %s369 = scalar_select %p368, %s19, 1
      %p370 = scmp.lt.s32.totalorder %s367, 1
      %s371 = scalar_select %p370, %s367, 1
      %s372 = smul.addr %s369, 2
      %s373 = sadd.s32 %s371, %s372
      %s374 = smul.addr %s373, 4
      %s375 = scalar_lea.vmem %s3, %s374
      // Predicated region
      $region41: #{forward_train.23} parent=31 // pred_check
        %p376 = pneg %p135
      $region42: #{forward_train.23} parent=31 // pred_check_branch
        %378 = sbr.rel (%p376) target = $region44
      $region43: #{forward_train.23} parent=31 // pred_region
        %s379 = smul.u32 2, %s20
      $region44: #{forward_train.23} parent=31 // pred_fallthru
        _
    $region32: #{forward_train.23} parent=5 // pred_fallthru
      _
    %p380 = scmp.le.s32.totalorder 2, %s9
    // Predicated region
    $region45: #{forward_train.23} parent=5 // pred_check
      %p381 = pneg %p380
    $region46: #{forward_train.23} parent=5 // pred_check_branch
      %383 = sbr.rel (%p381) target = $region48
    $region47: #{forward_train.23} parent=5 // pred_region
      %s384 = ssub.s32 %s9, 2
      // Predicated region
      $region49: #{forward_train.23} parent=47 // pred_check
        %p385 = pneg %p141
      $region50: #{forward_train.23} parent=47 // pred_check_branch
        %387 = sbr.rel (%p385) target = $region52
      $region51: #{forward_train.23} parent=47 // pred_region
        %s388 = smul.u32 2, %s23
        %p389 = scmp.lt.s32.totalorder %s22, 1
        %s390 = scalar_select %p389, %s22, 1
        %p391 = scmp.lt.s32.totalorder %s388, 1
        %s392 = scalar_select %p391, %s388, 1
        %s393 = smul.addr %s390, 2
        %s394 = sadd.s32 %s392, %s393
        %s395 = smul.addr %s394, 4
        %s396 = scalar_lea.vmem %s3, %s395
      $region52: #{forward_train.23} parent=47 // pred_fallthru
        _
    $region48: #{forward_train.23} parent=5 // pred_fallthru
      _
  $region6: #{forward_train.23} parent=0 // loop_footer
    %s13 = sadd.s32 1, %s9
  $region7: #{forward_train.23} parent=0 // loop_footer_branch
    %8 = sbr.rel target = $region3
  $region8: #{forward_train.23} parent=0 // loop_exit
    _

// kernel: forward_train.24
$region0: #{forward_train.24}
  #allocation0 [shape = 'u32[]', space=smem, size = 0x4, offset = 0x4, fixed_abs, tag = 'smem constant byte address 0x4 - core index']
  #allocation1 [shape = 'u32[144,128]{1,0:T(1,128)}', space=vmem, size = 0x12000, scoped, tag = 'internal scratch']
  %s0 = inlined_call_operand.vmem [shape: bf16[1,2,8,32], index: 0, kind: input, shape index: {}]
  %s1 = inlined_call_operand.vmem [shape: bf16[2,2,8,32], index: 1, kind: input, shape index: {}, may-alias: {1,2}]
  %s2 = inlined_call_operand.vmem [shape: bf16[2,2,8,32], index: 2, kind: input, shape index: {}, may-alias: {1,2}]
  %s3 = inlined_call_operand.vmem [shape: f32[2,1,8], index: 3, kind: input, shape index: {}]
  %s4 = inlined_call_operand.vmem [shape: bf16[2,8,32], index: 4, kind: output, shape index: {}]
  %s5 = sld [smem:[#allocation0]]
  $region49: #{forward_train.24} parent=0
    _
  %s7 = ssub.s32 1, %s5
  %s8 = scalar_select 0, %s7, %s5
  loop: start=0, step=1, limit=4
  $region2: #{forward_train.24} parent=0 // loop_pre_header
    _
  $region3: #{forward_train.24} parent=0 // loop_header
    %s10 = sphi 0, %s14
    %p11 = scmp.ge.s32.totalorder %s10, 4
    %s17 = sphi 0, %s29
    %s18 = sphi 0, %s25
    %s19 = sphi 0, %s17
    %s20 = sphi 0, %s18
    %s21 = sphi 0, %s19
    %s22 = sphi 0, %s20
    %s34 = sphi 0, %s36
    %s37 = sphi 0, %s34
    %s38 = sphi 0, %s37
    %s54 = sphi 0, %s38
    %s60 = sphi 0, %s62
    %s63 = sphi 0, %s60
    %s64 = sphi 0, %s63
    %s80 = sphi 0, %s64
    %s86 = sphi 0, %s88
    %s89 = sphi 0, %s86
    %s90 = sphi 0, %s89
    %s106 = sphi 0, %s90
    %s112 = sphi 0, %s114
    %s115 = sphi 0, %s112
    %s116 = sphi 0, %s115
    %s132 = sphi 0, %s116
    %s140 = sphi 0, %s142
    %s143 = sphi 0, %s140
    %s144 = sphi 0, %s143
    %s160 = sphi 0, %s144
  $region4: #{forward_train.24} parent=0 // loop_header_branch
    %13 = sbr.rel (%p11) target = $region8
  $region5: #{forward_train.24} parent=0 // loop_body
    %s15 = ssub.s32 %s10, 1
    %s16 = ssub.s32 %s10, 2
    %s23 = sadd.s32 1, %s18
    %p24 = scmp.ge.s32.totalorder %s23, 1
    %s25 = scalar_select %p24, 0, %s23
    %s26 = sadd.s32 1, %s17
    %s27 = scalar_select %p24, %s26, %s17
    %p28 = scmp.ge.s32.totalorder %s27, 2
    %s29 = scalar_select %p28, 0, %s27
    %s30 = ssub.s32 %s17, %s29
    %s31 = ssub.s32 %s18, %s25
    %s32 = sor.u32 %s30, %s31
    %p33 = scmp.eq.s32.totalorder %s32, 0
    %s35 = sadd.s32 %s34, 1
    %s36 = scalar_select %p33, %s34, %s35
    %p39 = pneg %p33
    %p40 = scmp.eq.s32.totalorder %s10, 1
    %p41 = por %p39, %p40
    %p42 = scmp.ne.s32.totalorder %s34, %s37
    %p43 = scmp.eq.s32.totalorder %s10, 0
    %p44 = por %p42, %p43
    %p45 = scmp.ne.s32.totalorder %s34, %s37
    %p46 = scmp.eq.s32.totalorder %s15, 1
    %p47 = por %p45, %p46
    %p48 = scmp.ne.s32.totalorder %s37, %s38
    %p49 = scmp.eq.s32.totalorder %s15, 0
    %p50 = por %p48, %p49
    %p51 = scmp.ne.s32.totalorder %s37, %s38
    %p52 = scmp.eq.s32.totalorder %s16, 1
    %p53 = por %p51, %p52
    %p55 = scmp.ne.s32.totalorder %s38, %s54
    %p56 = scmp.eq.s32.totalorder %s16, 0
    %p57 = por %p55, %p56
    %s58 = ssub.s32 %s17, %s29
    %p59 = scmp.eq.s32.totalorder %s58, 0
    %s61 = sadd.s32 %s60, 1
    %s62 = scalar_select %p59, %s60, %s61
    %p65 = pneg %p59
    %p66 = scmp.eq.s32.totalorder %s10, 1
    %p67 = por %p65, %p66
    %p68 = scmp.ne.s32.totalorder %s60, %s63
    %p69 = scmp.eq.s32.totalorder %s10, 0
    %p70 = por %p68, %p69
    %p71 = scmp.ne.s32.totalorder %s60, %s63
    %p72 = scmp.eq.s32.totalorder %s15, 1
    %p73 = por %p71, %p72
    %p74 = scmp.ne.s32.totalorder %s63, %s64
    %p75 = scmp.eq.s32.totalorder %s15, 0
    %p76 = por %p74, %p75
    %p77 = scmp.ne.s32.totalorder %s63, %s64
    %p78 = scmp.eq.s32.totalorder %s16, 1
    %p79 = por %p77, %p78
    %p81 = scmp.ne.s32.totalorder %s64, %s80
    %p82 = scmp.eq.s32.totalorder %s16, 0
    %p83 = por %p81, %p82
    %s84 = ssub.s32 %s17, %s29
    %p85 = scmp.eq.s32.totalorder %s84, 0
    %s87 = sadd.s32 %s86, 1
    %s88 = scalar_select %p85, %s86, %s87
    %p91 = pneg %p85
    %p92 = scmp.eq.s32.totalorder %s10, 1
    %p93 = por %p91, %p92
    %p94 = scmp.ne.s32.totalorder %s86, %s89
    %p95 = scmp.eq.s32.totalorder %s10, 0
    %p96 = por %p94, %p95
    %p97 = scmp.ne.s32.totalorder %s86, %s89
    %p98 = scmp.eq.s32.totalorder %s15, 1
    %p99 = por %p97, %p98
    %p100 = scmp.ne.s32.totalorder %s89, %s90
    %p101 = scmp.eq.s32.totalorder %s15, 0
    %p102 = por %p100, %p101
    %p103 = scmp.ne.s32.totalorder %s89, %s90
    %p104 = scmp.eq.s32.totalorder %s16, 1
    %p105 = por %p103, %p104
    %p107 = scmp.ne.s32.totalorder %s90, %s106
    %p108 = scmp.eq.s32.totalorder %s16, 0
    %p109 = por %p107, %p108
    %s110 = ssub.s32 %s17, %s29
    %p111 = scmp.eq.s32.totalorder %s110, 0
    %s113 = sadd.s32 %s112, 1
    %s114 = scalar_select %p111, %s112, %s113
    %p117 = pneg %p111
    %p118 = scmp.eq.s32.totalorder %s10, 1
    %p119 = por %p117, %p118
    %p120 = scmp.ne.s32.totalorder %s112, %s115
    %p121 = scmp.eq.s32.totalorder %s10, 0
    %p122 = por %p120, %p121
    %p123 = scmp.ne.s32.totalorder %s112, %s115
    %p124 = scmp.eq.s32.totalorder %s15, 1
    %p125 = por %p123, %p124
    %p126 = scmp.ne.s32.totalorder %s115, %s116
    %p127 = scmp.eq.s32.totalorder %s15, 0
    %p128 = por %p126, %p127
    %p129 = scmp.ne.s32.totalorder %s115, %s116
    %p130 = scmp.eq.s32.totalorder %s16, 1
    %p131 = por %p129, %p130
    %p133 = scmp.ne.s32.totalorder %s116, %s132
    %p134 = scmp.eq.s32.totalorder %s16, 0
    %p135 = por %p133, %p134
    %s136 = ssub.s32 %s17, %s29
    %s137 = ssub.s32 %s18, %s25
    %s138 = sor.u32 %s136, %s137
    %p139 = scmp.eq.s32.totalorder %s138, 0
    %s141 = sadd.s32 %s140, 1
    %s142 = scalar_select %p139, %s140, %s141
    %p145 = pneg %p139
    %p146 = scmp.eq.s32.totalorder %s10, 1
    %p147 = por %p145, %p146
    %p148 = scmp.ne.s32.totalorder %s140, %s143
    %p149 = scmp.eq.s32.totalorder %s10, 0
    %p150 = por %p148, %p149
    %p151 = scmp.ne.s32.totalorder %s140, %s143
    %p152 = scmp.eq.s32.totalorder %s15, 1
    %p153 = por %p151, %p152
    %p154 = scmp.ne.s32.totalorder %s143, %s144
    %p155 = scmp.eq.s32.totalorder %s15, 0
    %p156 = por %p154, %p155
    %p157 = scmp.ne.s32.totalorder %s143, %s144
    %p158 = scmp.eq.s32.totalorder %s16, 1
    %p159 = por %p157, %p158
    %p161 = scmp.ne.s32.totalorder %s144, %s160
    %p162 = scmp.eq.s32.totalorder %s16, 0
    %p163 = por %p161, %p162
    %p164 = scmp.le.s32.totalorder 1, %s10
    %p165 = scmp.lt.s32.totalorder %s10, 3
    %p166 = pnand %p164, %p165
    %p167 = pneg %p166
    // Predicated region
    $region9: #{forward_train.24} parent=5 // pred_check
      _
    $region10: #{forward_train.24} parent=5 // pred_check_branch
      %169 = sbr.rel (%p166) target = $region12
    $region11: #{forward_train.24} parent=5 // pred_region
      %s170 = ssub.s32 %s10, 1
    $region12: #{forward_train.24} parent=5 // pred_fallthru
      _
    %p171 = scmp.lt.s32.totalorder %s10, 2
    // Predicated region
    $region13: #{forward_train.24} parent=5 // pred_check
      %p172 = pneg %p171
    $region14: #{forward_train.24} parent=5 // pred_check_branch
      %174 = sbr.rel (%p172) target = $region16
    $region15: #{forward_train.24} parent=5 // pred_region
      // Predicated region
      $region17: #{forward_train.24} parent=15 // pred_check
        %p175 = pneg %p44
      $region18: #{forward_train.24} parent=15 // pred_check_branch
        %177 = sbr.rel (%p175) target = $region20
      $region19: #{forward_train.24} parent=15 // pred_region
        %p178 = scmp.lt.s32.totalorder %s17, 1
        %s179 = scalar_select %p178, %s17, 1
        %p180 = scmp.lt.s32.totalorder %s18, 0
        %s181 = scalar_select %p180, %s18, 0
        %s182 = sadd.s32 %s181, %s179
        %s183 = smul.addr %s182, 4
        %s184 = scalar_lea.vmem %s0, %s183
      $region20: #{forward_train.24} parent=15 // pred_fallthru
        _
      // Predicated region
      $region21: #{forward_train.24} parent=15 // pred_check
        %p185 = pneg %p70
      $region22: #{forward_train.24} parent=15 // pred_check_branch
        %187 = sbr.rel (%p185) target = $region24
      $region23: #{forward_train.24} parent=15 // pred_region
        %p188 = scmp.lt.s32.totalorder %s17, 1
        %s189 = scalar_select %p188, %s17, 1
        %s190 = smul.addr %s189, 4
        %s191 = scalar_lea.vmem %s1, %s190
      $region24: #{forward_train.24} parent=15 // pred_fallthru
        _
      // Predicated region
      $region25: #{forward_train.24} parent=15 // pred_check
        %p192 = pneg %p96
      $region26: #{forward_train.24} parent=15 // pred_check_branch
        %194 = sbr.rel (%p192) target = $region28
      $region27: #{forward_train.24} parent=15 // pred_region
        %p195 = scmp.lt.s32.totalorder %s17, 1
        %s196 = scalar_select %p195, %s17, 1
        %s197 = sadd.s32 %s196, 2
        %s198 = smul.addr %s197, 4
        %s199 = scalar_lea.vmem %s2, %s198
      $region28: #{forward_train.24} parent=15 // pred_fallthru
        _
      // Predicated region
      $region29: #{forward_train.24} parent=15 // pred_check
        %p200 = pneg %p122
      $region30: #{forward_train.24} parent=15 // pred_check_branch
        %202 = sbr.rel (%p200) target = $region32
      $region31: #{forward_train.24} parent=15 // pred_region
        %p203 = scmp.lt.s32.totalorder %s17, 1
        %s204 = scalar_select %p203, %s17, 1
        %s205 = scalar_lea.vmem %s3, %s204
      $region32: #{forward_train.24} parent=15 // pred_fallthru
        _
    $region16: #{forward_train.24} parent=5 // pred_fallthru
      _
    %p206 = scmp.le.s32.totalorder 1, %s10
    %p207 = scmp.lt.s32.totalorder %s10, 3
    %p208 = pnand %p206, %p207
    %p209 = pneg %p208
    // Predicated region
    $region33: #{forward_train.24} parent=5 // pred_check
      _
    $region34: #{forward_train.24} parent=5 // pred_check_branch
      %211 = sbr.rel (%p208) target = $region36
    $region35: #{forward_train.24} parent=5 // pred_region
      %s212 = ssub.s32 %s10, 1
      %p213 = scmp.lt.s32.totalorder %s19, 1
      %s214 = scalar_select %p213, %s19, 1
      %p215 = scmp.lt.s32.totalorder %s20, 0
      %s216 = scalar_select %p215, %s20, 0
      %s217 = sadd.s32 %s216, %s214
      %s218 = smul.addr %s217, 4
      %s219 = scalar_lea.vmem %s0, %s218
      %p220 = pneg %p50
      %p221 = pneg %p47
      %p222 = scmp.lt.s32.totalorder %s19, 1
      %s223 = scalar_select %p222, %s19, 1
      %s224 = smul.addr %s223, 4
      %s225 = scalar_lea.vmem %s1, %s224
      %p226 = pneg %p76
      %p227 = pneg %p73
      %p228 = scmp.lt.s32.totalorder %s19, 1
      %s229 = scalar_select %p228, %s19, 1
      %s230 = sadd.s32 %s229, 2
      %s231 = smul.addr %s230, 4
      %s232 = scalar_lea.vmem %s2, %s231
      %p233 = pneg %p102
      %p234 = pneg %p99
      %p235 = scmp.lt.s32.totalorder %s19, 1
      %s236 = scalar_select %p235, %s19, 1
      %s237 = scalar_lea.vmem %s3, %s236
      %p238 = pneg %p128
      %p239 = pneg %p125
      %p240 = pneg %p156
      %p241 = pneg %p153
      %p242 = scmp.lt.s32.totalorder %s19, 1
      %s243 = scalar_select %p242, %s19, 1
      %p244 = scmp.lt.s32.totalorder %s20, 0
      %s245 = scalar_select %p244, %s20, 0
      %s246 = sadd.s32 %s245, %s243
      %s247 = smul.addr %s246, 4
      %s248 = scalar_lea.vmem %s4, %s247
      %p249 = scmp.lt.s32.totalorder %s19, 1
      %s250 = scalar_select %p249, %s19, 1
      %p251 = scmp.lt.s32.totalorder %s20, 0
      %s252 = scalar_select %p251, %s20, 0
      %s253 = sadd.s32 %s252, %s250
      %s254 = smul.addr %s253, 4
      %s255 = scalar_lea.vmem %s0, %s254
      %p256 = scmp.lt.s32.totalorder %s19, 1
      %s257 = scalar_select %p256, %s19, 1
      %s258 = smul.addr %s257, 4
      %s259 = scalar_lea.vmem %s1, %s258
      %p260 = scmp.lt.s32.totalorder %s19, 1
      %s261 = scalar_select %p260, %s19, 1
      %s262 = sadd.s32 %s261, 2
      %s263 = smul.addr %s262, 4
      %s264 = scalar_lea.vmem %s2, %s263
      %p265 = scmp.lt.s32.totalorder %s19, 1
      %s266 = scalar_select %p265, %s19, 1
      %s267 = scalar_lea.vmem %s3, %s266
      %p268 = scmp.lt.s32.totalorder %s19, 1
      %s269 = scalar_select %p268, %s19, 1
      %p270 = scmp.lt.s32.totalorder %s20, 0
      %s271 = scalar_select %p270, %s20, 0
      %s272 = sadd.s32 %s271, %s269
      %s273 = smul.addr %s272, 4
      %s274 = scalar_lea.vmem %s4, %s273
      %v276 = vld [vmem:[%s255] sm:$0xf]
      %v277 = vld [vmem:[%s259] sm:$0xf]
      %v278 = vld [vmem:[%s264] sm:$0xf]
      %v279 = vld [vmem:[%s267] sm:$0x1]
      %281 = vrot.lane.b32.xlu0 %v276, 120
      %v282 = vpop.permute.xlu0 %281
      %283 = vrot.lane.b32.xlu0 %v276, 112
      %v284 = vpop.permute.xlu0 %283
      %285 = vrot.lane.b32.xlu0 %v276, 104
      %v286 = vpop.permute.xlu0 %285
      %288 = vrot.lane.b32.xlu0 %v277, 120
      %v289 = vpop.permute.xlu0 %288
      %290 = vrot.lane.b32.xlu0 %v277, 112
      %v291 = vpop.permute.xlu0 %290
      %292 = vrot.lane.b32.xlu0 %v277, 104
      %v293 = vpop.permute.xlu0 %292
      %295 = vrot.lane.b32.xlu0 %v278, 120
      %v296 = vpop.permute.xlu0 %295
      %297 = vrot.lane.b32.xlu0 %v278, 112
      %v298 = vpop.permute.xlu0 %297
      %299 = vrot.lane.b32.xlu0 %v278, 104
      %v300 = vpop.permute.xlu0 %299
      %vm301 = vcmask 64512
      %v303 = vsel %vm301, %v276, 0
      %v306 = vsel %vm301, %v277, 0
      %308 = vmatprep.subr.bf16.mxu0 0
      %309 = vmatpush1.bf16.xpose.msra.mxu0 %v306
      %310 = vmatprep.subr.bf16.mxu0 0
      %311 = vmatpush1.bf16.xpose.msra.mxu0 0
      %312 = vmatprep.subr.bf16.mxu0 0
      %313 = vmatpush1.bf16.xpose.msra.mxu0 0
      %314 = vmatprep.subr.bf16.mxu0 0
      %315 = vmatpush1.bf16.xpose.msra.mxu0 0
      %316 = vmatprep.subr.bf16.mxu0 0
      %317 = vmatpush1.bf16.xpose.msra.mxu0 0
      %318 = vmatprep.subr.bf16.mxu0 0
      %319 = vmatpush1.bf16.xpose.msra.mxu0 0
      %320 = vmatprep.subr.bf16.mxu0 0
      %321 = vmatpush1.bf16.xpose.msra.mxu0 0
      %322 = vmatprep.subr.bf16.mxu0 0
      %323 = vmatpush1.bf16.xpose.msra.mxu0 0
      %324 = vmatprep.subr.bf16.mxu0 0
      %325 = vmatpush1.bf16.xpose.msra.mxu0 0
      %326 = vmatprep.subr.bf16.mxu0 0
      %327 = vmatpush1.bf16.xpose.msra.mxu0 0
      %328 = vmatprep.subr.bf16.mxu0 0
      %329 = vmatpush1.bf16.xpose.msra.mxu0 0
      %330 = vmatprep.subr.bf16.mxu0 0
      %331 = vmatpush1.bf16.xpose.msra.mxu0 0
      %332 = vmatprep.subr.bf16.mxu0 0
      %333 = vmatpush1.bf16.xpose.msra.mxu0 0
      %334 = vmatprep.subr.bf16.mxu0 0
      %335 = vmatpush1.bf16.xpose.msra.mxu0 0
      %336 = vmatprep.subr.bf16.mxu0 0
      %337 = vmatpush1.bf16.xpose.msra.mxu0 0
      %338 = vmatprep.subr.bf16.mxu0 0
      %339 = vmatpush1.bf16.xpose.msra.mxu0 0
      %340 = vmatprep.mubr.bf16.mxu0 0
      %341 = vmatmul.mubr.bf16.gmra.mrb[0].mxu0 %v303
      %v342 = vpop.f32.mrb[0].mxu0
      %v343 = vadd.f32 0.0, %v342
      %v344 = vpop.f32.mrb[0].mxu0
      %v345 = vpop.f32.mrb[0].mxu0
      %v346 = vpop.f32.mrb[0].mxu0
      %347 = vdwg.mxu0
      %v349 = vsel %vm301, %v282, 0
      %v352 = vsel %vm301, %v289, 0
      %354 = vmatprep.subr.bf16.mxu0 0
      %355 = vmatpush1.bf16.xpose.msra.mxu0 %v352
      %356 = vmatprep.subr.bf16.mxu0 0
      %357 = vmatpush1.bf16.xpose.msra.mxu0 0
      %358 = vmatprep.subr.bf16.mxu0 0
      %359 = vmatpush1.bf16.xpose.msra.mxu0 0
      %360 = vmatprep.subr.bf16.mxu0 0
      %361 = vmatpush1.bf16.xpose.msra.mxu0 0
      %362 = vmatprep.subr.bf16.mxu0 0
      %363 = vmatpush1.bf16.xpose.msra.mxu0 0
      %364 = vmatprep.subr.bf16.mxu0 0
      %365 = vmatpush1.bf16.xpose.msra.mxu0 0
      %366 = vmatprep.subr.bf16.mxu0 0
      %367 = vmatpush1.bf16.xpose.msra.mxu0 0
      %368 = vmatprep.subr.bf16.mxu0 0
      %369 = vmatpush1.bf16.xpose.msra.mxu0 0
      %370 = vmatprep.subr.bf16.mxu0 0
      %371 = vmatpush1.bf16.xpose.msra.mxu0 0
      %372 = vmatprep.subr.bf16.mxu0 0
      %373 = vmatpush1.bf16.xpose.msra.mxu0 0
      %374 = vmatprep.subr.bf16.mxu0 0
      %375 = vmatpush1.bf16.xpose.msra.mxu0 0
      %376 = vmatprep.subr.bf16.mxu0 0
      %377 = vmatpush1.bf16.xpose.msra.mxu0 0
      %378 = vmatprep.subr.bf16.mxu0 0
      %379 = vmatpush1.bf16.xpose.msra.mxu0 0
      %380 = vmatprep.subr.bf16.mxu0 0
      %381 = vmatpush1.bf16.xpose.msra.mxu0 0
      %382 = vmatprep.subr.bf16.mxu0 0
      %383 = vmatpush1.bf16.xpose.msra.mxu0 0
      %384 = vmatprep.subr.bf16.mxu0 0
      %385 = vmatpush1.bf16.xpose.msra.mxu0 0
      %386 = vmatprep.mubr.bf16.mxu0 0
      %387 = vmatmul.mubr.bf16.gmra.mrb[0].mxu0 %v349
      %v388 = vpop.f32.mrb[0].mxu0
      %v389 = vadd.f32 0.0, %v388
      %v390 = vpop.f32.mrb[0].mxu0
      %v391 = vpop.f32.mrb[0].mxu0
      %v392 = vpop.f32.mrb[0].mxu0
      %393 = vdwg.mxu0
      %v395 = vsel %vm301, %v284, 0
      %v398 = vsel %vm301, %v291, 0
      %400 = vmatprep.subr.bf16.mxu0 0
      %401 = vmatpush1.bf16.xpose.msra.mxu0 %v398
      %402 = vmatprep.subr.bf16.mxu0 0
      %403 = vmatpush1.bf16.xpose.msra.mxu0 0
      %404 = vmatprep.subr.bf16.mxu0 0
      %405 = vmatpush1.bf16.xpose.msra.mxu0 0
      %406 = vmatprep.subr.bf16.mxu0 0
      %407 = vmatpush1.bf16.xpose.msra.mxu0 0
      %408 = vmatprep.subr.bf16.mxu0 0
      %409 = vmatpush1.bf16.xpose.msra.mxu0 0
      %410 = vmatprep.subr.bf16.mxu0 0
      %411 = vmatpush1.bf16.xpose.msra.mxu0 0
      %412 = vmatprep.subr.bf16.mxu0 0
      %413 = vmatpush1.bf16.xpose.msra.mxu0 0
      %414 = vmatprep.subr.bf16.mxu0 0
      %415 = vmatpush1.bf16.xpose.msra.mxu0 0
      %416 = vmatprep.subr.bf16.mxu0 0
      %417 = vmatpush1.bf16.xpose.msra.mxu0 0
      %418 = vmatprep.subr.bf16.mxu0 0
      %419 = vmatpush1.bf16.xpose.msra.mxu0 0
      %420 = vmatprep.subr.bf16.mxu0 0
      %421 = vmatpush1.bf16.xpose.msra.mxu0 0
      %422 = vmatprep.subr.bf16.mxu0 0
      %423 = vmatpush1.bf16.xpose.msra.mxu0 0
      %424 = vmatprep.subr.bf16.mxu0 0
      %425 = vmatpush1.bf16.xpose.msra.mxu0 0
      %426 = vmatprep.subr.bf16.mxu0 0
      %427 = vmatpush1.bf16.xpose.msra.mxu0 0
      %428 = vmatprep.subr.bf16.mxu0 0
      %429 = vmatpush1.bf16.xpose.msra.mxu0 0
      %430 = vmatprep.subr.bf16.mxu0 0
      %431 = vmatpush1.bf16.xpose.msra.mxu0 0
      %432 = vmatprep.mubr.bf16.mxu0 0
      %433 = vmatmul.mubr.bf16.gmra.mrb[0].mxu0 %v395
      %v434 = vpop.f32.mrb[0].mxu0
      %v435 = vadd.f32 0.0, %v434
      %v436 = vpop.f32.mrb[0].mxu0
      %v437 = vpop.f32.mrb[0].mxu0
      %v438 = vpop.f32.mrb[0].mxu0
      %439 = vdwg.mxu0
      %v441 = vsel %vm301, %v286, 0
      %v444 = vsel %vm301, %v293, 0
      %446 = vmatprep.subr.bf16.mxu0 0
      %447 = vmatpush1.bf16.xpose.msra.mxu0 %v444
      %448 = vmatprep.subr.bf16.mxu0 0
      %449 = vmatpush1.bf16.xpose.msra.mxu0 0
      %450 = vmatprep.subr.bf16.mxu0 0
      %451 = vmatpush1.bf16.xpose.msra.mxu0 0
      %452 = vmatprep.subr.bf16.mxu0 0
      %453 = vmatpush1.bf16.xpose.msra.mxu0 0
      %454 = vmatprep.subr.bf16.mxu0 0
      %455 = vmatpush1.bf16.xpose.msra.mxu0 0
      %456 = vmatprep.subr.bf16.mxu0 0
      %457 = vmatpush1.bf16.xpose.msra.mxu0 0
      %458 = vmatprep.subr.bf16.mxu0 0
      %459 = vmatpush1.bf16.xpose.msra.mxu0 0
      %460 = vmatprep.subr.bf16.mxu0 0
      %461 = vmatpush1.bf16.xpose.msra.mxu0 0
      %462 = vmatprep.subr.bf16.mxu0 0
      %463 = vmatpush1.bf16.xpose.msra.mxu0 0
      %464 = vmatprep.subr.bf16.mxu0 0
      %465 = vmatpush1.bf16.xpose.msra.mxu0 0
      %466 = vmatprep.subr.bf16.mxu0 0
      %467 = vmatpush1.bf16.xpose.msra.mxu0 0
      %468 = vmatprep.subr.bf16.mxu0 0
      %469 = vmatpush1.bf16.xpose.msra.mxu0 0
      %470 = vmatprep.subr.bf16.mxu0 0
      %471 = vmatpush1.bf16.xpose.msra.mxu0 0
      %472 = vmatprep.subr.bf16.mxu0 0
      %473 = vmatpush1.bf16.xpose.msra.mxu0 0
      %474 = vmatprep.subr.bf16.mxu0 0
      %475 = vmatpush1.bf16.xpose.msra.mxu0 0
      %476 = vmatprep.subr.bf16.mxu0 0
      %477 = vmatpush1.bf16.xpose.msra.mxu0 0
      %478 = vmatprep.mubr.bf16.mxu0 0
      %479 = vmatmul.mubr.bf16.gmra.mrb[0].mxu0 %v441
      %v480 = vpop.f32.mrb[0].mxu0
      %v481 = vadd.f32 0.0, %v480
      %v482 = vpop.f32.mrb[0].mxu0
      %v483 = vpop.f32.mrb[0].mxu0
      %v484 = vpop.f32.mrb[0].mxu0
      %485 = vdwg.mxu0
      %v486 = vmul.f32 %v343, 0.35355338
      %v487 = vmul.f32 %v389, 0.35355338
      %v488 = vmul.f32 %v435, 0.35355338
      %v489 = vmul.f32 %v481, 0.35355338
      %v491 = vlaneseq
      %v492 = vshrl.u32 %v491, 7
      %v493 = vsub.s32 0, %v492
      %v494 = vrot.slane %v279, %v493
      %v496 = vadd.f32 %v486, %v494
      %v497 = vadd.f32 %v487, %v494
      %v498 = vadd.f32 %v488, %v494
      %v499 = vadd.f32 %v489, %v494
      %v500 = vsel %vm301, %v496, -inf
      %501 = vmax.xlane.f32.xlu0 %v500
      %v502 = vpop.xlane.xlu0 %501
      %v503 = vsel %vm301, %v497, -inf
      %504 = vmax.xlane.f32.xlu0 %v503
      %v505 = vpop.xlane.xlu0 %504
      %v506 = vsel %vm301, %v498, -inf
      %507 = vmax.xlane.f32.xlu0 %v506
      %v508 = vpop.xlane.xlu0 %507
      %v509 = vsel %vm301, %v499, -inf
      %510 = vmax.xlane.f32.xlu0 %v509
      %v511 = vpop.xlane.xlu0 %510
      %v512 = vsub.f32 %v496, %v502
      %v513 = vsub.f32 %v497, %v505
      %v514 = vsub.f32 %v498, %v508
      %v515 = vsub.f32 %v499, %v511
      %v516 = vmul.f32 %v512, 1.442695
      %v517 = vpow.pop %v516
      %v518 = vmul.f32 %v513, 1.442695
      %v519 = vpow.pop %v518
      %v520 = vmul.f32 %v514, 1.442695
      %v521 = vpow.pop %v520
      %v522 = vmul.f32 %v515, 1.442695
      %v523 = vpow.pop %v522
      %v524 = vsel %vm301, %v517, 0.0
      %525 = vadd.xlane.f32.xlu0 %v524
      %v526 = vpop.xlane.xlu0 %525
      %v527 = vsel %vm301, %v519, 0.0
      %528 = vadd.xlane.f32.xlu0 %v527
      %v529 = vpop.xlane.xlu0 %528
      %v530 = vsel %vm301, %v521, 0.0
      %531 = vadd.xlane.f32.xlu0 %v530
      %v532 = vpop.xlane.xlu0 %531
      %v533 = vsel %vm301, %v523, 0.0
      %534 = vadd.xlane.f32.xlu0 %v533
      %v535 = vpop.xlane.xlu0 %534
      %v536 = vpack.c.bf16 %v517, %v517
      %v537 = vpack.c.bf16 %v519, %v519
      %v538 = vpack.c.bf16 %v521, %v521
      %v539 = vpack.c.bf16 %v523, %v523
      %v541 = vsel %vm301, %v536, 0
      %vm543 = vcmask 1043456
      %v545 = vsel %vm543, %v278, 0
      %547 = vmatprep.subr.bf16.mxu0 0
      %548 = vmatpush1.bf16.msra.mxu0 %v545
      %549 = vmatprep.subr.bf16.mxu0 0
      %550 = vmatpush1.bf16.msra.mxu0 0
      %551 = vmatprep.subr.bf16.mxu0 0
      %552 = vmatpush1.bf16.msra.mxu0 0
      %553 = vmatprep.subr.bf16.mxu0 0
      %554 = vmatpush1.bf16.msra.mxu0 0
      %555 = vmatprep.subr.bf16.mxu0 0
      %556 = vmatpush1.bf16.msra.mxu0 0
      %557 = vmatprep.subr.bf16.mxu0 0
      %558 = vmatpush1.bf16.msra.mxu0 0
      %559 = vmatprep.subr.bf16.mxu0 0
      %560 = vmatpush1.bf16.msra.mxu0 0
      %561 = vmatprep.subr.bf16.mxu0 0
      %562 = vmatpush1.bf16.msra.mxu0 0
      %563 = vmatprep.subr.bf16.mxu0 0
      %564 = vmatpush1.bf16.msra.mxu0 0
      %565 = vmatprep.subr.bf16.mxu0 0
      %566 = vmatpush1.bf16.msra.mxu0 0
      %567 = vmatprep.subr.bf16.mxu0 0
      %568 = vmatpush1.bf16.msra.mxu0 0
      %569 = vmatprep.subr.bf16.mxu0 0
      %570 = vmatpush1.bf16.msra.mxu0 0
      %571 = vmatprep.subr.bf16.mxu0 0
      %572 = vmatpush1.bf16.msra.mxu0 0
      %573 = vmatprep.subr.bf16.mxu0 0
      %574 = vmatpush1.bf16.msra.mxu0 0
      %575 = vmatprep.subr.bf16.mxu0 0
      %576 = vmatpush1.bf16.msra.mxu0 0
      %577 = vmatprep.subr.bf16.mxu0 0
      %578 = vmatpush1.bf16.msra.mxu0 0
      %579 = vmatprep.mubr.bf16.mxu0 0
      %580 = vmatmul.mubr.bf16.gmra.mrb[0].mxu0 %v541
      %v581 = vpop.f32.mrb[0].mxu0
      %v582 = vadd.f32 0.0, %v581
      %v583 = vpop.f32.mrb[0].mxu0
      %v584 = vpop.f32.mrb[0].mxu0
      %v585 = vpop.f32.mrb[0].mxu0
      %586 = vdwg.mxu0
      %v588 = vsel %vm301, %v537, 0
      %v591 = vsel %vm543, %v296, 0
      %593 = vmatprep.subr.bf16.mxu0 0
      %594 = vmatpush1.bf16.msra.mxu0 %v591
      %595 = vmatprep.subr.bf16.mxu0 0
      %596 = vmatpush1.bf16.msra.mxu0 0
      %597 = vmatprep.subr.bf16.mxu0 0
      %598 = vmatpush1.bf16.msra.mxu0 0
      %599 = vmatprep.subr.bf16.mxu0 0
      %600 = vmatpush1.bf16.msra.mxu0 0
      %601 = vmatprep.subr.bf16.mxu0 0
      %602 = vmatpush1.bf16.msra.mxu0 0
      %603 = vmatprep.subr.bf16.mxu0 0
      %604 = vmatpush1.bf16.msra.mxu0 0
      %605 = vmatprep.subr.bf16.mxu0 0
      %606 = vmatpush1.bf16.msra.mxu0 0
      %607 = vmatprep.subr.bf16.mxu0 0
      %608 = vmatpush1.bf16.msra.mxu0 0
      %609 = vmatprep.subr.bf16.mxu0 0
      %610 = vmatpush1.bf16.msra.mxu0 0
      %611 = vmatprep.subr.bf16.mxu0 0
      %612 = vmatpush1.bf16.msra.mxu0 0
      %613 = vmatprep.subr.bf16.mxu0 0
      %614 = vmatpush1.bf16.msra.mxu0 0
      %615 = vmatprep.subr.bf16.mxu0 0
      %616 = vmatpush1.bf16.msra.mxu0 0
      %617 = vmatprep.subr.bf16.mxu0 0
      %618 = vmatpush1.bf16.msra.mxu0 0
      %619 = vmatprep.subr.bf16.mxu0 0
      %620 = vmatpush1.bf16.msra.mxu0 0
      %621 = vmatprep.subr.bf16.mxu0 0
      %622 = vmatpush1.bf16.msra.mxu0 0
      %623 = vmatprep.subr.bf16.mxu0 0
      %624 = vmatpush1.bf16.msra.mxu0 0
      %625 = vmatprep.mubr.bf16.mxu0 0
      %626 = vmatmul.mubr.bf16.gmra.mrb[0].mxu0 %v588
      %v627 = vpop.f32.mrb[0].mxu0
      %v628 = vadd.f32 0.0, %v627
      %v629 = vpop.f32.mrb[0].mxu0
      %v630 = vpop.f32.mrb[0].mxu0
      %v631 = vpop.f32.mrb[0].mxu0
      %632 = vdwg.mxu0
      %v634 = vsel %vm301, %v538, 0
      %v637 = vsel %vm543, %v298, 0
      %639 = vmatprep.subr.bf16.mxu0 0
      %640 = vmatpush1.bf16.msra.mxu0 %v637
      %641 = vmatprep.subr.bf16.mxu0 0
      %642 = vmatpush1.bf16.msra.mxu0 0
      %643 = vmatprep.subr.bf16.mxu0 0
      %644 = vmatpush1.bf16.msra.mxu0 0
      %645 = vmatprep.subr.bf16.mxu0 0
      %646 = vmatpush1.bf16.msra.mxu0 0
      %647 = vmatprep.subr.bf16.mxu0 0
      %648 = vmatpush1.bf16.msra.mxu0 0
      %649 = vmatprep.subr.bf16.mxu0 0
      %650 = vmatpush1.bf16.msra.mxu0 0
      %651 = vmatprep.subr.bf16.mxu0 0
      %652 = vmatpush1.bf16.msra.mxu0 0
      %653 = vmatprep.subr.bf16.mxu0 0
      %654 = vmatpush1.bf16.msra.mxu0 0
      %655 = vmatprep.subr.bf16.mxu0 0
      %656 = vmatpush1.bf16.msra.mxu0 0
      %657 = vmatprep.subr.bf16.mxu0 0
      %658 = vmatpush1.bf16.msra.mxu0 0
      %659 = vmatprep.subr.bf16.mxu0 0
      %660 = vmatpush1.bf16.msra.mxu0 0
      %661 = vmatprep.subr.bf16.mxu0 0
      %662 = vmatpush1.bf16.msra.mxu0 0
      %663 = vmatprep.subr.bf16.mxu0 0
      %664 = vmatpush1.bf16.msra.mxu0 0
      %665 = vmatprep.subr.bf16.mxu0 0
      %666 = vmatpush1.bf16.msra.mxu0 0
      %667 = vmatprep.subr.bf16.mxu0 0
      %668 = vmatpush1.bf16.msra.mxu0 0
      %669 = vmatprep.subr.bf16.mxu0 0
      %670 = vmatpush1.bf16.msra.mxu0 0
      %671 = vmatprep.mubr.bf16.mxu0 0
      %672 = vmatmul.mubr.bf16.gmra.mrb[0].mxu0 %v634
      %v673 = vpop.f32.mrb[0].mxu0
      %v674 = vadd.f32 0.0, %v673
      %v675 = vpop.f32.mrb[0].mxu0
      %v676 = vpop.f32.mrb[0].mxu0
      %v677 = vpop.f32.mrb[0].mxu0
      %678 = vdwg.mxu0
      %v680 = vsel %vm301, %v539, 0
      %v683 = vsel %vm543, %v300, 0
      %685 = vmatprep.subr.bf16.mxu0 0
      %686 = vmatpush1.bf16.msra.mxu0 %v683
      %687 = vmatprep.subr.bf16.mxu0 0
      %688 = vmatpush1.bf16.msra.mxu0 0
      %689 = vmatprep.subr.bf16.mxu0 0
      %690 = vmatpush1.bf16.msra.mxu0 0
      %691 = vmatprep.subr.bf16.mxu0 0
      %692 = vmatpush1.bf16.msra.mxu0 0
      %693 = vmatprep.subr.bf16.mxu0 0
      %694 = vmatpush1.bf16.msra.mxu0 0
      %695 = vmatprep.subr.bf16.mxu0 0
      %696 = vmatpush1.bf16.msra.mxu0 0
      %697 = vmatprep.subr.bf16.mxu0 0
      %698 = vmatpush1.bf16.msra.mxu0 0
      %699 = vmatprep.subr.bf16.mxu0 0
      %700 = vmatpush1.bf16.msra.mxu0 0
      %701 = vmatprep.subr.bf16.mxu0 0
      %702 = vmatpush1.bf16.msra.mxu0 0
      %703 = vmatprep.subr.bf16.mxu0 0
      %704 = vmatpush1.bf16.msra.mxu0 0
      %705 = vmatprep.subr.bf16.mxu0 0
      %706 = vmatpush1.bf16.msra.mxu0 0
      %707 = vmatprep.subr.bf16.mxu0 0
      %708 = vmatpush1.bf16.msra.mxu0 0
      %709 = vmatprep.subr.bf16.mxu0 0
      %710 = vmatpush1.bf16.msra.mxu0 0
      %711 = vmatprep.subr.bf16.mxu0 0
      %712 = vmatpush1.bf16.msra.mxu0 0
      %713 = vmatprep.subr.bf16.mxu0 0
      %714 = vmatpush1.bf16.msra.mxu0 0
      %715 = vmatprep.subr.bf16.mxu0 0
      %716 = vmatpush1.bf16.msra.mxu0 0
      %717 = vmatprep.mubr.bf16.mxu0 0
      %718 = vmatmul.mubr.bf16.gmra.mrb[0].mxu0 %v680
      %v719 = vpop.f32.mrb[0].mxu0
      %v720 = vadd.f32 0.0, %v719
      %v721 = vpop.f32.mrb[0].mxu0
      %v722 = vpop.f32.mrb[0].mxu0
      %v723 = vpop.f32.mrb[0].mxu0
      %724 = vdwg.mxu0
      %v725 = vrcp.pop %v526
      %v726 = vrcp.pop %v529
      %v727 = vrcp.pop %v532
      %v728 = vrcp.pop %v535
      %v729 = vmul.f32 %v582, %v725
      %v730 = vmul.f32 %v628, %v726
      %v731 = vmul.f32 %v674, %v727
      %v732 = vmul.f32 %v720, %v728
      %734 = vrot.lane.b32.xlu0 %v730, 8
      %v735 = vpop.permute.xlu0 %734
      %738 = vrot.lane.b32.xlu0 %v731, 16
      %v739 = vpop.permute.xlu0 %738
      %742 = vrot.lane.b32.xlu0 %v732, 24
      %v743 = vpop.permute.xlu0 %742
      %v745 = vsel %vm301, %v729, %v735
      %vm746 = vcmask 130048
      %v747 = vsel %vm746, %v745, %v739
      %vm748 = vcmask 195584
      %v749 = vsel %vm748, %v747, %v743
      %v750 = vpack.c.bf16 %v749, %v749
      %vm751 = vcmask 257024
      %752 = vst.msk [vmem:[%s274] sm:$0xf] %vm751, %v750
      %p753 = scmp.lt.s32.totalorder %s19, 1
      %s754 = scalar_select %p753, %s19, 1
      %p755 = scmp.lt.s32.totalorder %s20, 0
      %s756 = scalar_select %p755, %s20, 0
      %s757 = sadd.s32 %s756, %s754
      %s758 = smul.addr %s757, 4
      %s759 = scalar_lea.vmem %s4, %s758
      // Predicated region
      $region37: #{forward_train.24} parent=35 // pred_check
        %p760 = pneg %p153
      $region38: #{forward_train.24} parent=35 // pred_check_branch
        %762 = sbr.rel (%p760) target = $region40
      $region39: #{forward_train.24} parent=35 // pred_region
        _
      $region40: #{forward_train.24} parent=35 // pred_fallthru
        _
    $region36: #{forward_train.24} parent=5 // pred_fallthru
      _
    %p763 = scmp.le.s32.totalorder 2, %s10
    // Predicated region
    $region41: #{forward_train.24} parent=5 // pred_check
      %p764 = pneg %p763
    $region42: #{forward_train.24} parent=5 // pred_check_branch
      %766 = sbr.rel (%p764) target = $region44
    $region43: #{forward_train.24} parent=5 // pred_region
      %s767 = ssub.s32 %s10, 2
      // Predicated region
      $region45: #{forward_train.24} parent=43 // pred_check
        %p768 = pneg %p159
      $region46: #{forward_train.24} parent=43 // pred_check_branch
        %770 = sbr.rel (%p768) target = $region48
      $region47: #{forward_train.24} parent=43 // pred_region
        %p771 = scmp.lt.s32.totalorder %s21, 1
        %s772 = scalar_select %p771, %s21, 1
        %p773 = scmp.lt.s32.totalorder %s22, 0
        %s774 = scalar_select %p773, %s22, 0
        %s775 = sadd.s32 %s774, %s772
        %s776 = smul.addr %s775, 4
        %s777 = scalar_lea.vmem %s4, %s776
      $region48: #{forward_train.24} parent=43 // pred_fallthru
        _
    $region44: #{forward_train.24} parent=5 // pred_fallthru
      _
  $region6: #{forward_train.24} parent=0 // loop_footer
    %s14 = sadd.s32 1, %s10
  $region7: #{forward_train.24} parent=0 // loop_footer_branch
    %9 = sbr.rel target = $region3
  $region8: #{forward_train.24} parent=0 // loop_exit
    _

// kernel: forward_train.37
$region0: #{forward_train.37}
  #allocation0 [shape = 'u32[]', space=smem, size = 0x4, offset = 0x4, fixed_abs, tag = 'smem constant byte address 0x4 - core index']
  #allocation1 [shape = 'u32[144,128]{1,0:T(1,128)}', space=vmem, size = 0x12000, scoped, tag = 'internal scratch']
  #allocation2 [shape = 'f32[16,64]{1,0:T(8,128)}', space=vmem, size = 0x2000, scoped, tag = 'scratch operand']
  %s0 = inlined_call_operand.vmem [shape: f32[16,32], index: 0, kind: input, shape index: {}]
  %s1 = inlined_call_operand.vmem [shape: bf16[32,64], index: 1, kind: input, shape index: {}]
  %s2 = inlined_call_operand.vmem [shape: f32[1,64], index: 2, kind: input, shape index: {}]
  %s3 = inlined_call_operand.hbm [shape: f32[16,64], index: 3, kind: output, shape index: {}]
  %s4 = sld [smem:[#allocation0]]
  $region30: #{forward_train.37} parent=0
    _
  %s6 = ssub.s32 1, %s4
  %s7 = scalar_select 0, %s6, %s4
  $region1: #{forward_train.37} parent=0
    #allocation3 [shape = 'u8[8192]{0}', space=vmem, size = 0x2000, scoped, tag = 'output window, operand 0, single buffered']
    #allocation4 [shape = 's32[1]{0}', space=sflag, size = 0x4, scoped, tag = 'scoped memory for forward_train.37']
    %8 = vsyncpa [#allocation4], 0
    // Predicated region
    $region2: #{forward_train.37} parent=1 // pred_check
      _
    $region3: #{forward_train.37} parent=1 // pred_check_branch
      %10 = sbr.rel (0) target = $region5
    $region4: #{forward_train.37} parent=1 // pred_region
      _
    $region5: #{forward_train.37} parent=1 // pred_fallthru
      _
    // Predicated region
    $region6: #{forward_train.37} parent=1 // pred_check
      _
    $region7: #{forward_train.37} parent=1 // pred_check_branch
      %12 = sbr.rel (0) target = $region9
    $region8: #{forward_train.37} parent=1 // pred_region
      _
    $region9: #{forward_train.37} parent=1 // pred_fallthru
      _
    // Predicated region
    $region10: #{forward_train.37} parent=1 // pred_check
      _
    $region11: #{forward_train.37} parent=1 // pred_check_branch
      %14 = sbr.rel (0) target = $region13
    $region12: #{forward_train.37} parent=1 // pred_region
      _
    $region13: #{forward_train.37} parent=1 // pred_fallthru
      _
    %p16 = scmp.eq.s32.totalorder 0, 0
    // Predicated region
    $region14: #{forward_train.37} parent=1 // pred_check
      %p17 = pneg %p16
    $region15: #{forward_train.37} parent=1 // pred_check_branch
      %19 = sbr.rel (%p17) target = $region17
    $region16: #{forward_train.37} parent=1 // pred_region
      %vm20 = vcmask 523264
      %21 = vst.msk [vmem:[#allocation2] sm:$0xff] %vm20, 0.0
      %22 = vst.msk [vmem:[#allocation2 + $0x8] sm:$0xff] %vm20, 0.0
    $region17: #{forward_train.37} parent=1 // pred_fallthru
      _
    %v23 = vld [vmem:[#allocation2] sm:$0xff]
    %v24 = vld [vmem:[#allocation2 + $0x8] sm:$0xff]
    %v25 = vld [vmem:[%s0] sm:$0xff]
    %v26 = vld [vmem:[%s0 + $0x8] sm:$0xff]
    %v27 = vpack.c.bf16 %v26, %v25
    %v28 = vld [vmem:[%s1] sm:$0xf]
    %v29 = vld [vmem:[%s1 + $0x4] sm:$0xf]
    %v30 = vld [vmem:[%s1 + $0x8] sm:$0xf]
    %v31 = vld [vmem:[%s1 + $0xc] sm:$0xf]
    %v36 = vunpack.c.l.b16 %v28
    %v37 = vunpack.c.l.b16 %v29
    %v38 = vunpack.c.l.b16 %v30
    %v39 = vunpack.c.l.b16 %v31
    %v40 = vpack.c.b16 %v37, %v36
    %v41 = vpack.c.b16 %v39, %v38
    %vm44 = vcmask 261120
    %v46 = vsel %vm44, %v27, 0
    %48 = vmatprep.subr.bf16.mxu0 0
    %49 = vmatpush1.bf16.msra.mxu0 %v40
    %50 = vmatprep.subr.bf16.mxu0 0
    %51 = vmatpush1.bf16.msra.mxu0 %v41
    %52 = vmatprep.subr.bf16.mxu0 0
    %53 = vmatpush1.bf16.msra.mxu0 0
    %54 = vmatprep.subr.bf16.mxu0 0
    %55 = vmatpush1.bf16.msra.mxu0 0
    %56 = vmatprep.subr.bf16.mxu0 0
    %57 = vmatpush1.bf16.msra.mxu0 0
    %58 = vmatprep.subr.bf16.mxu0 0
    %59 = vmatpush1.bf16.msra.mxu0 0
    %60 = vmatprep.subr.bf16.mxu0 0
    %61 = vmatpush1.bf16.msra.mxu0 0
    %62 = vmatprep.subr.bf16.mxu0 0
    %63 = vmatpush1.bf16.msra.mxu0 0
    %64 = vmatprep.subr.bf16.mxu0 0
    %65 = vmatpush1.bf16.msra.mxu0 0
    %66 = vmatprep.subr.bf16.mxu0 0
    %67 = vmatpush1.bf16.msra.mxu0 0
    %68 = vmatprep.subr.bf16.mxu0 0
    %69 = vmatpush1.bf16.msra.mxu0 0
    %70 = vmatprep.subr.bf16.mxu0 0
    %71 = vmatpush1.bf16.msra.mxu0 0
    %72 = vmatprep.subr.bf16.mxu0 0
    %73 = vmatpush1.bf16.msra.mxu0 0
    %74 = vmatprep.subr.bf16.mxu0 0
    %75 = vmatpush1.bf16.msra.mxu0 0
    %76 = vmatprep.subr.bf16.mxu0 0
    %77 = vmatpush1.bf16.msra.mxu0 0
    %78 = vmatprep.subr.bf16.mxu0 0
    %79 = vmatpush1.bf16.msra.mxu0 0
    %80 = vmatprep.mubr.bf16.mxu0 0
    %81 = vmatmul.mubr.bf16.gmra.mrb[0].mxu0 %v46
    %v82 = vpop.f32.mrb[0].mxu0
    %v83 = vadd.f32 0.0, %v82
    %v84 = vpop.f32.mrb[0].mxu0
    %v85 = vpop.f32.mrb[0].mxu0
    %v86 = vadd.f32 0.0, %v85
    %v87 = vpop.f32.mrb[0].mxu0
    %88 = vdwg.mxu0
    %v89 = vadd.f32 %v23, %v83
    %v90 = vadd.f32 %v24, %v86
    %vm91 = vcmask 523264
    %92 = vst.msk [vmem:[#allocation2] sm:$0xff] %vm91, %v89
    %93 = vst.msk [vmem:[#allocation2 + $0x8] sm:$0xff] %vm91, %v90
    // Predicated region
    $region18: #{forward_train.37} parent=1 // pred_check
      %p94 = pneg %p16
    $region19: #{forward_train.37} parent=1 // pred_check_branch
      %96 = sbr.rel (%p94) target = $region21
    $region20: #{forward_train.37} parent=1 // pred_region
      %v97 = vld [vmem:[#allocation2] sm:$0xff]
      %v98 = vld [vmem:[#allocation2 + $0x8] sm:$0xff]
      %v99 = vld [vmem:[%s2] sm:$0x1]
      %v101 = vlaneseq
      %v102 = vshrl.u32 %v101, 7
      %v103 = vsub.s32 0, %v102
      %v104 = vrot.slane %v99, %v103
      %v106 = vadd.f32 %v97, %v104
      %v107 = vadd.f32 %v98, %v104
      %108 = vst.msk [vmem:[#allocation3] sm:$0xff] %vm91, %v106
      %109 = vst.msk [vmem:[#allocation3 + $0x8] sm:$0xff] %vm91, %v107
    $region21: #{forward_train.37} parent=1 // pred_fallthru
      _
    // Predicated region
    $region22: #{forward_train.37} parent=1 // pred_check
      _
    $region23: #{forward_train.37} parent=1 // pred_check_branch
      %111 = sbr.rel (0) target = $region25
    $region24: #{forward_train.37} parent=1 // pred_region
      %s113 = ssub.s32 256, 256
      %114 = vsyncadd [#allocation4], %s113
      %s115 = sshll.u32 [#allocation3], 4
      %s116 = int_to_ptr.vmem [resolvable:$true] %s115
      %121 = dma.vmem_to_hbm [thread:$0]  %s116, 256, %s3, [#allocation4], 128, 128, 8
    $region25: #{forward_train.37} parent=1 // pred_fallthru
      _
    // Predicated region
    $region26: #{forward_train.37} parent=1 // pred_check
      _
    $region27: #{forward_train.37} parent=1 // pred_check_branch
      %123 = sbr.rel (0) target = $region29
    $region28: #{forward_train.37} parent=1 // pred_region
      %124 = dma.done [#allocation4], 256
    $region29: #{forward_train.37} parent=1 // pred_fallthru
      _
    %125 = vsyncpa [#allocation4], 1

// kernel: forward_train.27
$region0: #{forward_train.27}
  #allocation0 [shape = 'u32[]', space=smem, size = 0x4, offset = 0x4, fixed_abs, tag = 'smem constant byte address 0x4 - core index']
  #allocation1 [shape = 'u32[144,128]{1,0:T(1,128)}', space=vmem, size = 0x12000, scoped, tag = 'internal scratch']
  #allocation2 [shape = 'f32[16,32]{1,0:T(8,128)}', space=vmem, size = 0x2000, scoped, tag = 'scratch operand']
  %s0 = inlined_call_operand.vmem [shape: bf16[16,2048], index: 0, kind: input, shape index: {}]
  %s1 = inlined_call_operand.vmem [shape: bf16[2048,32], index: 1, kind: input, shape index: {}]
  %s2 = inlined_call_operand.vmem [shape: f32[1,32], index: 2, kind: input, shape index: {}]
  %s3 = inlined_call_operand.vmem [shape: f32[16,32], index: 3, kind: input, shape index: {}]
  %s4 = inlined_call_operand.vmem [shape: f32[1,32], index: 4, kind: input, shape index: {}]
  %s5 = inlined_call_operand.vmem [shape: f32[1,32], index: 5, kind: input, shape index: {}]
  %s6 = inlined_call_operand.vmem [shape: f32[16,32], index: 6, kind: output, shape index: {}]
  %s7 = sld [smem:[#allocation0]]
  $region88: #{forward_train.27} parent=0
    _
  %s9 = ssub.s32 1, %s7
  %s10 = scalar_select 0, %s9, %s7
  $region1: #{forward_train.27} parent=0
    #allocation3 [shape = 'u8[65536]{0}', space=vmem, size = 0x10000, scoped, tag = 'input window, operand 0']
    loop: start=0, step=1, limit=4
    $region2: #{forward_train.27} parent=1 // loop_pre_header
      _
    $region3: #{forward_train.27} parent=1 // loop_header
      %s12 = sphi 0, %s16
      %p13 = scmp.ge.s32.totalorder %s12, 4
      %s19 = sphi 0, %s38
      %s20 = sphi 0, %s34
      %s21 = sphi 0, %s30
      %s22 = sphi 0, %s19
      %s23 = sphi 0, %s20
      %s24 = sphi 0, %s21
      %s25 = sphi 0, %s22
      %s26 = sphi 0, %s23
      %s27 = sphi 0, %s24
      %s43 = sphi 0, %s45
      %s46 = sphi 0, %s43
      %s47 = sphi 0, %s46
      %s63 = sphi 0, %s47
      %s71 = sphi 0, %s73
      %s74 = sphi 0, %s71
      %s75 = sphi 0, %s74
      %s91 = sphi 0, %s75
      %s97 = sphi 0, %s99
      %s100 = sphi 0, %s97
      %s101 = sphi 0, %s100
      %s117 = sphi 0, %s101
      %s125 = sphi 0, %s127
      %s128 = sphi 0, %s125
      %s129 = sphi 0, %s128
      %s145 = sphi 0, %s129
      %s151 = sphi 0, %s153
      %s154 = sphi 0, %s151
      %s155 = sphi 0, %s154
      %s171 = sphi 0, %s155
      %s177 = sphi 0, %s179
      %s180 = sphi 0, %s177
      %s181 = sphi 0, %s180
      %s197 = sphi 0, %s181
      %s205 = sphi 0, %s207
      %s208 = sphi 0, %s205
      %s209 = sphi 0, %s208
      %s225 = sphi 0, %s209
    $region4: #{forward_train.27} parent=1 // loop_header_branch
      %15 = sbr.rel (%p13) target = $region8
    $region5: #{forward_train.27} parent=1 // loop_body
      %s17 = ssub.s32 %s12, 1
      %s18 = ssub.s32 %s12, 2
      %s28 = sadd.s32 1, %s21
      %p29 = scmp.ge.s32.totalorder %s28, 2
      %s30 = scalar_select %p29, 0, %s28
      %s31 = sadd.s32 1, %s20
      %s32 = scalar_select %p29, %s31, %s20
      %p33 = scmp.ge.s32.totalorder %s32, 1
      %s34 = scalar_select %p33, 0, %s32
      %s35 = sadd.s32 1, %s19
      %s36 = scalar_select %p33, %s35, %s19
      %p37 = scmp.ge.s32.totalorder %s36, 1
      %s38 = scalar_select %p37, 0, %s36
      %s39 = ssub.s32 %s19, %s38
      %s40 = ssub.s32 %s21, %s30
      %s41 = sor.u32 %s39, %s40
      %p42 = scmp.eq.s32.totalorder %s41, 0
      %s44 = sadd.s32 %s43, 1
      %s45 = scalar_select %p42, %s43, %s44
      %p48 = pneg %p42
      %p49 = scmp.eq.s32.totalorder %s12, 1
      %p50 = por %p48, %p49
      %p51 = scmp.ne.s32.totalorder %s43, %s46
      %p52 = scmp.eq.s32.totalorder %s12, 0
      %p53 = por %p51, %p52
      %p54 = scmp.ne.s32.totalorder %s43, %s46
      %p55 = scmp.eq.s32.totalorder %s17, 1
      %p56 = por %p54, %p55
      %p57 = scmp.ne.s32.totalorder %s46, %s47
      %p58 = scmp.eq.s32.totalorder %s17, 0
      %p59 = por %p57, %p58
      %p60 = scmp.ne.s32.totalorder %s46, %s47
      %p61 = scmp.eq.s32.totalorder %s18, 1
      %p62 = por %p60, %p61
      %p64 = scmp.ne.s32.totalorder %s47, %s63
      %p65 = scmp.eq.s32.totalorder %s18, 0
      %p66 = por %p64, %p65
      %s67 = ssub.s32 %s21, %s30
      %s68 = ssub.s32 %s20, %s34
      %s69 = sor.u32 %s67, %s68
      %p70 = scmp.eq.s32.totalorder %s69, 0
      %s72 = sadd.s32 %s71, 1
      %s73 = scalar_select %p70, %s71, %s72
      %p76 = pneg %p70
      %p77 = scmp.eq.s32.totalorder %s12, 1
      %p78 = por %p76, %p77
      %p79 = scmp.ne.s32.totalorder %s71, %s74
      %p80 = scmp.eq.s32.totalorder %s12, 0
      %p81 = por %p79, %p80
      %p82 = scmp.ne.s32.totalorder %s71, %s74
      %p83 = scmp.eq.s32.totalorder %s17, 1
      %p84 = por %p82, %p83
      %p85 = scmp.ne.s32.totalorder %s74, %s75
      %p86 = scmp.eq.s32.totalorder %s17, 0
      %p87 = por %p85, %p86
      %p88 = scmp.ne.s32.totalorder %s74, %s75
      %p89 = scmp.eq.s32.totalorder %s18, 1
      %p90 = por %p88, %p89
      %p92 = scmp.ne.s32.totalorder %s75, %s91
      %p93 = scmp.eq.s32.totalorder %s18, 0
      %p94 = por %p92, %p93
      %s95 = ssub.s32 %s20, %s34
      %p96 = scmp.eq.s32.totalorder %s95, 0
      %s98 = sadd.s32 %s97, 1
      %s99 = scalar_select %p96, %s97, %s98
      %p102 = pneg %p96
      %p103 = scmp.eq.s32.totalorder %s12, 1
      %p104 = por %p102, %p103
      %p105 = scmp.ne.s32.totalorder %s97, %s100
      %p106 = scmp.eq.s32.totalorder %s12, 0
      %p107 = por %p105, %p106
      %p108 = scmp.ne.s32.totalorder %s97, %s100
      %p109 = scmp.eq.s32.totalorder %s17, 1
      %p110 = por %p108, %p109
      %p111 = scmp.ne.s32.totalorder %s100, %s101
      %p112 = scmp.eq.s32.totalorder %s17, 0
      %p113 = por %p111, %p112
      %p114 = scmp.ne.s32.totalorder %s100, %s101
      %p115 = scmp.eq.s32.totalorder %s18, 1
      %p116 = por %p114, %p115
      %p118 = scmp.ne.s32.totalorder %s101, %s117
      %p119 = scmp.eq.s32.totalorder %s18, 0
      %p120 = por %p118, %p119
      %s121 = ssub.s32 %s19, %s38
      %s122 = ssub.s32 %s20, %s34
      %s123 = sor.u32 %s121, %s122
      %p124 = scmp.eq.s32.totalorder %s123, 0
      %s126 = sadd.s32 %s125, 1
      %s127 = scalar_select %p124, %s125, %s126
      %p130 = pneg %p124
      %p131 = scmp.eq.s32.totalorder %s12, 1
      %p132 = por %p130, %p131
      %p133 = scmp.ne.s32.totalorder %s125, %s128
      %p134 = scmp.eq.s32.totalorder %s12, 0
      %p135 = por %p133, %p134
      %p136 = scmp.ne.s32.totalorder %s125, %s128
      %p137 = scmp.eq.s32.totalorder %s17, 1
      %p138 = por %p136, %p137
      %p139 = scmp.ne.s32.totalorder %s128, %s129
      %p140 = scmp.eq.s32.totalorder %s17, 0
      %p141 = por %p139, %p140
      %p142 = scmp.ne.s32.totalorder %s128, %s129
      %p143 = scmp.eq.s32.totalorder %s18, 1
      %p144 = por %p142, %p143
      %p146 = scmp.ne.s32.totalorder %s129, %s145
      %p147 = scmp.eq.s32.totalorder %s18, 0
      %p148 = por %p146, %p147
      %s149 = ssub.s32 %s20, %s34
      %p150 = scmp.eq.s32.totalorder %s149, 0
      %s152 = sadd.s32 %s151, 1
      %s153 = scalar_select %p150, %s151, %s152
      %p156 = pneg %p150
      %p157 = scmp.eq.s32.totalorder %s12, 1
      %p158 = por %p156, %p157
      %p159 = scmp.ne.s32.totalorder %s151, %s154
      %p160 = scmp.eq.s32.totalorder %s12, 0
      %p161 = por %p159, %p160
      %p162 = scmp.ne.s32.totalorder %s151, %s154
      %p163 = scmp.eq.s32.totalorder %s17, 1
      %p164 = por %p162, %p163
      %p165 = scmp.ne.s32.totalorder %s154, %s155
      %p166 = scmp.eq.s32.totalorder %s17, 0
      %p167 = por %p165, %p166
      %p168 = scmp.ne.s32.totalorder %s154, %s155
      %p169 = scmp.eq.s32.totalorder %s18, 1
      %p170 = por %p168, %p169
      %p172 = scmp.ne.s32.totalorder %s155, %s171
      %p173 = scmp.eq.s32.totalorder %s18, 0
      %p174 = por %p172, %p173
      %s175 = ssub.s32 %s20, %s34
      %p176 = scmp.eq.s32.totalorder %s175, 0
      %s178 = sadd.s32 %s177, 1
      %s179 = scalar_select %p176, %s177, %s178
      %p182 = pneg %p176
      %p183 = scmp.eq.s32.totalorder %s12, 1
      %p184 = por %p182, %p183
      %p185 = scmp.ne.s32.totalorder %s177, %s180
      %p186 = scmp.eq.s32.totalorder %s12, 0
      %p187 = por %p185, %p186
      %p188 = scmp.ne.s32.totalorder %s177, %s180
      %p189 = scmp.eq.s32.totalorder %s17, 1
      %p190 = por %p188, %p189
      %p191 = scmp.ne.s32.totalorder %s180, %s181
      %p192 = scmp.eq.s32.totalorder %s17, 0
      %p193 = por %p191, %p192
      %p194 = scmp.ne.s32.totalorder %s180, %s181
      %p195 = scmp.eq.s32.totalorder %s18, 1
      %p196 = por %p194, %p195
      %p198 = scmp.ne.s32.totalorder %s181, %s197
      %p199 = scmp.eq.s32.totalorder %s18, 0
      %p200 = por %p198, %p199
      %s201 = ssub.s32 %s19, %s38
      %s202 = ssub.s32 %s20, %s34
      %s203 = sor.u32 %s201, %s202
      %p204 = scmp.eq.s32.totalorder %s203, 0
      %s206 = sadd.s32 %s205, 1
      %s207 = scalar_select %p204, %s205, %s206
      %p210 = pneg %p204
      %p211 = scmp.eq.s32.totalorder %s12, 1
      %p212 = por %p210, %p211
      %p213 = scmp.ne.s32.totalorder %s205, %s208
      %p214 = scmp.eq.s32.totalorder %s12, 0
      %p215 = por %p213, %p214
      %p216 = scmp.ne.s32.totalorder %s205, %s208
      %p217 = scmp.eq.s32.totalorder %s17, 1
      %p218 = por %p216, %p217
      %p219 = scmp.ne.s32.totalorder %s208, %s209
      %p220 = scmp.eq.s32.totalorder %s17, 0
      %p221 = por %p219, %p220
      %p222 = scmp.ne.s32.totalorder %s208, %s209
      %p223 = scmp.eq.s32.totalorder %s18, 1
      %p224 = por %p222, %p223
      %p226 = scmp.ne.s32.totalorder %s209, %s225
      %p227 = scmp.eq.s32.totalorder %s18, 0
      %p228 = por %p226, %p227
      %p229 = scmp.le.s32.totalorder 1, %s12
      %p230 = scmp.lt.s32.totalorder %s12, 3
      %p231 = pnand %p229, %p230
      %p232 = pneg %p231
      // Predicated region
      $region9: #{forward_train.27} parent=5 // pred_check
        _
      $region10: #{forward_train.27} parent=5 // pred_check_branch
        %234 = sbr.rel (%p231) target = $region12
      $region11: #{forward_train.27} parent=5 // pred_region
        %s235 = ssub.s32 %s12, 1
        // Predicated region
        $region13: #{forward_train.27} parent=11 // pred_check
          %p236 = pneg %p113
        $region14: #{forward_train.27} parent=11 // pred_check_branch
          %238 = sbr.rel (%p236) target = $region16
        $region15: #{forward_train.27} parent=11 // pred_region
          %p239 = scmp.lt.s32.totalorder %s23, 0
          %s240 = scalar_select %p239, %s23, 0
          %s241 = scalar_lea.vmem %s2, %s240
        $region16: #{forward_train.27} parent=11 // pred_fallthru
          _
        // Predicated region
        $region17: #{forward_train.27} parent=11 // pred_check
          %p242 = pneg %p141
        $region18: #{forward_train.27} parent=11 // pred_check_branch
          %244 = sbr.rel (%p242) target = $region20
        $region19: #{forward_train.27} parent=11 // pred_region
          %s245 = smul.u32 2, %s22
          %p246 = scmp.lt.s32.totalorder %s245, 1
          %s247 = scalar_select %p246, %s245, 1
          %p248 = scmp.lt.s32.totalorder %s23, 0
          %s249 = scalar_select %p248, %s23, 0
          %s250 = sadd.s32 %s249, %s247
          %s251 = smul.addr %s250, 8
          %s252 = scalar_lea.vmem %s3, %s251
          %s253 = smul.u32 2, %s22
        $region20: #{forward_train.27} parent=11 // pred_fallthru
          _
        // Predicated region
        $region21: #{forward_train.27} parent=11 // pred_check
          %p254 = pneg %p167
        $region22: #{forward_train.27} parent=11 // pred_check_branch
          %256 = sbr.rel (%p254) target = $region24
        $region23: #{forward_train.27} parent=11 // pred_region
          %p257 = scmp.lt.s32.totalorder %s23, 0
          %s258 = scalar_select %p257, %s23, 0
          %s259 = scalar_lea.vmem %s4, %s258
        $region24: #{forward_train.27} parent=11 // pred_fallthru
          _
        // Predicated region
        $region25: #{forward_train.27} parent=11 // pred_check
          %p260 = pneg %p193
        $region26: #{forward_train.27} parent=11 // pred_check_branch
          %262 = sbr.rel (%p260) target = $region28
        $region27: #{forward_train.27} parent=11 // pred_region
          %p263 = scmp.lt.s32.totalorder %s23, 0
          %s264 = scalar_select %p263, %s23, 0
          %s265 = scalar_lea.vmem %s5, %s264
        $region28: #{forward_train.27} parent=11 // pred_fallthru
          _
      $region12: #{forward_train.27} parent=5 // pred_fallthru
        _
      %p266 = scmp.lt.s32.totalorder %s12, 2
      // Predicated region
      $region29: #{forward_train.27} parent=5 // pred_check
        %p267 = pneg %p266
      $region30: #{forward_train.27} parent=5 // pred_check_branch
        %269 = sbr.rel (%p267) target = $region32
      $region31: #{forward_train.27} parent=5 // pred_region
        // Predicated region
        $region33: #{forward_train.27} parent=31 // pred_check
          %p270 = pneg %p53
        $region34: #{forward_train.27} parent=31 // pred_check_branch
          %272 = sbr.rel (%p270) target = $region36
        $region35: #{forward_train.27} parent=31 // pred_region
          %s273 = sand.u32 %s43, 1
          %s274 = sand.u32 %s43, 1
          %s275 = smul.addr %s274, 64
          %s276 = scalar_lea.vmem [#allocation3], %s275
          %s277 = smul.u32 2, %s19
          %s278 = smul.u32 8, %s21
          %s279 = smul.addr %s277, 16
          %s280 = sadd.s32 %s278, %s279
          %s281 = smul.addr %s280, 4
          %s282 = scalar_lea.vmem %s0, %s281
          // Predicated region
          $region37: #{forward_train.27} parent=35 // pred_check
            _
          $region38: #{forward_train.27} parent=35 // pred_check_branch
            %284 = sbr.rel (0) target = $region40
          $region39: #{forward_train.27} parent=35 // pred_region
            // Predicated region
            $region41: #{forward_train.27} parent=39 // pred_check
              _
            $region42: #{forward_train.27} parent=39 // pred_check_branch
              %286 = sbr.rel (0) target = $region44
            $region43: #{forward_train.27} parent=39 // pred_region
              loop: start=0, step=1, limit=1
              $region45: #{forward_train.27} parent=43 // loop_pre_header
                _
              $region46: #{forward_train.27} parent=43 // loop_header
                %s288 = sphi 0, %s292
                %p289 = scmp.ge.s32.totalorder %s288, 1
                %s293 = sphi %s282, %s282
                %s294 = sphi %s276, %s276
              $region47: #{forward_train.27} parent=43 // loop_header_branch
                %291 = sbr.rel (%p289) target = $region51
              $region48: #{forward_train.27} parent=43 // loop_body
                %v295 = vld [vmem:[%s293] sm:$0xff]
                %296 = vst [vmem:[%s294] sm:$0xff] %v295
                %v297 = vld [vmem:[%s293 + $0x8] sm:$0xff]
                %298 = vst [vmem:[%s294 + $0x8] sm:$0xff] %v297
                %v299 = vld [vmem:[%s293 + $0x10] sm:$0xff]
                %300 = vst [vmem:[%s294 + $0x10] sm:$0xff] %v299
                %v301 = vld [vmem:[%s293 + $0x18] sm:$0xff]
                %302 = vst [vmem:[%s294 + $0x18] sm:$0xff] %v301
                %v303 = vld [vmem:[%s293 + $0x40] sm:$0xff]
                %304 = vst [vmem:[%s294 + $0x20] sm:$0xff] %v303
                %v305 = vld [vmem:[%s293 + $0x48] sm:$0xff]
                %306 = vst [vmem:[%s294 + $0x28] sm:$0xff] %v305
                %v307 = vld [vmem:[%s293 + $0x50] sm:$0xff]
                %308 = vst [vmem:[%s294 + $0x30] sm:$0xff] %v307
                %v309 = vld [vmem:[%s293 + $0x58] sm:$0xff]
                %310 = vst [vmem:[%s294 + $0x38] sm:$0xff] %v309
              $region49: #{forward_train.27} parent=43 // loop_footer
                %s292 = sadd.s32 1, %s288
              $region50: #{forward_train.27} parent=43 // loop_footer_branch
                %287 = sbr.rel target = $region46
              $region51: #{forward_train.27} parent=43 // loop_exit
                _
            $region44: #{forward_train.27} parent=39 // pred_fallthru
              _
            // Predicated region
            $region52: #{forward_train.27} parent=39 // pred_check
              _
            $region53: #{forward_train.27} parent=39 // pred_check_branch
              %312 = sbr.rel target = $region55
            $region54: #{forward_train.27} parent=39 // pred_region
              _
            $region55: #{forward_train.27} parent=39 // pred_fallthru
              _
          $region40: #{forward_train.27} parent=35 // pred_fallthru
            _
          %313 = vnop
        $region36: #{forward_train.27} parent=31 // pred_fallthru
          _
        // Predicated region
        $region56: #{forward_train.27} parent=31 // pred_check
          %p314 = pneg %p81
        $region57: #{forward_train.27} parent=31 // pred_check_branch
          %316 = sbr.rel (%p314) target = $region59
        $region58: #{forward_train.27} parent=31 // pred_region
          %s317 = smul.u32 128, %s21
          %p318 = scmp.lt.s32.totalorder %s317, 255
          %s319 = scalar_select %p318, %s317, 255
          %p320 = scmp.lt.s32.totalorder %s20, 0
          %s321 = scalar_select %p320, %s20, 0
          %s322 = sadd.s32 %s321, %s319
          %s323 = smul.addr %s322, 4
          %s324 = scalar_lea.vmem %s1, %s323
          %s325 = smul.u32 128, %s21
        $region59: #{forward_train.27} parent=31 // pred_fallthru
          _
      $region32: #{forward_train.27} parent=5 // pred_fallthru
        _
      %p326 = scmp.le.s32.totalorder 1, %s12
      %p327 = scmp.lt.s32.totalorder %s12, 3
      %p328 = pnand %p326, %p327
      %p329 = pneg %p328
      // Predicated region
      $region60: #{forward_train.27} parent=5 // pred_check
        _
      $region61: #{forward_train.27} parent=5 // pred_check_branch
        %331 = sbr.rel (%p328) target = $region63
      $region62: #{forward_train.27} parent=5 // pred_region
        %s332 = ssub.s32 %s12, 1
        %s333 = sand.u32 %s46, 1
        %s334 = sand.u32 %s46, 1
        %s335 = smul.addr %s334, 64
        %s336 = scalar_lea.vmem [#allocation3], %s335
        // Predicated region
        $region64: #{forward_train.27} parent=62 // pred_check
          %p337 = pneg %p59
        $region65: #{forward_train.27} parent=62 // pred_check_branch
          %339 = sbr.rel (%p337) target = $region67
        $region66: #{forward_train.27} parent=62 // pred_region
          _
        $region67: #{forward_train.27} parent=62 // pred_fallthru
          _
        %s340 = sand.u32 %s46, 1
        %s341 = sand.u32 %s46, 1
        %s342 = smul.addr %s341, 64
        %s343 = scalar_lea.vmem [#allocation3], %s342
        %p344 = pneg %p59
        %p345 = pneg %p56
        %s346 = smul.u32 128, %s24
        %p347 = scmp.lt.s32.totalorder %s346, 255
        %s348 = scalar_select %p347, %s346, 255
        %p349 = scmp.lt.s32.totalorder %s23, 0
        %s350 = scalar_select %p349, %s23, 0
        %s351 = sadd.s32 %s350, %s348
        %s352 = smul.addr %s351, 4
        %s353 = scalar_lea.vmem %s1, %s352
        %p354 = pneg %p87
        %p355 = pneg %p84
        %p356 = scmp.lt.s32.totalorder %s23, 0
        %s357 = scalar_select %p356, %s23, 0
        %s358 = scalar_lea.vmem %s2, %s357
        %p359 = pneg %p113
        %p360 = pneg %p110
        %s361 = smul.u32 2, %s22
        %p362 = scmp.lt.s32.totalorder %s361, 1
        %s363 = scalar_select %p362, %s361, 1
        %p364 = scmp.lt.s32.totalorder %s23, 0
        %s365 = scalar_select %p364, %s23, 0
        %s366 = sadd.s32 %s365, %s363
        %s367 = smul.addr %s366, 8
        %s368 = scalar_lea.vmem %s3, %s367
        %p369 = pneg %p141
        %p370 = pneg %p138
        %p371 = scmp.lt.s32.totalorder %s23, 0
        %s372 = scalar_select %p371, %s23, 0
        %s373 = scalar_lea.vmem %s4, %s372
        %p374 = pneg %p167
        %p375 = pneg %p164
        %p376 = scmp.lt.s32.totalorder %s23, 0
        %s377 = scalar_select %p376, %s23, 0
        %s378 = scalar_lea.vmem %s5, %s377
        %p379 = pneg %p193
        %p380 = pneg %p190
        %p381 = pneg %p221
        %p382 = pneg %p218
        %s383 = smul.u32 2, %s22
        %p384 = scmp.lt.s32.totalorder %s383, 1
        %s385 = scalar_select %p384, %s383, 1
        %p386 = scmp.lt.s32.totalorder %s23, 0
        %s387 = scalar_select %p386, %s23, 0
        %s388 = sadd.s32 %s387, %s385
        %s389 = smul.addr %s388, 8
        %s390 = scalar_lea.vmem %s6, %s389
        %s391 = smul.u32 2, %s22
        %s392 = smul.u32 8, %s24
        %s393 = smul.u32 128, %s24
        %p394 = scmp.lt.s32.totalorder %s393, 255
        %s395 = scalar_select %p394, %s393, 255
        %p396 = scmp.lt.s32.totalorder %s23, 0
        %s397 = scalar_select %p396, %s23, 0
        %s398 = sadd.s32 %s397, %s395
        %s399 = smul.addr %s398, 4
        %s400 = scalar_lea.vmem %s1, %s399
        %s401 = smul.u32 128, %s24
        %p402 = scmp.lt.s32.totalorder %s23, 0
        %s403 = scalar_select %p402, %s23, 0
        %s404 = scalar_lea.vmem %s2, %s403
        %s405 = smul.u32 2, %s22
        %p406 = scmp.lt.s32.totalorder %s405, 1
        %s407 = scalar_select %p406, %s405, 1
        %p408 = scmp.lt.s32.totalorder %s23, 0
        %s409 = scalar_select %p408, %s23, 0
        %s410 = sadd.s32 %s409, %s407
        %s411 = smul.addr %s410, 8
        %s412 = scalar_lea.vmem %s3, %s411
        %s413 = smul.u32 2, %s22
        %p414 = scmp.lt.s32.totalorder %s23, 0
        %s415 = scalar_select %p414, %s23, 0
        %s416 = scalar_lea.vmem %s4, %s415
        %p417 = scmp.lt.s32.totalorder %s23, 0
        %s418 = scalar_select %p417, %s23, 0
        %s419 = scalar_lea.vmem %s5, %s418
        %s420 = smul.u32 2, %s22
        %p421 = scmp.lt.s32.totalorder %s420, 1
        %s422 = scalar_select %p421, %s420, 1
        %p423 = scmp.lt.s32.totalorder %s23, 0
        %s424 = scalar_select %p423, %s23, 0
        %s425 = sadd.s32 %s424, %s422
        %s426 = smul.addr %s425, 8
        %s427 = scalar_lea.vmem %s6, %s426
        %s428 = smul.u32 2, %s22
        %p430 = scmp.eq.s32.totalorder %s24, 0
        // Predicated region
        $region68: #{forward_train.27} parent=62 // pred_check
          %p431 = pneg %p430
        $region69: #{forward_train.27} parent=62 // pred_check_branch
          %433 = sbr.rel (%p431) target = $region71
        $region70: #{forward_train.27} parent=62 // pred_region
          %vm434 = vcmask 261120
          %435 = vst.msk [vmem:[#allocation2] sm:$0xff] %vm434, 0.0
          %436 = vst.msk [vmem:[#allocation2 + $0x8] sm:$0xff] %vm434, 0.0
        $region71: #{forward_train.27} parent=62 // pred_fallthru
          _
        %v437 = vld [vmem:[#allocation2] sm:$0xff]
        %v438 = vld [vmem:[#allocation2 + $0x8] sm:$0xff]
        %v439 = vld [vmem:[%s336] sm:$0xff]
        %v440 = vld [vmem:[%s336 + $0x8] sm:$0xff]
        %v441 = vld [vmem:[%s336 + $0x10] sm:$0xff]
        %v442 = vld [vmem:[%s336 + $0x18] sm:$0xff]
        %v443 = vld [vmem:[%s336 + $0x20] sm:$0xff]
        %v444 = vld [vmem:[%s336 + $0x28] sm:$0xff]
        %v445 = vld [vmem:[%s336 + $0x30] sm:$0xff]
        %v446 = vld [vmem:[%s336 + $0x38] sm:$0xff]
        %v447 = vld [vmem:[%s400] sm:$0xf]
        %v448 = vld [vmem:[%s400 + $0x4] sm:$0xf]
        %v449 = vld [vmem:[%s400 + $0x8] sm:$0xf]
        %v450 = vld [vmem:[%s400 + $0xc] sm:$0xf]
        %v451 = vld [vmem:[%s400 + $0x10] sm:$0xf]
        %v452 = vld [vmem:[%s400 + $0x14] sm:$0xf]
        %v453 = vld [vmem:[%s400 + $0x18] sm:$0xf]
        %v454 = vld [vmem:[%s400 + $0x1c] sm:$0xf]
        %v455 = vld [vmem:[%s400 + $0x20] sm:$0xf]
        %v456 = vld [vmem:[%s400 + $0x24] sm:$0xf]
        %v457 = vld [vmem:[%s400 + $0x28] sm:$0xf]
        %v458 = vld [vmem:[%s400 + $0x2c] sm:$0xf]
        %v459 = vld [vmem:[%s400 + $0x30] sm:$0xf]
        %v460 = vld [vmem:[%s400 + $0x34] sm:$0xf]
        %v461 = vld [vmem:[%s400 + $0x38] sm:$0xf]
        %v462 = vld [vmem:[%s400 + $0x3c] sm:$0xf]
        %v463 = vld [vmem:[%s400 + $0x40] sm:$0xf]
        %v464 = vld [vmem:[%s400 + $0x44] sm:$0xf]
        %v465 = vld [vmem:[%s400 + $0x48] sm:$0xf]
        %v466 = vld [vmem:[%s400 + $0x4c] sm:$0xf]
        %v467 = vld [vmem:[%s400 + $0x50] sm:$0xf]
        %v468 = vld [vmem:[%s400 + $0x54] sm:$0xf]
        %v469 = vld [vmem:[%s400 + $0x58] sm:$0xf]
        %v470 = vld [vmem:[%s400 + $0x5c] sm:$0xf]
        %v471 = vld [vmem:[%s400 + $0x60] sm:$0xf]
        %v472 = vld [vmem:[%s400 + $0x64] sm:$0xf]
        %v473 = vld [vmem:[%s400 + $0x68] sm:$0xf]
        %v474 = vld [vmem:[%s400 + $0x6c] sm:$0xf]
        %v475 = vld [vmem:[%s400 + $0x70] sm:$0xf]
        %v476 = vld [vmem:[%s400 + $0x74] sm:$0xf]
        %v477 = vld [vmem:[%s400 + $0x78] sm:$0xf]
        %v478 = vld [vmem:[%s400 + $0x7c] sm:$0xf]
        %v479 = vld [vmem:[%s400 + $0x80] sm:$0xf]
        %v480 = vld [vmem:[%s400 + $0x84] sm:$0xf]
        %v481 = vld [vmem:[%s400 + $0x88] sm:$0xf]
        %v482 = vld [vmem:[%s400 + $0x8c] sm:$0xf]
        %v483 = vld [vmem:[%s400 + $0x90] sm:$0xf]
        %v484 = vld [vmem:[%s400 + $0x94] sm:$0xf]
        %v485 = vld [vmem:[%s400 + $0x98] sm:$0xf]
        %v486 = vld [vmem:[%s400 + $0x9c] sm:$0xf]
        %v487 = vld [vmem:[%s400 + $0xa0] sm:$0xf]
        %v488 = vld [vmem:[%s400 + $0xa4] sm:$0xf]
        %v489 = vld [vmem:[%s400 + $0xa8] sm:$0xf]
        %v490 = vld [vmem:[%s400 + $0xac] sm:$0xf]
        %v491 = vld [vmem:[%s400 + $0xb0] sm:$0xf]
        %v492 = vld [vmem:[%s400 + $0xb4] sm:$0xf]
        %v493 = vld [vmem:[%s400 + $0xb8] sm:$0xf]
        %v494 = vld [vmem:[%s400 + $0xbc] sm:$0xf]
        %v495 = vld [vmem:[%s400 + $0xc0] sm:$0xf]
        %v496 = vld [vmem:[%s400 + $0xc4] sm:$0xf]
        %v497 = vld [vmem:[%s400 + $0xc8] sm:$0xf]
        %v498 = vld [vmem:[%s400 + $0xcc] sm:$0xf]
        %v499 = vld [vmem:[%s400 + $0xd0] sm:$0xf]
        %v500 = vld [vmem:[%s400 + $0xd4] sm:$0xf]
        %v501 = vld [vmem:[%s400 + $0xd8] sm:$0xf]
        %v502 = vld [vmem:[%s400 + $0xdc] sm:$0xf]
        %v503 = vld [vmem:[%s400 + $0xe0] sm:$0xf]
        %v504 = vld [vmem:[%s400 + $0xe4] sm:$0xf]
        %v505 = vld [vmem:[%s400 + $0xe8] sm:$0xf]
        %v506 = vld [vmem:[%s400 + $0xec] sm:$0xf]
        %v507 = vld [vmem:[%s400 + $0xf0] sm:$0xf]
        %v508 = vld [vmem:[%s400 + $0xf4] sm:$0xf]
        %v509 = vld [vmem:[%s400 + $0xf8] sm:$0xf]
        %v510 = vld [vmem:[%s400 + $0xfc] sm:$0xf]
        %v511 = vld [vmem:[%s400 + $0x100] sm:$0xf]
        %v512 = vld [vmem:[%s400 + $0x104] sm:$0xf]
        %v513 = vld [vmem:[%s400 + $0x108] sm:$0xf]
        %v514 = vld [vmem:[%s400 + $0x10c] sm:$0xf]
        %v515 = vld [vmem:[%s400 + $0x110] sm:$0xf]
        %v516 = vld [vmem:[%s400 + $0x114] sm:$0xf]
        %v517 = vld [vmem:[%s400 + $0x118] sm:$0xf]
        %v518 = vld [vmem:[%s400 + $0x11c] sm:$0xf]
        %v519 = vld [vmem:[%s400 + $0x120] sm:$0xf]
        %v520 = vld [vmem:[%s400 + $0x124] sm:$0xf]
        %v521 = vld [vmem:[%s400 + $0x128] sm:$0xf]
        %v522 = vld [vmem:[%s400 + $0x12c] sm:$0xf]
        %v523 = vld [vmem:[%s400 + $0x130] sm:$0xf]
        %v524 = vld [vmem:[%s400 + $0x134] sm:$0xf]
        %v525 = vld [vmem:[%s400 + $0x138] sm:$0xf]
        %v526 = vld [vmem:[%s400 + $0x13c] sm:$0xf]
        %v527 = vld [vmem:[%s400 + $0x140] sm:$0xf]
        %v528 = vld [vmem:[%s400 + $0x144] sm:$0xf]
        %v529 = vld [vmem:[%s400 + $0x148] sm:$0xf]
        %v530 = vld [vmem:[%s400 + $0x14c] sm:$0xf]
        %v531 = vld [vmem:[%s400 + $0x150] sm:$0xf]
        %v532 = vld [vmem:[%s400 + $0x154] sm:$0xf]
        %v533 = vld [vmem:[%s400 + $0x158] sm:$0xf]
        %v534 = vld [vmem:[%s400 + $0x15c] sm:$0xf]
        %v535 = vld [vmem:[%s400 + $0x160] sm:$0xf]
        %v536 = vld [vmem:[%s400 + $0x164] sm:$0xf]
        %v537 = vld [vmem:[%s400 + $0x168] sm:$0xf]
        %v538 = vld [vmem:[%s400 + $0x16c] sm:$0xf]
        %v539 = vld [vmem:[%s400 + $0x170] sm:$0xf]
        %v540 = vld [vmem:[%s400 + $0x174] sm:$0xf]
        %v541 = vld [vmem:[%s400 + $0x178] sm:$0xf]
        %v542 = vld [vmem:[%s400 + $0x17c] sm:$0xf]
        %v543 = vld [vmem:[%s400 + $0x180] sm:$0xf]
        %v544 = vld [vmem:[%s400 + $0x184] sm:$0xf]
        %v545 = vld [vmem:[%s400 + $0x188] sm:$0xf]
        %v546 = vld [vmem:[%s400 + $0x18c] sm:$0xf]
        %v547 = vld [vmem:[%s400 + $0x190] sm:$0xf]
        %v548 = vld [vmem:[%s400 + $0x194] sm:$0xf]
        %v549 = vld [vmem:[%s400 + $0x198] sm:$0xf]
        %v550 = vld [vmem:[%s400 + $0x19c] sm:$0xf]
        %v551 = vld [vmem:[%s400 + $0x1a0] sm:$0xf]
        %v552 = vld [vmem:[%s400 + $0x1a4] sm:$0xf]
        %v553 = vld [vmem:[%s400 + $0x1a8] sm:$0xf]
        %v554 = vld [vmem:[%s400 + $0x1ac] sm:$0xf]
        %v555 = vld [vmem:[%s400 + $0x1b0] sm:$0xf]
        %v556 = vld [vmem:[%s400 + $0x1b4] sm:$0xf]
        %v557 = vld [vmem:[%s400 + $0x1b8] sm:$0xf]
        %v558 = vld [vmem:[%s400 + $0x1bc] sm:$0xf]
        %v559 = vld [vmem:[%s400 + $0x1c0] sm:$0xf]
        %v560 = vld [vmem:[%s400 + $0x1c4] sm:$0xf]
        %v561 = vld [vmem:[%s400 + $0x1c8] sm:$0xf]
        %v562 = vld [vmem:[%s400 + $0x1cc] sm:$0xf]
        %v563 = vld [vmem:[%s400 + $0x1d0] sm:$0xf]
        %v564 = vld [vmem:[%s400 + $0x1d4] sm:$0xf]
        %v565 = vld [vmem:[%s400 + $0x1d8] sm:$0xf]
        %v566 = vld [vmem:[%s400 + $0x1dc] sm:$0xf]
        %v567 = vld [vmem:[%s400 + $0x1e0] sm:$0xf]
        %v568 = vld [vmem:[%s400 + $0x1e4] sm:$0xf]
        %v569 = vld [vmem:[%s400 + $0x1e8] sm:$0xf]
        %v570 = vld [vmem:[%s400 + $0x1ec] sm:$0xf]
        %v571 = vld [vmem:[%s400 + $0x1f0] sm:$0xf]
        %v572 = vld [vmem:[%s400 + $0x1f4] sm:$0xf]
        %v573 = vld [vmem:[%s400 + $0x1f8] sm:$0xf]
        %v574 = vld [vmem:[%s400 + $0x1fc] sm:$0xf]
        %v583 = vunpack.c.l.b16 %v439
        %v584 = vunpack.c.h.b16 %v439
        %v585 = vunpack.c.l.b16 %v440
        %v586 = vunpack.c.h.b16 %v440
        %v587 = vunpack.c.l.b16 %v441
        %v588 = vunpack.c.h.b16 %v441
        %v589 = vunpack.c.l.b16 %v442
        %v590 = vunpack.c.h.b16 %v442
        %v591 = vunpack.c.l.b16 %v443
        %v592 = vunpack.c.h.b16 %v443
        %v593 = vunpack.c.l.b16 %v444
        %v594 = vunpack.c.h.b16 %v444
        %v595 = vunpack.c.l.b16 %v445
        %v596 = vunpack.c.h.b16 %v445
        %v597 = vunpack.c.l.b16 %v446
        %v598 = vunpack.c.h.b16 %v446
        %v599 = vpack.c.b16 %v591, %v583
        %v600 = vpack.c.b16 %v592, %v584
        %v601 = vpack.c.b16 %v593, %v585
        %v602 = vpack.c.b16 %v594, %v586
        %v603 = vpack.c.b16 %v595, %v587
        %v604 = vpack.c.b16 %v596, %v588
        %v605 = vpack.c.b16 %v597, %v589
        %v606 = vpack.c.b16 %v598, %v590
        %v743 = vunpack.c.l.b16 %v447
        %v744 = vunpack.c.l.b16 %v448
        %v745 = vunpack.c.l.b16 %v449
        %v746 = vunpack.c.l.b16 %v450
        %v747 = vunpack.c.l.b16 %v451
        %v748 = vunpack.c.l.b16 %v452
        %v749 = vunpack.c.l.b16 %v453
        %v750 = vunpack.c.l.b16 %v454
        %v751 = vunpack.c.l.b16 %v455
        %v752 = vunpack.c.l.b16 %v456
        %v753 = vunpack.c.l.b16 %v457
        %v754 = vunpack.c.l.b16 %v458
        %v755 = vunpack.c.l.b16 %v459
        %v756 = vunpack.c.l.b16 %v460
        %v757 = vunpack.c.l.b16 %v461
        %v758 = vunpack.c.l.b16 %v462
        %v759 = vunpack.c.l.b16 %v463
        %v760 = vunpack.c.l.b16 %v464
        %v761 = vunpack.c.l.b16 %v465
        %v762 = vunpack.c.l.b16 %v466
        %v763 = vunpack.c.l.b16 %v467
        %v764 = vunpack.c.l.b16 %v468
        %v765 = vunpack.c.l.b16 %v469
        %v766 = vunpack.c.l.b16 %v470
        %v767 = vunpack.c.l.b16 %v471
        %v768 = vunpack.c.l.b16 %v472
        %v769 = vunpack.c.l.b16 %v473
        %v770 = vunpack.c.l.b16 %v474
        %v771 = vunpack.c.l.b16 %v475
        %v772 = vunpack.c.l.b16 %v476
        %v773 = vunpack.c.l.b16 %v477
        %v774 = vunpack.c.l.b16 %v478
        %v775 = vunpack.c.l.b16 %v479
        %v776 = vunpack.c.l.b16 %v480
        %v777 = vunpack.c.l.b16 %v481
        %v778 = vunpack.c.l.b16 %v482
        %v779 = vunpack.c.l.b16 %v483
        %v780 = vunpack.c.l.b16 %v484
        %v781 = vunpack.c.l.b16 %v485
        %v782 = vunpack.c.l.b16 %v486
        %v783 = vunpack.c.l.b16 %v487
        %v784 = vunpack.c.l.b16 %v488
        %v785 = vunpack.c.l.b16 %v489
        %v786 = vunpack.c.l.b16 %v490
        %v787 = vunpack.c.l.b16 %v491
        %v788 = vunpack.c.l.b16 %v492
        %v789 = vunpack.c.l.b16 %v493
        %v790 = vunpack.c.l.b16 %v494
        %v791 = vunpack.c.l.b16 %v495
        %v792 = vunpack.c.l.b16 %v496
        %v793 = vunpack.c.l.b16 %v497
        %v794 = vunpack.c.l.b16 %v498
        %v795 = vunpack.c.l.b16 %v499
        %v796 = vunpack.c.l.b16 %v500
        %v797 = vunpack.c.l.b16 %v501
        %v798 = vunpack.c.l.b16 %v502
        %v799 = vunpack.c.l.b16 %v503
        %v800 = vunpack.c.l.b16 %v504
        %v801 = vunpack.c.l.b16 %v505
        %v802 = vunpack.c.l.b16 %v506
        %v803 = vunpack.c.l.b16 %v507
        %v804 = vunpack.c.l.b16 %v508
        %v805 = vunpack.c.l.b16 %v509
        %v806 = vunpack.c.l.b16 %v510
        %v807 = vunpack.c.l.b16 %v511
        %v808 = vunpack.c.l.b16 %v512
        %v809 = vunpack.c.l.b16 %v513
        %v810 = vunpack.c.l.b16 %v514
        %v811 = vunpack.c.l.b16 %v515
        %v812 = vunpack.c.l.b16 %v516
        %v813 = vunpack.c.l.b16 %v517
        %v814 = vunpack.c.l.b16 %v518
        %v815 = vunpack.c.l.b16 %v519
        %v816 = vunpack.c.l.b16 %v520
        %v817 = vunpack.c.l.b16 %v521
        %v818 = vunpack.c.l.b16 %v522
        %v819 = vunpack.c.l.b16 %v523
        %v820 = vunpack.c.l.b16 %v524
        %v821 = vunpack.c.l.b16 %v525
        %v822 = vunpack.c.l.b16 %v526
        %v823 = vunpack.c.l.b16 %v527
        %v824 = vunpack.c.l.b16 %v528
        %v825 = vunpack.c.l.b16 %v529
        %v826 = vunpack.c.l.b16 %v530
        %v827 = vunpack.c.l.b16 %v531
        %v828 = vunpack.c.l.b16 %v532
        %v829 = vunpack.c.l.b16 %v533
        %v830 = vunpack.c.l.b16 %v534
        %v831 = vunpack.c.l.b16 %v535
        %v832 = vunpack.c.l.b16 %v536
        %v833 = vunpack.c.l.b16 %v537
        %v834 = vunpack.c.l.b16 %v538
        %v835 = vunpack.c.l.b16 %v539
        %v836 = vunpack.c.l.b16 %v540
        %v837 = vunpack.c.l.b16 %v541
        %v838 = vunpack.c.l.b16 %v542
        %v839 = vunpack.c.l.b16 %v543
        %v840 = vunpack.c.l.b16 %v544
        %v841 = vunpack.c.l.b16 %v545
        %v842 = vunpack.c.l.b16 %v546
        %v843 = vunpack.c.l.b16 %v547
        %v844 = vunpack.c.l.b16 %v548
        %v845 = vunpack.c.l.b16 %v549
        %v846 = vunpack.c.l.b16 %v550
        %v847 = vunpack.c.l.b16 %v551
        %v848 = vunpack.c.l.b16 %v552
        %v849 = vunpack.c.l.b16 %v553
        %v850 = vunpack.c.l.b16 %v554
        %v851 = vunpack.c.l.b16 %v555
        %v852 = vunpack.c.l.b16 %v556
        %v853 = vunpack.c.l.b16 %v557
        %v854 = vunpack.c.l.b16 %v558
        %v855 = vunpack.c.l.b16 %v559
        %v856 = vunpack.c.l.b16 %v560
        %v857 = vunpack.c.l.b16 %v561
        %v858 = vunpack.c.l.b16 %v562
        %v859 = vunpack.c.l.b16 %v563
        %v860 = vunpack.c.l.b16 %v564
        %v861 = vunpack.c.l.b16 %v565
        %v862 = vunpack.c.l.b16 %v566
        %v863 = vunpack.c.l.b16 %v567
        %v864 = vunpack.c.l.b16 %v568
        %v865 = vunpack.c.l.b16 %v569
        %v866 = vunpack.c.l.b16 %v570
        %v867 = vunpack.c.l.b16 %v571
        %v868 = vunpack.c.l.b16 %v572
        %v869 = vunpack.c.l.b16 %v573
        %v870 = vunpack.c.l.b16 %v574
        %v871 = vpack.c.b16 %v744, %v743
        %v872 = vpack.c.b16 %v746, %v745
        %v873 = vpack.c.b16 %v748, %v747
        %v874 = vpack.c.b16 %v750, %v749
        %v875 = vpack.c.b16 %v752, %v751
        %v876 = vpack.c.b16 %v754, %v753
        %v877 = vpack.c.b16 %v756, %v755
        %v878 = vpack.c.b16 %v758, %v757
        %v879 = vpack.c.b16 %v760, %v759
        %v880 = vpack.c.b16 %v762, %v761
        %v881 = vpack.c.b16 %v764, %v763
        %v882 = vpack.c.b16 %v766, %v765
        %v883 = vpack.c.b16 %v768, %v767
        %v884 = vpack.c.b16 %v770, %v769
        %v885 = vpack.c.b16 %v772, %v771
        %v886 = vpack.c.b16 %v774, %v773
        %v887 = vpack.c.b16 %v776, %v775
        %v888 = vpack.c.b16 %v778, %v777
        %v889 = vpack.c.b16 %v780, %v779
        %v890 = vpack.c.b16 %v782, %v781
        %v891 = vpack.c.b16 %v784, %v783
        %v892 = vpack.c.b16 %v786, %v785
        %v893 = vpack.c.b16 %v788, %v787
        %v894 = vpack.c.b16 %v790, %v789
        %v895 = vpack.c.b16 %v792, %v791
        %v896 = vpack.c.b16 %v794, %v793
        %v897 = vpack.c.b16 %v796, %v795
        %v898 = vpack.c.b16 %v798, %v797
        %v899 = vpack.c.b16 %v800, %v799
        %v900 = vpack.c.b16 %v802, %v801
        %v901 = vpack.c.b16 %v804, %v803
        %v902 = vpack.c.b16 %v806, %v805
        %v903 = vpack.c.b16 %v808, %v807
        %v904 = vpack.c.b16 %v810, %v809
        %v905 = vpack.c.b16 %v812, %v811
        %v906 = vpack.c.b16 %v814, %v813
        %v907 = vpack.c.b16 %v816, %v815
        %v908 = vpack.c.b16 %v818, %v817
        %v909 = vpack.c.b16 %v820, %v819
        %v910 = vpack.c.b16 %v822, %v821
        %v911 = vpack.c.b16 %v824, %v823
        %v912 = vpack.c.b16 %v826, %v825
        %v913 = vpack.c.b16 %v828, %v827
        %v914 = vpack.c.b16 %v830, %v829
        %v915 = vpack.c.b16 %v832, %v831
        %v916 = vpack.c.b16 %v834, %v833
        %v917 = vpack.c.b16 %v836, %v835
        %v918 = vpack.c.b16 %v838, %v837
        %v919 = vpack.c.b16 %v840, %v839
        %v920 = vpack.c.b16 %v842, %v841
        %v921 = vpack.c.b16 %v844, %v843
        %v922 = vpack.c.b16 %v846, %v845
        %v923 = vpack.c.b16 %v848, %v847
        %v924 = vpack.c.b16 %v850, %v849
        %v925 = vpack.c.b16 %v852, %v851
        %v926 = vpack.c.b16 %v854, %v853
        %v927 = vpack.c.b16 %v856, %v855
        %v928 = vpack.c.b16 %v858, %v857
        %v929 = vpack.c.b16 %v860, %v859
        %v930 = vpack.c.b16 %v862, %v861
        %v931 = vpack.c.b16 %v864, %v863
        %v932 = vpack.c.b16 %v866, %v865
        %v933 = vpack.c.b16 %v868, %v867
        %v934 = vpack.c.b16 %v870, %v869
        %999 = vmatprep.subr.bf16.mxu0 0
        %1000 = vmatpush1.bf16.msra.mxu0 %v871
        %1001 = vmatprep.subr.bf16.mxu0 0
        %1002 = vmatpush1.bf16.msra.mxu0 %v872
        %1003 = vmatprep.subr.bf16.mxu0 0
        %1004 = vmatpush1.bf16.msra.mxu0 %v873
        %1005 = vmatprep.subr.bf16.mxu0 0
        %1006 = vmatpush1.bf16.msra.mxu0 %v874
        %1007 = vmatprep.subr.bf16.mxu0 0
        %1008 = vmatpush1.bf16.msra.mxu0 %v875
        %1009 = vmatprep.subr.bf16.mxu0 0
        %1010 = vmatpush1.bf16.msra.mxu0 %v876
        %1011 = vmatprep.subr.bf16.mxu0 0
        %1012 = vmatpush1.bf16.msra.mxu0 %v877
        %1013 = vmatprep.subr.bf16.mxu0 0
        %1014 = vmatpush1.bf16.msra.mxu0 %v878
        %1015 = vmatprep.subr.bf16.mxu0 0
        %1016 = vmatpush1.bf16.msra.mxu0 %v879
        %1017 = vmatprep.subr.bf16.mxu0 0
        %1018 = vmatpush1.bf16.msra.mxu0 %v880
        %1019 = vmatprep.subr.bf16.mxu0 0
        %1020 = vmatpush1.bf16.msra.mxu0 %v881
        %1021 = vmatprep.subr.bf16.mxu0 0
        %1022 = vmatpush1.bf16.msra.mxu0 %v882
        %1023 = vmatprep.subr.bf16.mxu0 0
        %1024 = vmatpush1.bf16.msra.mxu0 %v883
        %1025 = vmatprep.subr.bf16.mxu0 0
        %1026 = vmatpush1.bf16.msra.mxu0 %v884
        %1027 = vmatprep.subr.bf16.mxu0 0
        %1028 = vmatpush1.bf16.msra.mxu0 %v885
        %1029 = vmatprep.subr.bf16.mxu0 0
        %1030 = vmatpush1.bf16.msra.mxu0 %v886
        %1031 = vmatprep.mubr.bf16.mxu0 %v600
        %1032 = vmatmul.mubr.bf16.gmra.mrb[0].mxu0 %v599
        %v1033 = vpop.f32.mrb[0].mxu0
        %v1034 = vadd.f32 0.0, %v1033
        %v1035 = vpop.f32.mrb[0].mxu0
        %v1036 = vpop.f32.mrb[0].mxu0
        %v1037 = vadd.f32 0.0, %v1036
        %v1038 = vpop.f32.mrb[0].mxu0
        %1039 = vdwg.mxu0
        %1040 = vmatprep.subr.bf16.mxu0 0
        %1041 = vmatpush1.bf16.msra.mxu0 %v887
        %1042 = vmatprep.subr.bf16.mxu0 0
        %1043 = vmatpush1.bf16.msra.mxu0 %v888
        %1044 = vmatprep.subr.bf16.mxu0 0
        %1045 = vmatpush1.bf16.msra.mxu0 %v889
        %1046 = vmatprep.subr.bf16.mxu0 0
        %1047 = vmatpush1.bf16.msra.mxu0 %v890
        %1048 = vmatprep.subr.bf16.mxu0 0
        %1049 = vmatpush1.bf16.msra.mxu0 %v891
        %1050 = vmatprep.subr.bf16.mxu0 0
        %1051 = vmatpush1.bf16.msra.mxu0 %v892
        %1052 = vmatprep.subr.bf16.mxu0 0
        %1053 = vmatpush1.bf16.msra.mxu0 %v893
        %1054 = vmatprep.subr.bf16.mxu0 0
        %1055 = vmatpush1.bf16.msra.mxu0 %v894
        %1056 = vmatprep.subr.bf16.mxu0 0
        %1057 = vmatpush1.bf16.msra.mxu0 %v895
        %1058 = vmatprep.subr.bf16.mxu0 0
        %1059 = vmatpush1.bf16.msra.mxu0 %v896
        %1060 = vmatprep.subr.bf16.mxu0 0
        %1061 = vmatpush1.bf16.msra.mxu0 %v897
        %1062 = vmatprep.subr.bf16.mxu0 0
        %1063 = vmatpush1.bf16.msra.mxu0 %v898
        %1064 = vmatprep.subr.bf16.mxu0 0
        %1065 = vmatpush1.bf16.msra.mxu0 %v899
        %1066 = vmatprep.subr.bf16.mxu0 0
        %1067 = vmatpush1.bf16.msra.mxu0 %v900
        %1068 = vmatprep.subr.bf16.mxu0 0
        %1069 = vmatpush1.bf16.msra.mxu0 %v901
        %1070 = vmatprep.subr.bf16.mxu0 0
        %1071 = vmatpush1.bf16.msra.mxu0 %v902
        %1072 = vmatprep.mubr.bf16.mxu0 %v602
        %1073 = vmatmul.mubr.bf16.gmra.mrb[0].mxu0 %v601
        %v1074 = vpop.f32.mrb[0].mxu0
        %v1075 = vadd.f32 %v1034, %v1074
        %v1076 = vpop.f32.mrb[0].mxu0
        %v1077 = vpop.f32.mrb[0].mxu0
        %v1078 = vadd.f32 %v1037, %v1077
        %v1079 = vpop.f32.mrb[0].mxu0
        %1080 = vdwg.mxu0
        %1081 = vmatprep.subr.bf16.mxu0 0
        %1082 = vmatpush1.bf16.msra.mxu0 %v903
        %1083 = vmatprep.subr.bf16.mxu0 0
        %1084 = vmatpush1.bf16.msra.mxu0 %v904
        %1085 = vmatprep.subr.bf16.mxu0 0
        %1086 = vmatpush1.bf16.msra.mxu0 %v905
        %1087 = vmatprep.subr.bf16.mxu0 0
        %1088 = vmatpush1.bf16.msra.mxu0 %v906
        %1089 = vmatprep.subr.bf16.mxu0 0
        %1090 = vmatpush1.bf16.msra.mxu0 %v907
        %1091 = vmatprep.subr.bf16.mxu0 0
        %1092 = vmatpush1.bf16.msra.mxu0 %v908
        %1093 = vmatprep.subr.bf16.mxu0 0
        %1094 = vmatpush1.bf16.msra.mxu0 %v909
        %1095 = vmatprep.subr.bf16.mxu0 0
        %1096 = vmatpush1.bf16.msra.mxu0 %v910
        %1097 = vmatprep.subr.bf16.mxu0 0
        %1098 = vmatpush1.bf16.msra.mxu0 %v911
        %1099 = vmatprep.subr.bf16.mxu0 0
        %1100 = vmatpush1.bf16.msra.mxu0 %v912
        %1101 = vmatprep.subr.bf16.mxu0 0
        %1102 = vmatpush1.bf16.msra.mxu0 %v913
        %1103 = vmatprep.subr.bf16.mxu0 0
        %1104 = vmatpush1.bf16.msra.mxu0 %v914
        %1105 = vmatprep.subr.bf16.mxu0 0
        %1106 = vmatpush1.bf16.msra.mxu0 %v915
        %1107 = vmatprep.subr.bf16.mxu0 0
        %1108 = vmatpush1.bf16.msra.mxu0 %v916
        %1109 = vmatprep.subr.bf16.mxu0 0
        %1110 = vmatpush1.bf16.msra.mxu0 %v917
        %1111 = vmatprep.subr.bf16.mxu0 0
        %1112 = vmatpush1.bf16.msra.mxu0 %v918
        %1113 = vmatprep.mubr.bf16.mxu0 %v604
        %1114 = vmatmul.mubr.bf16.gmra.mrb[0].mxu0 %v603
        %v1115 = vpop.f32.mrb[0].mxu0
        %v1116 = vadd.f32 %v1075, %v1115
        %v1117 = vpop.f32.mrb[0].mxu0
        %v1118 = vpop.f32.mrb[0].mxu0
        %v1119 = vadd.f32 %v1078, %v1118
        %v1120 = vpop.f32.mrb[0].mxu0
        %1121 = vdwg.mxu0
        %1122 = vmatprep.subr.bf16.mxu0 0
        %1123 = vmatpush1.bf16.msra.mxu0 %v919
        %1124 = vmatprep.subr.bf16.mxu0 0
        %1125 = vmatpush1.bf16.msra.mxu0 %v920
        %1126 = vmatprep.subr.bf16.mxu0 0
        %1127 = vmatpush1.bf16.msra.mxu0 %v921
        %1128 = vmatprep.subr.bf16.mxu0 0
        %1129 = vmatpush1.bf16.msra.mxu0 %v922
        %1130 = vmatprep.subr.bf16.mxu0 0
        %1131 = vmatpush1.bf16.msra.mxu0 %v923
        %1132 = vmatprep.subr.bf16.mxu0 0
        %1133 = vmatpush1.bf16.msra.mxu0 %v924
        %1134 = vmatprep.subr.bf16.mxu0 0
        %1135 = vmatpush1.bf16.msra.mxu0 %v925
        %1136 = vmatprep.subr.bf16.mxu0 0
        %1137 = vmatpush1.bf16.msra.mxu0 %v926
        %1138 = vmatprep.subr.bf16.mxu0 0
        %1139 = vmatpush1.bf16.msra.mxu0 %v927
        %1140 = vmatprep.subr.bf16.mxu0 0
        %1141 = vmatpush1.bf16.msra.mxu0 %v928
        %1142 = vmatprep.subr.bf16.mxu0 0
        %1143 = vmatpush1.bf16.msra.mxu0 %v929
        %1144 = vmatprep.subr.bf16.mxu0 0
        %1145 = vmatpush1.bf16.msra.mxu0 %v930
        %1146 = vmatprep.subr.bf16.mxu0 0
        %1147 = vmatpush1.bf16.msra.mxu0 %v931
        %1148 = vmatprep.subr.bf16.mxu0 0
        %1149 = vmatpush1.bf16.msra.mxu0 %v932
        %1150 = vmatprep.subr.bf16.mxu0 0
        %1151 = vmatpush1.bf16.msra.mxu0 %v933
        %1152 = vmatprep.subr.bf16.mxu0 0
        %1153 = vmatpush1.bf16.msra.mxu0 %v934
        %1154 = vmatprep.mubr.bf16.mxu0 %v606
        %1155 = vmatmul.mubr.bf16.gmra.mrb[0].mxu0 %v605
        %v1156 = vpop.f32.mrb[0].mxu0
        %v1157 = vadd.f32 %v1116, %v1156
        %v1158 = vpop.f32.mrb[0].mxu0
        %v1159 = vpop.f32.mrb[0].mxu0
        %v1160 = vadd.f32 %v1119, %v1159
        %v1161 = vpop.f32.mrb[0].mxu0
        %1162 = vdwg.mxu0
        %v1163 = vadd.f32 %v437, %v1157
        %v1164 = vadd.f32 %v438, %v1160
        %vm1165 = vcmask 261120
        %1166 = vst.msk [vmem:[#allocation2] sm:$0xff] %vm1165, %v1163
        %1167 = vst.msk [vmem:[#allocation2 + $0x8] sm:$0xff] %vm1165, %v1164
        %p1168 = scmp.eq.s32.totalorder %s24, 1
        // Predicated region
        $region72: #{forward_train.27} parent=62 // pred_check
          %p1169 = pneg %p1168
        $region73: #{forward_train.27} parent=62 // pred_check_branch
          %1171 = sbr.rel (%p1169) target = $region75
        $region74: #{forward_train.27} parent=62 // pred_region
          %v1172 = vld [vmem:[#allocation2] sm:$0xff]
          %v1173 = vld [vmem:[#allocation2 + $0x8] sm:$0xff]
          %v1174 = vld [vmem:[%s404] sm:$0x1]
          %v1176 = vlaneseq
          %v1177 = vshrl.u32 %v1176, 7
          %v1178 = vsub.s32 0, %v1177
          %v1179 = vrot.slane %v1174, %v1178
          %v1181 = vadd.f32 %v1172, %v1179
          %v1182 = vadd.f32 %v1173, %v1179
          %v1183 = vld [vmem:[%s412] sm:$0xff]
          %v1184 = vld [vmem:[%s412 + $0x8] sm:$0xff]
          %v1185 = vadd.f32 %v1181, %v1183
          %v1186 = vadd.f32 %v1182, %v1184
          %v1187 = vsel %vm1165, %v1185, 0.0
          %1188 = vadd.xlane.f32.xlu0 %v1187
          %v1189 = vpop.xlane.xlu0 %1188
          %v1190 = vsel %vm1165, %v1186, 0.0
          %1191 = vadd.xlane.f32.xlu0 %v1190
          %v1192 = vpop.xlane.xlu0 %1191
          %v1193 = vrcp.pop 32.0
          %v1194 = vmul.f32 %v1189, %v1193
          %v1195 = vmul.f32 %v1192, %v1193
          %v1196 = vsub.f32 %v1185, %v1194
          %v1197 = vsub.f32 %v1186, %v1195
          %v1198 = vmul.f32 %v1196, %v1196
          %v1199 = vmul.f32 %v1197, %v1197
          %v1200 = vsel %vm1165, %v1198, 0.0
          %1201 = vadd.xlane.f32.xlu0 %v1200
          %v1202 = vpop.xlane.xlu0 %1201
          %v1203 = vsel %vm1165, %v1199, 0.0
          %1204 = vadd.xlane.f32.xlu0 %v1203
          %v1205 = vpop.xlane.xlu0 %1204
          %v1206 = vmul.f32 %v1202, %v1193
          %v1207 = vmul.f32 %v1205, %v1193
          %v1208 = vadd.f32 %v1206, 1e-05
          %v1209 = vadd.f32 %v1207, 1e-05
          %v1210 = vrsqrt.pop %v1208
          %v1211 = vrsqrt.pop %v1209
          %v1212 = vmul.f32 %v1196, %v1210
          %v1213 = vmul.f32 %v1197, %v1211
          %v1214 = vld [vmem:[%s416] sm:$0x1]
          %v1216 = vlaneseq
          %v1217 = vshrl.u32 %v1216, 7
          %v1218 = vsub.s32 0, %v1217
          %v1219 = vrot.slane %v1214, %v1218
          %v1221 = vmul.f32 %v1212, %v1219
          %v1222 = vmul.f32 %v1213, %v1219
          %v1223 = vld [vmem:[%s419] sm:$0x1]
          %v1225 = vlaneseq
          %v1226 = vshrl.u32 %v1225, 7
          %v1227 = vsub.s32 0, %v1226
          %v1228 = vrot.slane %v1223, %v1227
          %v1230 = vadd.f32 %v1221, %v1228
          %v1231 = vadd.f32 %v1222, %v1228
          %1232 = vst.msk [vmem:[%s427] sm:$0xff] %vm1165, %v1230
          %1233 = vst.msk [vmem:[%s427 + $0x8] sm:$0xff] %vm1165, %v1231
        $region75: #{forward_train.27} parent=62 // pred_fallthru
          _
        %s1234 = smul.u32 2, %s22
        %p1235 = scmp.lt.s32.totalorder %s1234, 1
        %s1236 = scalar_select %p1235, %s1234, 1
        %p1237 = scmp.lt.s32.totalorder %s23, 0
        %s1238 = scalar_select %p1237, %s23, 0
        %s1239 = sadd.s32 %s1238, %s1236
        %s1240 = smul.addr %s1239, 8
        %s1241 = scalar_lea.vmem %s6, %s1240
        // Predicated region
        $region76: #{forward_train.27} parent=62 // pred_check
          %p1242 = pneg %p218
        $region77: #{forward_train.27} parent=62 // pred_check_branch
          %1244 = sbr.rel (%p1242) target = $region79
        $region78: #{forward_train.27} parent=62 // pred_region
          %s1245 = smul.u32 2, %s22
        $region79: #{forward_train.27} parent=62 // pred_fallthru
          _
        // Predicated region
        $region80: #{forward_train.27} parent=62 // pred_check
          %p1246 = pneg %p218
        $region81: #{forward_train.27} parent=62 // pred_check_branch
          %1248 = sbr.rel (%p1246) target = $region83
        $region82: #{forward_train.27} parent=62 // pred_region
          %s1249 = smul.u32 2, %s22
          %p1250 = scmp.lt.s32.totalorder %s1249, 1
          %s1251 = scalar_select %p1250, %s1249, 1
          %p1252 = scmp.lt.s32.totalorder %s23, 0
          %s1253 = scalar_select %p1252, %s23, 0
          %s1254 = sadd.s32 %s1253, %s1251
          %s1255 = smul.addr %s1254, 8
          %s1256 = scalar_lea.vmem %s6, %s1255
        $region83: #{forward_train.27} parent=62 // pred_fallthru
          _
      $region63: #{forward_train.27} parent=5 // pred_fallthru
        _
      %p1257 = scmp.le.s32.totalorder 2, %s12
      // Predicated region
      $region84: #{forward_train.27} parent=5 // pred_check
        %p1258 = pneg %p1257
      $region85: #{forward_train.27} parent=5 // pred_check_branch
        %1260 = sbr.rel (%p1258) target = $region87
      $region86: #{forward_train.27} parent=5 // pred_region
        %s1261 = ssub.s32 %s12, 2
      $region87: #{forward_train.27} parent=5 // pred_fallthru
        _
    $region6: #{forward_train.27} parent=1 // loop_footer
      %s16 = sadd.s32 1, %s12
    $region7: #{forward_train.27} parent=1 // loop_footer_branch
      %11 = sbr.rel target = $region3
    $region8: #{forward_train.27} parent=1 // loop_exit
      _

</llo_original>
